<compile_context>
chip_gen: v5e
topology: v5e:2x2
jax: 0.10.0
libtpu: 0.0.40
codegen_flags: <defaults>
</compile_context>

<pallas_src>
import jax
import jax.numpy as jnp
from jax import lax
from jax.experimental import pallas as pl
from jax.experimental.pallas import tpu as pltpu

# Module defaults are dim=512, agent_num=512, heads=8 -- small demo shapes here.
DIM = 128
HEADS = 8
HEAD_DIM = DIM // HEADS
AGENT_NUM = 16
HA = HEADS * AGENT_NUM          # flattened (head, agent) index
EPS = 1e-5

# dot_general dimension numbers (no operand materialized transposed).
_AB_T = (((1,), (1,)), ((), ()))                  # (R, D) x (N, D) -> (R, N)
_NN = (((1,), (0,)), ((), ()))                    # standard matmul
_TN = (((0,), (0,)), ((), ()))                    # LHS transposed
_BATCH_HEAD = (((2,), (1,)), ((0,), (0,)))        # (H,A,K) x (H,K,M) -> (H,A,M)


def _layer_norm(x, gamma, beta):
    mean = jnp.mean(x, axis=-1, keepdims=True)
    var = jnp.mean(jnp.square(x - mean), axis=-1, keepdims=True)
    return (x - mean) * lax.rsqrt(var + EPS) * gamma + beta


def _amd_layer_kernel(x_ref, gamma_ref, beta_ref, ak_ref, qat_ref, c2_ref,
                      wvo_ref, bias_ref, out_ref,
                      m_scr, l_scr, num_scr, avwo_scr, x_cache, xn_cache):
    ph = pl.program_id(1)            # 0: agent aggregation (reduction over N)
    nt = pl.program_id(2)            # N-tile index
    n_tiles = pl.num_programs(2)

    # ---------- stage 1: agents attend over instances (online softmax) -------
    @pl.when(jnp.logical_and(ph == 0, nt == 0))
    def _init():
        m_scr[...] = jnp.full_like(m_scr, -jnp.inf)
        l_scr[...] = jnp.zeros_like(l_scr)
        num_scr[...] = jnp.zeros_like(num_scr)

    @pl.when(ph == 0)
    def _stage1():
        x = x_ref[0]                                              # (Nt, D) f32
        xn = _layer_norm(x, gamma_ref[...], beta_ref[...])        # f32
        xn_b = xn.astype(jnp.bfloat16)                            # MXU operand
        # Cache the tile so phase 1 never touches HBM nor re-normalizes.
        x_cache[nt] = x
        xn_cache[nt] = xn_b
        # scores (H*A, Nt): full-width K=D contraction on the MXU.
        s = lax.dot_general(ak_ref[...], xn_b, _AB_T,
                            preferred_element_type=jnp.float32)
        m_prev = m_scr[...]
        m_new = jnp.maximum(m_prev, jnp.max(s, axis=-1, keepdims=True))
        alpha = jnp.exp(m_prev - m_new)
        p = jnp.exp(s - m_new)                                    # (H*A, Nt) f32
        l_scr[...] = alpha * l_scr[...] + jnp.sum(p, axis=-1, keepdims=True)
        # running numerator: sum_n p[r, n] * xn[n, :]
        num_scr[...] = alpha * num_scr[...] + lax.dot_general(
            p.astype(jnp.bfloat16), xn_b, _NN,
            preferred_element_type=jnp.float32)
        m_scr[...] = m_new

    @pl.when(jnp.logical_and(ph == 0, nt == n_tiles - 1))
    def _finalize_stage1():
        # p1 @ xn = numerator / denominator, then one batched matmul against the
        # host-folded Wvo_h = Wv_h @ Wo_h (bias bv@Wo folded into out bias).
        pv = num_scr[...] * pl.reciprocal(l_scr[...], approx=True)   # (H*A, D)
        pv3 = pv.reshape(HEADS, AGENT_NUM, DIM).astype(jnp.bfloat16)
        av_wo = lax.dot_general(pv3, wvo_ref[...], _BATCH_HEAD,
                                preferred_element_type=jnp.float32)  # (H, A, D)
        avwo_scr[...] = av_wo.reshape(HA, DIM).astype(avwo_scr.dtype)

    # ---------- stage 2: instances attend over agents + residual output ------
    @pl.when(ph == 1)
    def _stage2():
        xn_b = xn_cache[nt]                                       # (Nt, D) bf16
        s = lax.dot_general(qat_ref[...], xn_b, _AB_T,
                            preferred_element_type=jnp.float32) + c2_ref[...]
        nt_len = s.shape[-1]
        s3 = s.reshape(HEADS, AGENT_NUM, nt_len)                  # (H, A, Nt)
        m2 = jnp.max(s3, axis=1, keepdims=True)                   # softmax/agents
        e2 = jnp.exp(s3 - m2)
        denom = jnp.sum(e2, axis=1, keepdims=True)
        p2 = (e2 * pl.reciprocal(denom, approx=True)).reshape(HA, nt_len)
        # One (H*A, Nt)^T x (H*A, D) matmul: LHS-transposed dot_general, no
        # explicit bf16 transpose emitted by us.
        attn = lax.dot_general(p2.astype(jnp.bfloat16), avwo_scr[...], _TN,
                               preferred_element_type=jnp.float32)  # (Nt, D)
        out_ref[0] = x_cache[nt] + attn + bias_ref[...]             # residual


def _fold_params(p):
    """Fold per-head bilinear forms into full-width tables (host side)."""
    scale = HEAD_DIM ** -0.5
    a_h = (p["agent"] * scale).astype(jnp.float32).reshape(
        AGENT_NUM, HEADS, HEAD_DIM)
    wq_h = p["wq"].reshape(DIM, HEADS, HEAD_DIM)
    wk_h = p["wk"].reshape(DIM, HEADS, HEAD_DIM)
    wv_h = p["wv"].reshape(DIM, HEADS, HEAD_DIM)
    wo_h = p["wo"].reshape(HEADS, HEAD_DIM, DIM)
    # AK[h,a,:] = agent_s_h[a] @ Wk_h^T ;  QAT[h,a,:] = agent_s_h[a] @ Wq_h^T
    ak = jnp.einsum("ahj,mhj->ham", a_h, wk_h).reshape(HA, DIM)
    qat = jnp.einsum("ahj,mhj->ham", a_h, wq_h).reshape(HA, DIM)
    # c2[h,a] = agent_s_h[a] . bq_h   (bk cancels in the stage-1 softmax)
    c2 = jnp.einsum("ahj,hj->ha", a_h,
                    p["bq"][0].reshape(HEADS, HEAD_DIM)).reshape(HA, 1)
    # Wvo_h = Wv_h @ Wo_h  (per-head value + output projection folded)
    wvo = jnp.einsum("mhj,hjn->hmn", wv_h, wo_h)                    # (H, D, D)
    # stage-2 softmax rows sum to 1  =>  p2 @ (bv_h@Wo_h) = sum_h bv_h @ Wo_h,
    # so the value bias collapses into a single output bias together with bo.
    bv_h = p["bv"][0].reshape(HEADS, HEAD_DIM)
    out_bias = p["bo"] + jnp.einsum("hj,hjn->n", bv_h, wo_h)[None, :]  # (1, D)
    return [
        p["gamma"].astype(jnp.float32),
        p["beta"].astype(jnp.float32),
        ak.astype(jnp.bfloat16),
        qat.astype(jnp.bfloat16),
        c2.astype(jnp.float32),
        wvo.astype(jnp.bfloat16),
        out_bias.astype(jnp.float32),
    ]


def amd_layer_forward(x, params, *, n_tile=256):
    B, N, D = x.shape
    assert D == DIM and N % n_tile == 0, "demo requires N % n_tile == 0"
    n_tiles = N // n_tile
    folded = _fold_params(params)

    def const_spec(arr):
        zeros = (0,) * arr.ndim
        return pl.BlockSpec(arr.shape, lambda b, ph, t, _z=zeros: _z)

    def x_index_map(b, ph, t):
        # Phase 0 walks the N tiles; phase 1 stays pinned on the last-fetched
        # tile so no x re-fetch is issued (phase 1 reads the VMEM caches).
        return (b, (1 - ph) * t + ph * (n_tiles - 1), 0)

    in_specs = [pl.BlockSpec((1, n_tile, D), x_index_map)]
    in_specs += [const_spec(a) for a in folded]
    # Phase 0 never writes the output; pin its output block to the block that
    # phase 1 / tile 0 fills, so nothing is written back early (fragile trick:
    # relies on writeback-on-block-index-change semantics).
    out_specs = pl.BlockSpec((1, n_tile, D), lambda b, ph, t: (b, t * ph, 0))

    return pl.pallas_call(
        _amd_layer_kernel,
        out_shape=jax.ShapeDtypeStruct((B, N, D), jnp.float32),
        grid=(B, 2, n_tiles),
        in_specs=in_specs,
        out_specs=out_specs,
        scratch_shapes=[
            pltpu.VMEM((HA, 1), jnp.float32),                 # running row max
            pltpu.VMEM((HA, 1), jnp.float32),                 # running denom
            pltpu.VMEM((HA, DIM), jnp.float32),               # running numerator
            pltpu.VMEM((HA, DIM), jnp.bfloat16),              # agent_v @ Wvo
            pltpu.VMEM((n_tiles, n_tile, DIM), jnp.float32),  # x cache (residual)
            pltpu.VMEM((n_tiles, n_tile, DIM), jnp.bfloat16), # xn cache (bf16)
        ],
        compiler_params=pltpu.CompilerParams(
            dimension_semantics=("parallel", "arbitrary", "arbitrary"),
            # Demo footprint ~1.5 MiB; at production dim/agent_num re-budget per
            # generation (v7x 64 MiB physical vs v5e/v6e 128 MiB).
            vmem_limit_bytes=32 * 1024 * 1024),
    )(x, *folded)


def reference_forward(x, p):
    """Pure-JAX reference of the original (per-head) formulation."""
    xn = _layer_norm(x, p["gamma"], p["beta"])
    q = xn @ p["wq"] + p["bq"]
    k = xn @ p["wk"] + p["bk"]
    v = xn @ p["wv"] + p["bv"]
    agent = p["agent"]
    scale = HEAD_DIM ** -0.5
    outs = []
    for h in range(HEADS):
        sl = slice(h * HEAD_DIM, (h + 1) * HEAD_DIM)
        qh, kh, vh, ah = q[..., sl], k[..., sl], v[..., sl], agent[:, sl]
        p1 = jax.nn.softmax(jnp.einsum("ad,bnd->ban", ah, kh) * scale, axis=-1)
        agent_v = jnp.einsum("ban,bnd->bad", p1, vh)
        p2 = jax.nn.softmax(jnp.einsum("bnd,ad->bna", qh, ah) * scale, axis=-1)
        outs.append(jnp.einsum("bna,bad->bnd", p2, agent_v))
    amd_out = jnp.concatenate(outs, axis=-1) @ p["wo"] + p["bo"]
    return x + amd_out


def init_params(key):
    ks = jax.random.split(key, 11)
    w = 0.1
    return {
        "gamma": 1.0 + 0.05 * jax.random.normal(ks[0], (1, DIM), jnp.float32),
        "beta": 0.05 * jax.random.normal(ks[1], (1, DIM), jnp.float32),
        "wq": w * jax.random.normal(ks[2], (DIM, DIM), jnp.float32),
        "bq": 0.05 * jax.random.normal(ks[3], (1, DIM), jnp.float32),
        "wk": w * jax.random.normal(ks[4], (DIM, DIM), jnp.float32),
        "bk": 0.05 * jax.random.normal(ks[5], (1, DIM), jnp.float32),
        "wv": w * jax.random.normal(ks[6], (DIM, DIM), jnp.float32),
        "bv": 0.05 * jax.random.normal(ks[7], (1, DIM), jnp.float32),
        "agent": 0.5 * jax.random.normal(ks[8], (AGENT_NUM, DIM), jnp.float32),
        "wo": w * jax.random.normal(ks[9], (DIM, DIM), jnp.float32),
        "bo": 0.05 * jax.random.normal(ks[10], (1, DIM), jnp.float32),
    }


if __name__ == "__main__":
    key = jax.random.PRNGKey(0)
    k_x, k_p = jax.random.split(key)
    B, N = 2, 512                       # two bags, 512 instances -> 2 N-tiles
    x = jax.random.normal(k_x, (B, N, DIM), jnp.float32)
    params = init_params(k_p)

    fwd = jax.jit(amd_layer_forward, static_argnames=("n_tile",))
    y = fwd(x, params, n_tile=256)
    y = jax.block_until_ready(y)

    y_ref = reference_forward(x, params)
    assert y.shape == (B, N, DIM)
    assert bool(jnp.all(jnp.isfinite(y)))
    max_err = float(jnp.max(jnp.abs(y - y_ref)))
    assert bool(jnp.allclose(y, y_ref, rtol=2e-2, atol=2e-2)), (
        f"kernel/reference mismatch, max |err| = {max_err}")
    print("KERNEL_OK")
</pallas_src>

<mosaic_0001>
module attributes {stable_mosaic.version = 11 : i64} {
  func.func @_amd_layer_kernel(%arg0: i32, %arg1: i32, %arg2: i32, %arg3: memref<1x256x128xf32, #tpu.memory_space<vmem>>, %arg4: memref<1x128xf32, #tpu.memory_space<vmem>>, %arg5: memref<1x128xf32, #tpu.memory_space<vmem>>, %arg6: memref<128x128xbf16, #tpu.memory_space<vmem>>, %arg7: memref<128x128xbf16, #tpu.memory_space<vmem>>, %arg8: memref<128x1xf32, #tpu.memory_space<vmem>>, %arg9: memref<8x128x128xbf16, #tpu.memory_space<vmem>>, %arg10: memref<1x128xf32, #tpu.memory_space<vmem>>, %arg11: memref<1x256x128xf32, #tpu.memory_space<vmem>>, %arg12: memref<128x1xf32, #tpu.memory_space<vmem>>, %arg13: memref<128x1xf32, #tpu.memory_space<vmem>>, %arg14: memref<128x128xf32, #tpu.memory_space<vmem>>, %arg15: memref<128x128xbf16, #tpu.memory_space<vmem>>, %arg16: memref<2x256x128xf32, #tpu.memory_space<vmem>>, %arg17: memref<2x256x128xbf16, #tpu.memory_space<vmem>>) attributes {dimension_semantics = [#tpu.dimension_semantics<parallel>, #tpu.dimension_semantics<arbitrary>, #tpu.dimension_semantics<arbitrary>], iteration_bounds = array<i64: 2, 2, 2>, scalar_prefetch = 0 : i64, scratch_operands = 6 : i64, tpu.core_type = #tpu.core_type<tc>, window_params = [{transform_indices = @transform_0, window_bounds = array<i64: 1, 256, 128>}, {pipeline_mode = #tpu.pipeline_mode<synchronous>, transform_indices = @transform_1, window_bounds = array<i64: 1, 128>}, {pipeline_mode = #tpu.pipeline_mode<synchronous>, transform_indices = @transform_2, window_bounds = array<i64: 1, 128>}, {pipeline_mode = #tpu.pipeline_mode<synchronous>, transform_indices = @transform_3, window_bounds = array<i64: 128, 128>}, {pipeline_mode = #tpu.pipeline_mode<synchronous>, transform_indices = @transform_4, window_bounds = array<i64: 128, 128>}, {pipeline_mode = #tpu.pipeline_mode<synchronous>, transform_indices = @transform_5, window_bounds = array<i64: 128, 1>}, {pipeline_mode = #tpu.pipeline_mode<synchronous>, transform_indices = @transform_6, window_bounds = array<i64: 8, 128, 128>}, {pipeline_mode = #tpu.pipeline_mode<synchronous>, transform_indices = @transform_7, window_bounds = array<i64: 1, 128>}, {transform_indices = @transform_8, window_bounds = array<i64: 1, 256, 128>}]} {
    %c0_i32 = arith.constant 0 : i32
    %0 = arith.cmpi eq, %arg1, %c0_i32 : i32
    %c0_i32_0 = arith.constant 0 : i32
    %1 = arith.cmpi eq, %arg2, %c0_i32_0 : i32
    %2 = arith.andi %0, %1 : i1
    %3 = arith.extui %2 : i1 to i32
    %c0_i32_1 = arith.constant 0 : i32
    %4 = arith.cmpi ne, %3, %c0_i32_1 : i32
    scf.if %4 {
      %cst = arith.constant 0xFF800000 : f32
      %16 = vector.broadcast %cst : f32 to vector<128x1xf32>
      %c0 = arith.constant 0 : index
      %c0_8 = arith.constant 0 : index
      %17 = vector.load %arg12[%c0, %c0_8] : memref<128x1xf32, #tpu.memory_space<vmem>>, vector<128x1xf32>
      tpu.vector_store %arg12[%c0, %c0_8], %16 {strides = array<i32>} : memref<128x1xf32, #tpu.memory_space<vmem>>, vector<128x1xf32>,
      %cst_9 = arith.constant 0.000000e+00 : f32
      %18 = vector.broadcast %cst_9 : f32 to vector<128x1xf32>
      %c0_10 = arith.constant 0 : index
      %c0_11 = arith.constant 0 : index
      %19 = vector.load %arg13[%c0_10, %c0_11] : memref<128x1xf32, #tpu.memory_space<vmem>>, vector<128x1xf32>
      tpu.vector_store %arg13[%c0_10, %c0_11], %18 {strides = array<i32>} : memref<128x1xf32, #tpu.memory_space<vmem>>, vector<128x1xf32>,
      %cst_12 = arith.constant 0.000000e+00 : f32
      %20 = vector.broadcast %cst_12 : f32 to vector<128x128xf32>
      %c0_13 = arith.constant 0 : index
      %c0_14 = arith.constant 0 : index
      %21 = vector.load %arg14[%c0_13, %c0_14] : memref<128x128xf32, #tpu.memory_space<vmem>>, vector<128x128xf32>
      tpu.vector_store %arg14[%c0_13, %c0_14], %20 {strides = array<i32>} : memref<128x128xf32, #tpu.memory_space<vmem>>, vector<128x128xf32>,
    } else {
    }
    %c0_i32_2 = arith.constant 0 : i32
    %5 = arith.cmpi eq, %arg1, %c0_i32_2 : i32
    %6 = arith.extui %5 : i1 to i32
    %c0_i32_3 = arith.constant 0 : i32
    %7 = arith.cmpi ne, %6, %c0_i32_3 : i32
    scf.if %7 {
      %c0 = arith.constant 0 : index
      %c0_8 = arith.constant 0 : index
      %c0_9 = arith.constant 0 : index
      %16 = vector.load %arg3[%c0, %c0_8, %c0_9] : memref<1x256x128xf32, #tpu.memory_space<vmem>>, vector<1x256x128xf32>
      %17 = vector.shape_cast %16 : vector<1x256x128xf32> to vector<256x128xf32>
      %c0_10 = arith.constant 0 : index
      %c0_11 = arith.constant 0 : index
      %18 = vector.load %arg4[%c0_10, %c0_11] : memref<1x128xf32, #tpu.memory_space<vmem>>, vector<1x128xf32>
      %c0_12 = arith.constant 0 : index
      %c0_13 = arith.constant 0 : index
      %19 = vector.load %arg5[%c0_12, %c0_13] : memref<1x128xf32, #tpu.memory_space<vmem>>, vector<1x128xf32>
      %cst = arith.constant dense<0.000000e+00> : vector<256xf32>
      %20 = vector.multi_reduction <add>, %17, %cst [1] : vector<256x128xf32> to vector<256xf32>
      %21 = vector.shape_cast %20 : vector<256xf32> to vector<256x1xf32>
      %cst_14 = arith.constant 1.280000e+02 : f32
      %22 = vector.broadcast %cst_14 : f32 to vector<256x1xf32>
      %23 = arith.divf %21, %22 : vector<256x1xf32>
      %24 = vector.broadcast %23 : vector<256x1xf32> to vector<256x128xf32>
      %25 = arith.subf %17, %24 : vector<256x128xf32>
      %26 = arith.mulf %25, %25 : vector<256x128xf32>
      %cst_15 = arith.constant dense<0.000000e+00> : vector<256xf32>
      %27 = vector.multi_reduction <add>, %26, %cst_15 [1] : vector<256x128xf32> to vector<256xf32>
      %28 = vector.shape_cast %27 : vector<256xf32> to vector<256x1xf32>
      %cst_16 = arith.constant 1.280000e+02 : f32
      %29 = vector.broadcast %cst_16 : f32 to vector<256x1xf32>
      %30 = arith.divf %28, %29 : vector<256x1xf32>
      %31 = vector.broadcast %23 : vector<256x1xf32> to vector<256x128xf32>
      %32 = arith.subf %17, %31 : vector<256x128xf32>
      %cst_17 = arith.constant 9.99999974E-6 : f32
      %33 = vector.broadcast %cst_17 : f32 to vector<256x1xf32>
      %34 = arith.addf %30, %33 : vector<256x1xf32>
      %35 = math.rsqrt %34 : vector<256x1xf32>
      %36 = vector.broadcast %35 : vector<256x1xf32> to vector<256x128xf32>
      %37 = arith.mulf %32, %36 : vector<256x128xf32>
      %38 = vector.broadcast %18 : vector<1x128xf32> to vector<256x128xf32>
      %39 = arith.mulf %37, %38 : vector<256x128xf32>
      %40 = vector.broadcast %19 : vector<1x128xf32> to vector<256x128xf32>
      %41 = arith.addf %39, %40 : vector<256x128xf32>
      %42 = arith.truncf %41 : vector<256x128xf32> to vector<256x128xbf16>
      %43 = arith.index_cast %arg2 : i32 to index
      %c0_18 = arith.constant 0 : index
      %c0_19 = arith.constant 0 : index
      %44 = vector.load %arg16[%43, %c0_18, %c0_19] : memref<2x256x128xf32, #tpu.memory_space<vmem>>, vector<1x256x128xf32>
      %45 = vector.shape_cast %44 : vector<1x256x128xf32> to vector<256x128xf32>
      %46 = vector.shape_cast %17 : vector<256x128xf32> to vector<1x256x128xf32>
      tpu.vector_store %arg16[%43, %c0_18, %c0_19], %46 {strides = array<i32>} : memref<2x256x128xf32, #tpu.memory_space<vmem>>, vector<1x256x128xf32>,
      %47 = arith.index_cast %arg2 : i32 to index
      %c0_20 = arith.constant 0 : index
      %c0_21 = arith.constant 0 : index
      %48 = vector.load %arg17[%47, %c0_20, %c0_21] : memref<2x256x128xbf16, #tpu.memory_space<vmem>>, vector<1x256x128xbf16>
      %49 = vector.shape_cast %48 : vector<1x256x128xbf16> to vector<256x128xbf16>
      %50 = vector.shape_cast %42 : vector<256x128xbf16> to vector<1x256x128xbf16>
      tpu.vector_store %arg17[%47, %c0_20, %c0_21], %50 {strides = array<i32>} : memref<2x256x128xbf16, #tpu.memory_space<vmem>>, vector<1x256x128xbf16>,
      %c0_22 = arith.constant 0 : index
      %c0_23 = arith.constant 0 : index
      %51 = vector.load %arg6[%c0_22, %c0_23] : memref<128x128xbf16, #tpu.memory_space<vmem>>, vector<128x128xbf16>
      %cst_24 = arith.constant dense<0.000000e+00> : vector<128x256xf32>
      %52 = tpu.matmul %51, %42, %cst_24 {dimension_numbers = #tpu.dot_dimension_numbers<[1], [1], [0], [0], [0, 0, 1, 0], [], []>} : vector<128x128xbf16>, vector<256x128xbf16>, vector<128x256xf32> -> vector<128x256xf32>
      %c0_25 = arith.constant 0 : index
      %c0_26 = arith.constant 0 : index
      %53 = vector.load %arg12[%c0_25, %c0_26] : memref<128x1xf32, #tpu.memory_space<vmem>>, vector<128x1xf32>
      %cst_27 = arith.constant dense<0xFF800000> : vector<128xf32>
      %54 = vector.multi_reduction <maximumf>, %52, %cst_27 [1] : vector<128x256xf32> to vector<128xf32>
      %55 = vector.shape_cast %54 : vector<128xf32> to vector<128x1xf32>
      %56 = arith.maximumf %53, %55 : vector<128x1xf32>
      %57 = arith.subf %53, %56 : vector<128x1xf32>
      %58 = math.exp %57 : vector<128x1xf32>
      %59 = vector.broadcast %56 : vector<128x1xf32> to vector<128x256xf32>
      %60 = arith.subf %52, %59 : vector<128x256xf32>
      %61 = math.exp %60 : vector<128x256xf32>
      %c0_28 = arith.constant 0 : index
      %c0_29 = arith.constant 0 : index
      %62 = vector.load %arg13[%c0_28, %c0_29] : memref<128x1xf32, #tpu.memory_space<vmem>>, vector<128x1xf32>
      %63 = arith.mulf %58, %62 : vector<128x1xf32>
      %cst_30 = arith.constant dense<0.000000e+00> : vector<128xf32>
      %64 = vector.multi_reduction <add>, %61, %cst_30 [1] : vector<128x256xf32> to vector<128xf32>
      %65 = vector.shape_cast %64 : vector<128xf32> to vector<128x1xf32>
      %66 = arith.addf %63, %65 : vector<128x1xf32>
      %c0_31 = arith.constant 0 : index
      %c0_32 = arith.constant 0 : index
      %67 = vector.load %arg13[%c0_31, %c0_32] : memref<128x1xf32, #tpu.memory_space<vmem>>, vector<128x1xf32>
      tpu.vector_store %arg13[%c0_31, %c0_32], %66 {strides = array<i32>} : memref<128x1xf32, #tpu.memory_space<vmem>>, vector<128x1xf32>,
      %c0_33 = arith.constant 0 : index
      %c0_34 = arith.constant 0 : index
      %68 = vector.load %arg14[%c0_33, %c0_34] : memref<128x128xf32, #tpu.memory_space<vmem>>, vector<128x128xf32>
      %69 = vector.broadcast %58 : vector<128x1xf32> to vector<128x128xf32>
      %70 = arith.mulf %69, %68 : vector<128x128xf32>
      %71 = arith.truncf %61 : vector<128x256xf32> to vector<128x256xbf16>
      %cst_35 = arith.constant dense<0.000000e+00> : vector<128x128xf32>
      %72 = tpu.matmul %71, %42, %cst_35 {dimension_numbers = #tpu.dot_dimension_numbers<[1], [0], [0], [1], [0, 0, 1, 1], [], []>} : vector<128x256xbf16>, vector<256x128xbf16>, vector<128x128xf32> -> vector<128x128xf32>
      %73 = arith.addf %70, %72 : vector<128x128xf32>
      %c0_36 = arith.constant 0 : index
      %c0_37 = arith.constant 0 : index
      %74 = vector.load %arg14[%c0_36, %c0_37] : memref<128x128xf32, #tpu.memory_space<vmem>>, vector<128x128xf32>
      tpu.vector_store %arg14[%c0_36, %c0_37], %73 {strides = array<i32>} : memref<128x128xf32, #tpu.memory_space<vmem>>, vector<128x128xf32>,
      %c0_38 = arith.constant 0 : index
      %c0_39 = arith.constant 0 : index
      %75 = vector.load %arg12[%c0_38, %c0_39] : memref<128x1xf32, #tpu.memory_space<vmem>>, vector<128x1xf32>
      tpu.vector_store %arg12[%c0_38, %c0_39], %56 {strides = array<i32>} : memref<128x1xf32, #tpu.memory_space<vmem>>, vector<128x1xf32>,
    } else {
    }
    %c0_i32_4 = arith.constant 0 : i32
    %8 = arith.cmpi eq, %arg1, %c0_i32_4 : i32
    %c1_i32 = arith.constant 1 : i32
    %9 = arith.cmpi eq, %arg2, %c1_i32 : i32
    %10 = arith.andi %8, %9 : i1
    %11 = arith.extui %10 : i1 to i32
    %c0_i32_5 = arith.constant 0 : i32
    %12 = arith.cmpi ne, %11, %c0_i32_5 : i32
    scf.if %12 {
      %c0 = arith.constant 0 : index
      %c0_8 = arith.constant 0 : index
      %16 = vector.load %arg14[%c0, %c0_8] : memref<128x128xf32, #tpu.memory_space<vmem>>, vector<128x128xf32>
      %c0_9 = arith.constant 0 : index
      %c0_10 = arith.constant 0 : index
      %17 = vector.load %arg13[%c0_9, %c0_10] : memref<128x1xf32, #tpu.memory_space<vmem>>, vector<128x1xf32>
      %18 = tpu.reciprocal %17 {approx = true} : vector<128x1xf32> -> vector<128x1xf32>
      %19 = vector.broadcast %18 : vector<128x1xf32> to vector<128x128xf32>
      %20 = arith.mulf %16, %19 : vector<128x128xf32>
      %21 = vector.shape_cast %20 : vector<128x128xf32> to vector<8x16x128xf32>
      %22 = arith.truncf %21 : vector<8x16x128xf32> to vector<8x16x128xbf16>
      %c0_11 = arith.constant 0 : index
      %c0_12 = arith.constant 0 : index
      %c0_13 = arith.constant 0 : index
      %23 = vector.load %arg9[%c0_11, %c0_12, %c0_13] : memref<8x128x128xbf16, #tpu.memory_space<vmem>>, vector<8x128x128xbf16>
      %cst = arith.constant dense<0.000000e+00> : vector<8x16x128xf32>
      %24 = tpu.matmul %22, %23, %cst {dimension_numbers = #tpu.dot_dimension_numbers<[2], [1], [1], [2], [0, 0, 0, 1, 1, 2], [0], [0]>} : vector<8x16x128xbf16>, vector<8x128x128xbf16>, vector<8x16x128xf32> -> vector<8x16x128xf32>
      %25 = vector.shape_cast %24 : vector<8x16x128xf32> to vector<128x128xf32>
      %26 = arith.truncf %25 : vector<128x128xf32> to vector<128x128xbf16>
      %c0_14 = arith.constant 0 : index
      %c0_15 = arith.constant 0 : index
      %27 = vector.load %arg15[%c0_14, %c0_15] : memref<128x128xbf16, #tpu.memory_space<vmem>>, vector<128x128xbf16>
      tpu.vector_store %arg15[%c0_14, %c0_15], %26 {strides = array<i32>} : memref<128x128xbf16, #tpu.memory_space<vmem>>, vector<128x128xbf16>,
    } else {
    }
    %c1_i32_6 = arith.constant 1 : i32
    %13 = arith.cmpi eq, %arg1, %c1_i32_6 : i32
    %14 = arith.extui %13 : i1 to i32
    %c0_i32_7 = arith.constant 0 : i32
    %15 = arith.cmpi ne, %14, %c0_i32_7 : i32
    scf.if %15 {
      %16 = arith.index_cast %arg2 : i32 to index
      %c0 = arith.constant 0 : index
      %c0_8 = arith.constant 0 : index
      %17 = vector.load %arg17[%16, %c0, %c0_8] : memref<2x256x128xbf16, #tpu.memory_space<vmem>>, vector<1x256x128xbf16>
      %18 = vector.shape_cast %17 : vector<1x256x128xbf16> to vector<256x128xbf16>
      %c0_9 = arith.constant 0 : index
      %c0_10 = arith.constant 0 : index
      %19 = vector.load %arg7[%c0_9, %c0_10] : memref<128x128xbf16, #tpu.memory_space<vmem>>, vector<128x128xbf16>
      %cst = arith.constant dense<0.000000e+00> : vector<128x256xf32>
      %20 = tpu.matmul %19, %18, %cst {dimension_numbers = #tpu.dot_dimension_numbers<[1], [1], [0], [0], [0, 0, 1, 0], [], []>} : vector<128x128xbf16>, vector<256x128xbf16>, vector<128x256xf32> -> vector<128x256xf32>
      %c0_11 = arith.constant 0 : index
      %c0_12 = arith.constant 0 : index
      %21 = vector.load %arg8[%c0_11, %c0_12] : memref<128x1xf32, #tpu.memory_space<vmem>>, vector<128x1xf32>
      %22 = vector.broadcast %21 : vector<128x1xf32> to vector<128x256xf32>
      %23 = arith.addf %20, %22 : vector<128x256xf32>
      %24 = vector.shape_cast %23 : vector<128x256xf32> to vector<8x16x256xf32>
      %cst_13 = arith.constant dense<0xFF800000> : vector<8x256xf32>
      %25 = vector.multi_reduction <maximumf>, %24, %cst_13 [1] : vector<8x16x256xf32> to vector<8x256xf32>
      %26 = vector.shape_cast %25 : vector<8x256xf32> to vector<8x1x256xf32>
      %27 = vector.broadcast %26 : vector<8x1x256xf32> to vector<8x16x256xf32>
      %28 = arith.subf %24, %27 : vector<8x16x256xf32>
      %29 = math.exp %28 : vector<8x16x256xf32>
      %cst_14 = arith.constant dense<0.000000e+00> : vector<8x256xf32>
      %30 = vector.multi_reduction <add>, %29, %cst_14 [1] : vector<8x16x256xf32> to vector<8x256xf32>
      %31 = vector.shape_cast %30 : vector<8x256xf32> to vector<8x1x256xf32>
      %32 = tpu.reciprocal %31 {approx = true} : vector<8x1x256xf32> -> vector<8x1x256xf32>
      %33 = vector.broadcast %32 : vector<8x1x256xf32> to vector<8x16x256xf32>
      %34 = arith.mulf %29, %33 : vector<8x16x256xf32>
      %35 = vector.shape_cast %34 : vector<8x16x256xf32> to vector<128x256xf32>
      %36 = arith.truncf %35 : vector<128x256xf32> to vector<128x256xbf16>
      %c0_15 = arith.constant 0 : index
      %c0_16 = arith.constant 0 : index
      %37 = vector.load %arg15[%c0_15, %c0_16] : memref<128x128xbf16, #tpu.memory_space<vmem>>, vector<128x128xbf16>
      %cst_17 = arith.constant dense<0.000000e+00> : vector<256x128xf32>
      %38 = tpu.matmul %36, %37, %cst_17 {dimension_numbers = #tpu.dot_dimension_numbers<[0], [0], [1], [1], [0, 1, 1, 1], [], []>} : vector<128x256xbf16>, vector<128x128xbf16>, vector<256x128xf32> -> vector<256x128xf32>
      %39 = arith.index_cast %arg2 : i32 to index
      %c0_18 = arith.constant 0 : index
      %c0_19 = arith.constant 0 : index
      %40 = vector.load %arg16[%39, %c0_18, %c0_19] : memref<2x256x128xf32, #tpu.memory_space<vmem>>, vector<1x256x128xf32>
      %41 = vector.shape_cast %40 : vector<1x256x128xf32> to vector<256x128xf32>
      %42 = arith.addf %41, %38 : vector<256x128xf32>
      %c0_20 = arith.constant 0 : index
      %c0_21 = arith.constant 0 : index
      %43 = vector.load %arg10[%c0_20, %c0_21] : memref<1x128xf32, #tpu.memory_space<vmem>>, vector<1x128xf32>
      %44 = vector.broadcast %43 : vector<1x128xf32> to vector<256x128xf32>
      %45 = arith.addf %42, %44 : vector<256x128xf32>
      %c0_22 = arith.constant 0 : index
      %c0_23 = arith.constant 0 : index
      %c0_24 = arith.constant 0 : index
      %46 = vector.load %arg11[%c0_22, %c0_23, %c0_24] : memref<1x256x128xf32, #tpu.memory_space<vmem>>, vector<1x256x128xf32>
      %47 = vector.shape_cast %46 : vector<1x256x128xf32> to vector<256x128xf32>
      %48 = vector.shape_cast %45 : vector<256x128xf32> to vector<1x256x128xf32>
      tpu.vector_store %arg11[%c0_22, %c0_23, %c0_24], %48 {strides = array<i32>} : memref<1x256x128xf32, #tpu.memory_space<vmem>>, vector<1x256x128xf32>,
    } else {
    }
    return
  }
  func.func @transform_0(%arg0: i32, %arg1: i32, %arg2: i32) -> (i32, i32, i32) {
    %c1_i32 = arith.constant 1 : i32
    %0 = arith.subi %c1_i32, %arg1 : i32
    %1 = arith.muli %0, %arg2 : i32
    %c1_i32_0 = arith.constant 1 : i32
    %2 = arith.muli %arg1, %c1_i32_0 : i32
    %3 = arith.addi %1, %2 : i32
    %c0_i32 = arith.constant 0 : i32
    %c0_i32_1 = arith.constant 0 : i32
    return %arg0, %3, %c0_i32 : i32, i32, i32
  }
  func.func @transform_1(%arg0: i32, %arg1: i32, %arg2: i32) -> (i32, i32) {
    %c0_i32 = arith.constant 0 : i32
    %c0_i32_0 = arith.constant 0 : i32
    %c0_i32_1 = arith.constant 0 : i32
    return %c0_i32, %c0_i32_0 : i32, i32
  }
  func.func @transform_2(%arg0: i32, %arg1: i32, %arg2: i32) -> (i32, i32) {
    %c0_i32 = arith.constant 0 : i32
    %c0_i32_0 = arith.constant 0 : i32
    %c0_i32_1 = arith.constant 0 : i32
    return %c0_i32, %c0_i32_0 : i32, i32
  }
  func.func @transform_3(%arg0: i32, %arg1: i32, %arg2: i32) -> (i32, i32) {
    %c0_i32 = arith.constant 0 : i32
    %c0_i32_0 = arith.constant 0 : i32
    %c0_i32_1 = arith.constant 0 : i32
    return %c0_i32, %c0_i32_0 : i32, i32
  }
  func.func @transform_4(%arg0: i32, %arg1: i32, %arg2: i32) -> (i32, i32) {
    %c0_i32 = arith.constant 0 : i32
    %c0_i32_0 = arith.constant 0 : i32
    %c0_i32_1 = arith.constant 0 : i32
    return %c0_i32, %c0_i32_0 : i32, i32
  }
  func.func @transform_5(%arg0: i32, %arg1: i32, %arg2: i32) -> (i32, i32) {
    %c0_i32 = arith.constant 0 : i32
    %c0_i32_0 = arith.constant 0 : i32
    %c0_i32_1 = arith.constant 0 : i32
    return %c0_i32, %c0_i32_0 : i32, i32
  }
  func.func @transform_6(%arg0: i32, %arg1: i32, %arg2: i32) -> (i32, i32, i32) {
    %c0_i32 = arith.constant 0 : i32
    %c0_i32_0 = arith.constant 0 : i32
    %c0_i32_1 = arith.constant 0 : i32
    %c0_i32_2 = arith.constant 0 : i32
    return %c0_i32, %c0_i32_0, %c0_i32_1 : i32, i32, i32
  }
  func.func @transform_7(%arg0: i32, %arg1: i32, %arg2: i32) -> (i32, i32) {
    %c0_i32 = arith.constant 0 : i32
    %c0_i32_0 = arith.constant 0 : i32
    %c0_i32_1 = arith.constant 0 : i32
    return %c0_i32, %c0_i32_0 : i32, i32
  }
  func.func @transform_8(%arg0: i32, %arg1: i32, %arg2: i32) -> (i32, i32, i32) {
    %0 = arith.muli %arg2, %arg1 : i32
    %c0_i32 = arith.constant 0 : i32
    %c0_i32_0 = arith.constant 0 : i32
    return %arg0, %0, %c0_i32 : i32, i32, i32
  }
}

</mosaic_0001>

<llo_original>
// kernel: squeeze.3
$region0: #{squeeze.3}
  %s0 = inlined_call_operand.vmem [shape: f32[128], index: 0, kind: input, shape index: {}]
  %s1 = inlined_call_operand.vmem [shape: f32[8,16], index: 1, kind: output, shape index: {}]
  $region1: #{squeeze.3} parent=0
    #allocation0 [shape = 'u8[4096]{0}', space=vmem, size = 0x1000, scoped, tag = 'scoped mem for input reshape']
    %s3 = ssub.s32 2, 1
    %v4 = vld [vmem:[%s0] sm:%s3]
    %5 = vst [vmem:[#allocation0] sm:%s3] %v4
    %v6 = vld [vmem:[#allocation0] sm:$0x1]
    %vm7 = vcmask 130048
    %8 = vst.msk [vmem:[%s1] sm:$0x1] %vm7, %v6
    %v9 = vld [vmem:[#allocation0] sm:$0x1]
    %10 = vrot.lane.b32.xlu0 %v9, 112
    %v11 = vpop.permute.xlu0 %10
    %vm12 = vcmask 130048
    %s13 = scalar_lea.vmem %s1, 1
    %14 = vst.msk [vmem:[%s13] sm:$0x1] %vm12, %v11
    %v15 = vld [vmem:[#allocation0] sm:$0x1]
    %16 = vrot.lane.b32.xlu0 %v15, 96
    %v17 = vpop.permute.xlu0 %16
    %vm18 = vcmask 130048
    %s19 = scalar_lea.vmem %s1, 2
    %20 = vst.msk [vmem:[%s19] sm:$0x1] %vm18, %v17
    %v21 = vld [vmem:[#allocation0] sm:$0x1]
    %22 = vrot.lane.b32.xlu0 %v21, 80
    %v23 = vpop.permute.xlu0 %22
    %vm24 = vcmask 130048
    %s25 = scalar_lea.vmem %s1, 3
    %26 = vst.msk [vmem:[%s25] sm:$0x1] %vm24, %v23
    %v27 = vld [vmem:[#allocation0] sm:$0x1]
    %28 = vrot.lane.b32.xlu0 %v27, 64
    %v29 = vpop.permute.xlu0 %28
    %vm30 = vcmask 130048
    %s31 = scalar_lea.vmem %s1, 4
    %32 = vst.msk [vmem:[%s31] sm:$0x1] %vm30, %v29
    %v33 = vld [vmem:[#allocation0] sm:$0x1]
    %34 = vrot.lane.b32.xlu0 %v33, 48
    %v35 = vpop.permute.xlu0 %34
    %vm36 = vcmask 130048
    %s37 = scalar_lea.vmem %s1, 5
    %38 = vst.msk [vmem:[%s37] sm:$0x1] %vm36, %v35
    %v39 = vld [vmem:[#allocation0] sm:$0x1]
    %40 = vrot.lane.b32.xlu0 %v39, 32
    %v41 = vpop.permute.xlu0 %40
    %vm42 = vcmask 130048
    %s43 = scalar_lea.vmem %s1, 6
    %44 = vst.msk [vmem:[%s43] sm:$0x1] %vm42, %v41
    %v45 = vld [vmem:[#allocation0] sm:$0x1]
    %46 = vrot.lane.b32.xlu0 %v45, 16
    %v47 = vpop.permute.xlu0 %46
    %vm48 = vcmask 130048
    %s49 = scalar_lea.vmem %s1, 7
    %50 = vst.msk [vmem:[%s49] sm:$0x1] %vm48, %v47

// kernel: amd_layer_forward.1
$region0: #{amd_layer_forward.1}
  #allocation0 [shape = 'u32[]', space=smem, size = 0x4, offset = 0x4, fixed_abs, tag = 'smem constant byte address 0x4 - core index']
  #allocation1 [shape = 'u32[72,128]{1,0:T(1,128)}', space=vmem, size = 0x9000, scoped, tag = 'internal scratch']
  #allocation2 [shape = 'f32[128,1]{1,0:T(8,128)}', space=vmem, size = 0x10000, scoped, tag = 'scratch operand']
  #allocation3 [shape = 'f32[128,1]{1,0:T(8,128)}', space=vmem, size = 0x10000, scoped, tag = 'scratch operand']
  #allocation4 [shape = 'f32[128,128]{1,0:T(8,128)}', space=vmem, size = 0x10000, scoped, tag = 'scratch operand']
  #allocation5 [shape = 'bf16[128,128]{1,0:T(8,128)(2,1)}', space=vmem, size = 0x8000, scoped, tag = 'scratch operand']
  #allocation6 [shape = 'f32[2,256,128]{2,1,0:T(8,128)}', space=vmem, size = 0x40000, scoped, tag = 'scratch operand']
  #allocation7 [shape = 'bf16[2,256,128]{2,1,0:T(8,128)(2,1)}', space=vmem, size = 0x20000, scoped, tag = 'scratch operand']
  %s0 = inlined_call_operand.vmem [shape: f32[2,512,128], index: 0, kind: input, shape index: {}]
  %s1 = inlined_call_operand.vmem [shape: f32[1,128], index: 1, kind: input, shape index: {}]
  %s2 = inlined_call_operand.vmem [shape: f32[1,128], index: 2, kind: input, shape index: {}]
  %s3 = inlined_call_operand.vmem [shape: bf16[128,128], index: 3, kind: input, shape index: {}]
  %s4 = inlined_call_operand.vmem [shape: bf16[128,128], index: 4, kind: input, shape index: {}]
  %s5 = inlined_call_operand.vmem [shape: f32[128,1], index: 5, kind: input, shape index: {}]
  %s6 = inlined_call_operand.vmem [shape: bf16[8,128,128], index: 6, kind: input, shape index: {}]
  %s7 = inlined_call_operand.vmem [shape: f32[1,128], index: 7, kind: input, shape index: {}]
  %s8 = inlined_call_operand.hbm [shape: f32[2,512,128], index: 8, kind: output, shape index: {}]
  %s9 = sld [smem:[#allocation0]]
  $region81: #{amd_layer_forward.1} parent=0
    _
  %s11 = ssub.s32 1, %s9
  %s12 = scalar_select 0, %s11, %s9
  $region1: #{amd_layer_forward.1} parent=0
    #allocation8 [shape = 'u8[262144]{0}', space=vmem, size = 0x40000, scoped, tag = 'output window, operand 0']
    #allocation9 [shape = 's32[2]{0}', space=sflag, size = 0x8, scoped, tag = 'scoped memory for amd_layer_forward.1']
    %13 = vsyncpa [#allocation9], 0
    %s14 = scalar_lea.sflag [#allocation9], 1
    %15 = vsyncpa %s14, 0
    loop: start=0, step=1, limit=10
    $region2: #{amd_layer_forward.1} parent=1 // loop_pre_header
      _
    $region3: #{amd_layer_forward.1} parent=1 // loop_header
      %s17 = sphi 0, %s21
      %p18 = scmp.ge.s32.totalorder %s17, 10
      %s24 = sphi 0, %s43
      %s25 = sphi 0, %s39
      %s26 = sphi 0, %s35
      %s27 = sphi 0, %s24
      %s28 = sphi 0, %s25
      %s29 = sphi 0, %s26
      %s30 = sphi 0, %s27
      %s31 = sphi 0, %s28
      %s32 = sphi 0, %s29
      %s54 = sphi 0, %s56
      %s57 = sphi 0, %s54
      %s58 = sphi 0, %s57
      %s74 = sphi 0, %s58
      %s78 = sphi 0, %s78
      %s80 = sphi 0, %s78
      %s81 = sphi 0, %s80
      %s95 = sphi 0, %s81
      %s99 = sphi 0, %s99
      %s101 = sphi 0, %s99
      %s102 = sphi 0, %s101
      %s116 = sphi 0, %s102
      %s120 = sphi 0, %s120
      %s122 = sphi 0, %s120
      %s123 = sphi 0, %s122
      %s137 = sphi 0, %s123
      %s141 = sphi 0, %s141
      %s143 = sphi 0, %s141
      %s144 = sphi 0, %s143
      %s158 = sphi 0, %s144
      %s162 = sphi 0, %s162
      %s164 = sphi 0, %s162
      %s165 = sphi 0, %s164
      %s179 = sphi 0, %s165
      %s183 = sphi 0, %s183
      %s185 = sphi 0, %s183
      %s186 = sphi 0, %s185
      %s200 = sphi 0, %s186
      %s204 = sphi 0, %s204
      %s206 = sphi 0, %s204
      %s207 = sphi 0, %s206
      %s221 = sphi 0, %s207
      %s231 = sphi 0, %s233
      %s234 = sphi 0, %s231
      %s235 = sphi 0, %s234
      %s251 = sphi 0, %s235
    $region4: #{amd_layer_forward.1} parent=1 // loop_header_branch
      %20 = sbr.rel (%p18) target = $region8
    $region5: #{amd_layer_forward.1} parent=1 // loop_body
      %s22 = ssub.s32 %s17, 1
      %s23 = ssub.s32 %s17, 2
      %s33 = sadd.s32 1, %s26
      %p34 = scmp.ge.s32.totalorder %s33, 2
      %s35 = scalar_select %p34, 0, %s33
      %s36 = sadd.s32 1, %s25
      %s37 = scalar_select %p34, %s36, %s25
      %p38 = scmp.ge.s32.totalorder %s37, 2
      %s39 = scalar_select %p38, 0, %s37
      %s40 = sadd.s32 1, %s24
      %s41 = scalar_select %p38, %s40, %s24
      %p42 = scmp.ge.s32.totalorder %s41, 2
      %s43 = scalar_select %p42, 0, %s41
      %s44 = ssub.s32 1, %s25
      %s45 = smul.u32 %s44, %s26
      %s46 = sadd.s32 %s45, %s25
      %s47 = ssub.s32 1, %s39
      %s48 = smul.u32 %s47, %s35
      %s49 = sadd.s32 %s48, %s39
      %s50 = ssub.s32 %s24, %s43
      %s51 = ssub.s32 %s46, %s49
      %s52 = sor.u32 %s50, %s51
      %p53 = scmp.eq.s32.totalorder %s52, 0
      %s55 = sadd.s32 %s54, 1
      %s56 = scalar_select %p53, %s54, %s55
      %p59 = pneg %p53
      %p60 = scmp.eq.s32.totalorder %s17, 7
      %p61 = por %p59, %p60
      %p62 = scmp.ne.s32.totalorder %s54, %s57
      %p63 = scmp.eq.s32.totalorder %s17, 0
      %p64 = por %p62, %p63
      %p65 = scmp.ne.s32.totalorder %s54, %s57
      %p66 = scmp.eq.s32.totalorder %s22, 7
      %p67 = por %p65, %p66
      %p68 = scmp.ne.s32.totalorder %s57, %s58
      %p69 = scmp.eq.s32.totalorder %s22, 0
      %p70 = por %p68, %p69
      %p71 = scmp.ne.s32.totalorder %s57, %s58
      %p72 = scmp.eq.s32.totalorder %s23, 7
      %p73 = por %p71, %p72
      %p75 = scmp.ne.s32.totalorder %s58, %s74
      %p76 = scmp.eq.s32.totalorder %s23, 0
      %p77 = por %p75, %p76
      %s79 = sadd.s32 %s78, 1
      %p82 = scmp.eq.s32.totalorder %s17, 7
      %p83 = scmp.ne.s32.totalorder %s78, %s80
      %p84 = scmp.eq.s32.totalorder %s17, 0
      %p85 = por %p83, %p84
      %p86 = scmp.ne.s32.totalorder %s78, %s80
      %p87 = scmp.eq.s32.totalorder %s22, 7
      %p88 = por %p86, %p87
      %p89 = scmp.ne.s32.totalorder %s80, %s81
      %p90 = scmp.eq.s32.totalorder %s22, 0
      %p91 = por %p89, %p90
      %p92 = scmp.ne.s32.totalorder %s80, %s81
      %p93 = scmp.eq.s32.totalorder %s23, 7
      %p94 = por %p92, %p93
      %p96 = scmp.ne.s32.totalorder %s81, %s95
      %p97 = scmp.eq.s32.totalorder %s23, 0
      %p98 = por %p96, %p97
      %s100 = sadd.s32 %s99, 1
      %p103 = scmp.eq.s32.totalorder %s17, 7
      %p104 = scmp.ne.s32.totalorder %s99, %s101
      %p105 = scmp.eq.s32.totalorder %s17, 0
      %p106 = por %p104, %p105
      %p107 = scmp.ne.s32.totalorder %s99, %s101
      %p108 = scmp.eq.s32.totalorder %s22, 7
      %p109 = por %p107, %p108
      %p110 = scmp.ne.s32.totalorder %s101, %s102
      %p111 = scmp.eq.s32.totalorder %s22, 0
      %p112 = por %p110, %p111
      %p113 = scmp.ne.s32.totalorder %s101, %s102
      %p114 = scmp.eq.s32.totalorder %s23, 7
      %p115 = por %p113, %p114
      %p117 = scmp.ne.s32.totalorder %s102, %s116
      %p118 = scmp.eq.s32.totalorder %s23, 0
      %p119 = por %p117, %p118
      %s121 = sadd.s32 %s120, 1
      %p124 = scmp.eq.s32.totalorder %s17, 7
      %p125 = scmp.ne.s32.totalorder %s120, %s122
      %p126 = scmp.eq.s32.totalorder %s17, 0
      %p127 = por %p125, %p126
      %p128 = scmp.ne.s32.totalorder %s120, %s122
      %p129 = scmp.eq.s32.totalorder %s22, 7
      %p130 = por %p128, %p129
      %p131 = scmp.ne.s32.totalorder %s122, %s123
      %p132 = scmp.eq.s32.totalorder %s22, 0
      %p133 = por %p131, %p132
      %p134 = scmp.ne.s32.totalorder %s122, %s123
      %p135 = scmp.eq.s32.totalorder %s23, 7
      %p136 = por %p134, %p135
      %p138 = scmp.ne.s32.totalorder %s123, %s137
      %p139 = scmp.eq.s32.totalorder %s23, 0
      %p140 = por %p138, %p139
      %s142 = sadd.s32 %s141, 1
      %p145 = scmp.eq.s32.totalorder %s17, 7
      %p146 = scmp.ne.s32.totalorder %s141, %s143
      %p147 = scmp.eq.s32.totalorder %s17, 0
      %p148 = por %p146, %p147
      %p149 = scmp.ne.s32.totalorder %s141, %s143
      %p150 = scmp.eq.s32.totalorder %s22, 7
      %p151 = por %p149, %p150
      %p152 = scmp.ne.s32.totalorder %s143, %s144
      %p153 = scmp.eq.s32.totalorder %s22, 0
      %p154 = por %p152, %p153
      %p155 = scmp.ne.s32.totalorder %s143, %s144
      %p156 = scmp.eq.s32.totalorder %s23, 7
      %p157 = por %p155, %p156
      %p159 = scmp.ne.s32.totalorder %s144, %s158
      %p160 = scmp.eq.s32.totalorder %s23, 0
      %p161 = por %p159, %p160
      %s163 = sadd.s32 %s162, 1
      %p166 = scmp.eq.s32.totalorder %s17, 7
      %p167 = scmp.ne.s32.totalorder %s162, %s164
      %p168 = scmp.eq.s32.totalorder %s17, 0
      %p169 = por %p167, %p168
      %p170 = scmp.ne.s32.totalorder %s162, %s164
      %p171 = scmp.eq.s32.totalorder %s22, 7
      %p172 = por %p170, %p171
      %p173 = scmp.ne.s32.totalorder %s164, %s165
      %p174 = scmp.eq.s32.totalorder %s22, 0
      %p175 = por %p173, %p174
      %p176 = scmp.ne.s32.totalorder %s164, %s165
      %p177 = scmp.eq.s32.totalorder %s23, 7
      %p178 = por %p176, %p177
      %p180 = scmp.ne.s32.totalorder %s165, %s179
      %p181 = scmp.eq.s32.totalorder %s23, 0
      %p182 = por %p180, %p181
      %s184 = sadd.s32 %s183, 1
      %p187 = scmp.eq.s32.totalorder %s17, 7
      %p188 = scmp.ne.s32.totalorder %s183, %s185
      %p189 = scmp.eq.s32.totalorder %s17, 0
      %p190 = por %p188, %p189
      %p191 = scmp.ne.s32.totalorder %s183, %s185
      %p192 = scmp.eq.s32.totalorder %s22, 7
      %p193 = por %p191, %p192
      %p194 = scmp.ne.s32.totalorder %s185, %s186
      %p195 = scmp.eq.s32.totalorder %s22, 0
      %p196 = por %p194, %p195
      %p197 = scmp.ne.s32.totalorder %s185, %s186
      %p198 = scmp.eq.s32.totalorder %s23, 7
      %p199 = por %p197, %p198
      %p201 = scmp.ne.s32.totalorder %s186, %s200
      %p202 = scmp.eq.s32.totalorder %s23, 0
      %p203 = por %p201, %p202
      %s205 = sadd.s32 %s204, 1
      %p208 = scmp.eq.s32.totalorder %s17, 7
      %p209 = scmp.ne.s32.totalorder %s204, %s206
      %p210 = scmp.eq.s32.totalorder %s17, 0
      %p211 = por %p209, %p210
      %p212 = scmp.ne.s32.totalorder %s204, %s206
      %p213 = scmp.eq.s32.totalorder %s22, 7
      %p214 = por %p212, %p213
      %p215 = scmp.ne.s32.totalorder %s206, %s207
      %p216 = scmp.eq.s32.totalorder %s22, 0
      %p217 = por %p215, %p216
      %p218 = scmp.ne.s32.totalorder %s206, %s207
      %p219 = scmp.eq.s32.totalorder %s23, 7
      %p220 = por %p218, %p219
      %p222 = scmp.ne.s32.totalorder %s207, %s221
      %p223 = scmp.eq.s32.totalorder %s23, 0
      %p224 = por %p222, %p223
      %s225 = smul.u32 %s26, %s25
      %s226 = smul.u32 %s35, %s39
      %s227 = ssub.s32 %s24, %s43
      %s228 = ssub.s32 %s225, %s226
      %s229 = sor.u32 %s227, %s228
      %p230 = scmp.eq.s32.totalorder %s229, 0
      %s232 = sadd.s32 %s231, 1
      %s233 = scalar_select %p230, %s231, %s232
      %p236 = pneg %p230
      %p237 = scmp.eq.s32.totalorder %s17, 7
      %p238 = por %p236, %p237
      %p239 = scmp.ne.s32.totalorder %s231, %s234
      %p240 = scmp.eq.s32.totalorder %s17, 0
      %p241 = por %p239, %p240
      %p242 = scmp.ne.s32.totalorder %s231, %s234
      %p243 = scmp.eq.s32.totalorder %s22, 7
      %p244 = por %p242, %p243
      %p245 = scmp.ne.s32.totalorder %s234, %s235
      %p246 = scmp.eq.s32.totalorder %s22, 0
      %p247 = por %p245, %p246
      %p248 = scmp.ne.s32.totalorder %s234, %s235
      %p249 = scmp.eq.s32.totalorder %s23, 7
      %p250 = por %p248, %p249
      %p252 = scmp.ne.s32.totalorder %s235, %s251
      %p253 = scmp.eq.s32.totalorder %s23, 0
      %p254 = por %p252, %p253
      %p255 = scmp.le.s32.totalorder 1, %s17
      %p256 = scmp.lt.s32.totalorder %s17, 9
      %p257 = pnand %p255, %p256
      %p258 = pneg %p257
      // Predicated region
      $region9: #{amd_layer_forward.1} parent=5 // pred_check
        _
      $region10: #{amd_layer_forward.1} parent=5 // pred_check_branch
        %260 = sbr.rel (%p257) target = $region12
      $region11: #{amd_layer_forward.1} parent=5 // pred_region
        %s261 = ssub.s32 %s17, 1
        // Predicated region
        $region13: #{amd_layer_forward.1} parent=11 // pred_check
          %p262 = pneg %p91
        $region14: #{amd_layer_forward.1} parent=11 // pred_check_branch
          %264 = sbr.rel (%p262) target = $region16
        $region15: #{amd_layer_forward.1} parent=11 // pred_region
          _
        $region16: #{amd_layer_forward.1} parent=11 // pred_fallthru
          _
        // Predicated region
        $region17: #{amd_layer_forward.1} parent=11 // pred_check
          %p265 = pneg %p112
        $region18: #{amd_layer_forward.1} parent=11 // pred_check_branch
          %267 = sbr.rel (%p265) target = $region20
        $region19: #{amd_layer_forward.1} parent=11 // pred_region
          _
        $region20: #{amd_layer_forward.1} parent=11 // pred_fallthru
          _
        // Predicated region
        $region21: #{amd_layer_forward.1} parent=11 // pred_check
          %p268 = pneg %p133
        $region22: #{amd_layer_forward.1} parent=11 // pred_check_branch
          %270 = sbr.rel (%p268) target = $region24
        $region23: #{amd_layer_forward.1} parent=11 // pred_region
          _
        $region24: #{amd_layer_forward.1} parent=11 // pred_fallthru
          _
        // Predicated region
        $region25: #{amd_layer_forward.1} parent=11 // pred_check
          %p271 = pneg %p154
        $region26: #{amd_layer_forward.1} parent=11 // pred_check_branch
          %273 = sbr.rel (%p271) target = $region28
        $region27: #{amd_layer_forward.1} parent=11 // pred_region
          _
        $region28: #{amd_layer_forward.1} parent=11 // pred_fallthru
          _
        // Predicated region
        $region29: #{amd_layer_forward.1} parent=11 // pred_check
          %p274 = pneg %p175
        $region30: #{amd_layer_forward.1} parent=11 // pred_check_branch
          %276 = sbr.rel (%p274) target = $region32
        $region31: #{amd_layer_forward.1} parent=11 // pred_region
          _
        $region32: #{amd_layer_forward.1} parent=11 // pred_fallthru
          _
        // Predicated region
        $region33: #{amd_layer_forward.1} parent=11 // pred_check
          %p277 = pneg %p196
        $region34: #{amd_layer_forward.1} parent=11 // pred_check_branch
          %279 = sbr.rel (%p277) target = $region36
        $region35: #{amd_layer_forward.1} parent=11 // pred_region
          _
        $region36: #{amd_layer_forward.1} parent=11 // pred_fallthru
          _
        // Predicated region
        $region37: #{amd_layer_forward.1} parent=11 // pred_check
          %p280 = pneg %p217
        $region38: #{amd_layer_forward.1} parent=11 // pred_check_branch
          %282 = sbr.rel (%p280) target = $region40
        $region39: #{amd_layer_forward.1} parent=11 // pred_region
          _
        $region40: #{amd_layer_forward.1} parent=11 // pred_fallthru
          _
      $region12: #{amd_layer_forward.1} parent=5 // pred_fallthru
        _
      %p283 = scmp.lt.s32.totalorder %s17, 8
      // Predicated region
      $region41: #{amd_layer_forward.1} parent=5 // pred_check
        %p284 = pneg %p283
      $region42: #{amd_layer_forward.1} parent=5 // pred_check_branch
        %286 = sbr.rel (%p284) target = $region44
      $region43: #{amd_layer_forward.1} parent=5 // pred_region
        // Predicated region
        $region45: #{amd_layer_forward.1} parent=43 // pred_check
          %p287 = pneg %p64
        $region46: #{amd_layer_forward.1} parent=43 // pred_check_branch
          %289 = sbr.rel (%p287) target = $region48
        $region47: #{amd_layer_forward.1} parent=43 // pred_region
          %s290 = ssub.s32 1, %s25
          %s291 = smul.u32 %s290, %s26
          %s292 = sadd.s32 %s291, %s25
          %s293 = smul.u32 32, %s292
          %p294 = scmp.lt.s32.totalorder %s24, 1
          %s295 = scalar_select %p294, %s24, 1
          %p296 = scmp.lt.s32.totalorder %s293, 63
          %s297 = scalar_select %p296, %s293, 63
          %s298 = smul.addr %s295, 64
          %s299 = sadd.s32 %s297, %s298
          %s300 = smul.addr %s299, 8
          %s301 = scalar_lea.vmem %s0, %s300
          %s302 = ssub.s32 1, %s25
          %s303 = smul.u32 %s302, %s26
          %s304 = sadd.s32 %s303, %s25
          %s305 = smul.u32 32, %s304
        $region48: #{amd_layer_forward.1} parent=43 // pred_fallthru
          _
      $region44: #{amd_layer_forward.1} parent=5 // pred_fallthru
        _
      %p306 = scmp.le.s32.totalorder 1, %s17
      %p307 = scmp.lt.s32.totalorder %s17, 9
      %p308 = pnand %p306, %p307
      %p309 = pneg %p308
      // Predicated region
      $region49: #{amd_layer_forward.1} parent=5 // pred_check
        _
      $region50: #{amd_layer_forward.1} parent=5 // pred_check_branch
        %311 = sbr.rel (%p308) target = $region52
      $region51: #{amd_layer_forward.1} parent=5 // pred_region
        %s312 = ssub.s32 %s17, 1
        %s313 = ssub.s32 1, %s28
        %s314 = smul.u32 %s313, %s29
        %s315 = sadd.s32 %s314, %s28
        %s316 = smul.u32 32, %s315
        %p317 = scmp.lt.s32.totalorder %s27, 1
        %s318 = scalar_select %p317, %s27, 1
        %p319 = scmp.lt.s32.totalorder %s316, 63
        %s320 = scalar_select %p319, %s316, 63
        %s321 = smul.addr %s318, 64
        %s322 = sadd.s32 %s320, %s321
        %s323 = smul.addr %s322, 8
        %s324 = scalar_lea.vmem %s0, %s323
        %p325 = pneg %p70
        %p326 = pneg %p67
        %p327 = pneg %p91
        %p328 = pneg %p88
        %p329 = pneg %p112
        %p330 = pneg %p109
        %p331 = pneg %p133
        %p332 = pneg %p130
        %p333 = pneg %p154
        %p334 = pneg %p151
        %p335 = pneg %p175
        %p336 = pneg %p172
        %p337 = pneg %p196
        %p338 = pneg %p193
        %p339 = pneg %p217
        %p340 = pneg %p214
        %p341 = pneg %p247
        %p342 = pneg %p244
        %s343 = sand.u32 %s234, 1
        %s344 = scalar_lea.sflag [#allocation9], %s343
        %s345 = sand.u32 %s234, 1
        %s346 = smul.addr %s345, 256
        %s347 = scalar_lea.vmem [#allocation8], %s346
        %s348 = ssub.s32 1, %s28
        %s349 = smul.u32 %s348, %s29
        %s350 = sadd.s32 %s349, %s28
        %s351 = smul.u32 32, %s350
        %p352 = scmp.lt.s32.totalorder %s27, 1
        %s353 = scalar_select %p352, %s27, 1
        %p354 = scmp.lt.s32.totalorder %s351, 63
        %s355 = scalar_select %p354, %s351, 63
        %s356 = smul.addr %s353, 64
        %s357 = sadd.s32 %s355, %s356
        %s358 = smul.addr %s357, 8
        %s359 = scalar_lea.vmem %s0, %s358
        %s360 = ssub.s32 1, %s28
        %s361 = smul.u32 %s360, %s29
        %s362 = sadd.s32 %s361, %s28
        %s363 = smul.u32 32, %s362
        %s364 = smul.u32 %s29, %s28
        %s365 = smul.u32 32, %s364
        %p366 = scmp.eq.s32.totalorder %s28, 0
        %p367 = scmp.eq.s32.totalorder %s29, 0
        %p368 = pnand %p366, %p367
        %p369 = pneg %p368
        // Predicated region
        $region53: #{amd_layer_forward.1} parent=51 // pred_check
          _
        $region54: #{amd_layer_forward.1} parent=51 // pred_check_branch
          %371 = sbr.rel (%p368) target = $region56
        $region55: #{amd_layer_forward.1} parent=51 // pred_region
          %vm372 = vcmask 7168
          %373 = vst.msk [vmem:[#allocation2] sm:$0xff] %vm372, -inf
          %374 = vst.msk [vmem:[#allocation2 + $0x8] sm:$0xff] %vm372, -inf
          %375 = vst.msk [vmem:[#allocation2 + $0x10] sm:$0xff] %vm372, -inf
          %376 = vst.msk [vmem:[#allocation2 + $0x18] sm:$0xff] %vm372, -inf
          %377 = vst.msk [vmem:[#allocation2 + $0x20] sm:$0xff] %vm372, -inf
          %378 = vst.msk [vmem:[#allocation2 + $0x28] sm:$0xff] %vm372, -inf
          %379 = vst.msk [vmem:[#allocation2 + $0x30] sm:$0xff] %vm372, -inf
          %380 = vst.msk [vmem:[#allocation2 + $0x38] sm:$0xff] %vm372, -inf
          %381 = vst.msk [vmem:[#allocation2 + $0x40] sm:$0xff] %vm372, -inf
          %382 = vst.msk [vmem:[#allocation2 + $0x48] sm:$0xff] %vm372, -inf
          %383 = vst.msk [vmem:[#allocation2 + $0x50] sm:$0xff] %vm372, -inf
          %384 = vst.msk [vmem:[#allocation2 + $0x58] sm:$0xff] %vm372, -inf
          %385 = vst.msk [vmem:[#allocation2 + $0x60] sm:$0xff] %vm372, -inf
          %386 = vst.msk [vmem:[#allocation2 + $0x68] sm:$0xff] %vm372, -inf
          %387 = vst.msk [vmem:[#allocation2 + $0x70] sm:$0xff] %vm372, -inf
          %388 = vst.msk [vmem:[#allocation2 + $0x78] sm:$0xff] %vm372, -inf
          %389 = vst.msk [vmem:[#allocation3] sm:$0xff] %vm372, 0.0
          %390 = vst.msk [vmem:[#allocation3 + $0x8] sm:$0xff] %vm372, 0.0
          %391 = vst.msk [vmem:[#allocation3 + $0x10] sm:$0xff] %vm372, 0.0
          %392 = vst.msk [vmem:[#allocation3 + $0x18] sm:$0xff] %vm372, 0.0
          %393 = vst.msk [vmem:[#allocation3 + $0x20] sm:$0xff] %vm372, 0.0
          %394 = vst.msk [vmem:[#allocation3 + $0x28] sm:$0xff] %vm372, 0.0
          %395 = vst.msk [vmem:[#allocation3 + $0x30] sm:$0xff] %vm372, 0.0
          %396 = vst.msk [vmem:[#allocation3 + $0x38] sm:$0xff] %vm372, 0.0
          %397 = vst.msk [vmem:[#allocation3 + $0x40] sm:$0xff] %vm372, 0.0
          %398 = vst.msk [vmem:[#allocation3 + $0x48] sm:$0xff] %vm372, 0.0
          %399 = vst.msk [vmem:[#allocation3 + $0x50] sm:$0xff] %vm372, 0.0
          %400 = vst.msk [vmem:[#allocation3 + $0x58] sm:$0xff] %vm372, 0.0
          %401 = vst.msk [vmem:[#allocation3 + $0x60] sm:$0xff] %vm372, 0.0
          %402 = vst.msk [vmem:[#allocation3 + $0x68] sm:$0xff] %vm372, 0.0
          %403 = vst.msk [vmem:[#allocation3 + $0x70] sm:$0xff] %vm372, 0.0
          %404 = vst.msk [vmem:[#allocation3 + $0x78] sm:$0xff] %vm372, 0.0
          %405 = vst [vmem:[#allocation4] sm:$0xff] 0.0
          %406 = vst [vmem:[#allocation4 + $0x8] sm:$0xff] 0.0
          %407 = vst [vmem:[#allocation4 + $0x10] sm:$0xff] 0.0
          %408 = vst [vmem:[#allocation4 + $0x18] sm:$0xff] 0.0
          %409 = vst [vmem:[#allocation4 + $0x20] sm:$0xff] 0.0
          %410 = vst [vmem:[#allocation4 + $0x28] sm:$0xff] 0.0
          %411 = vst [vmem:[#allocation4 + $0x30] sm:$0xff] 0.0
          %412 = vst [vmem:[#allocation4 + $0x38] sm:$0xff] 0.0
          %413 = vst [vmem:[#allocation4 + $0x40] sm:$0xff] 0.0
          %414 = vst [vmem:[#allocation4 + $0x48] sm:$0xff] 0.0
          %415 = vst [vmem:[#allocation4 + $0x50] sm:$0xff] 0.0
          %416 = vst [vmem:[#allocation4 + $0x58] sm:$0xff] 0.0
          %417 = vst [vmem:[#allocation4 + $0x60] sm:$0xff] 0.0
          %418 = vst [vmem:[#allocation4 + $0x68] sm:$0xff] 0.0
          %419 = vst [vmem:[#allocation4 + $0x70] sm:$0xff] 0.0
          %420 = vst [vmem:[#allocation4 + $0x78] sm:$0xff] 0.0
        $region56: #{amd_layer_forward.1} parent=51 // pred_fallthru
          _
        // Predicated region
        $region57: #{amd_layer_forward.1} parent=51 // pred_check
          %p421 = pneg %p366
        $region58: #{amd_layer_forward.1} parent=51 // pred_check_branch
          %423 = sbr.rel (%p421) target = $region60
        $region59: #{amd_layer_forward.1} parent=51 // pred_region
          %v424 = vld [vmem:[%s359] sm:$0xff]
          %v425 = vld [vmem:[%s359 + $0x8] sm:$0xff]
          %v426 = vld [vmem:[%s359 + $0x10] sm:$0xff]
          %v427 = vld [vmem:[%s359 + $0x18] sm:$0xff]
          %v428 = vld [vmem:[%s359 + $0x20] sm:$0xff]
          %v429 = vld [vmem:[%s359 + $0x28] sm:$0xff]
          %v430 = vld [vmem:[%s359 + $0x30] sm:$0xff]
          %v431 = vld [vmem:[%s359 + $0x38] sm:$0xff]
          %v432 = vld [vmem:[%s359 + $0x40] sm:$0xff]
          %v433 = vld [vmem:[%s359 + $0x48] sm:$0xff]
          %v434 = vld [vmem:[%s359 + $0x50] sm:$0xff]
          %v435 = vld [vmem:[%s359 + $0x58] sm:$0xff]
          %v436 = vld [vmem:[%s359 + $0x60] sm:$0xff]
          %v437 = vld [vmem:[%s359 + $0x68] sm:$0xff]
          %v438 = vld [vmem:[%s359 + $0x70] sm:$0xff]
          %v439 = vld [vmem:[%s359 + $0x78] sm:$0xff]
          %v440 = vld [vmem:[%s359 + $0x80] sm:$0xff]
          %v441 = vld [vmem:[%s359 + $0x88] sm:$0xff]
          %v442 = vld [vmem:[%s359 + $0x90] sm:$0xff]
          %v443 = vld [vmem:[%s359 + $0x98] sm:$0xff]
          %v444 = vld [vmem:[%s359 + $0xa0] sm:$0xff]
          %v445 = vld [vmem:[%s359 + $0xa8] sm:$0xff]
          %v446 = vld [vmem:[%s359 + $0xb0] sm:$0xff]
          %v447 = vld [vmem:[%s359 + $0xb8] sm:$0xff]
          %v448 = vld [vmem:[%s359 + $0xc0] sm:$0xff]
          %v449 = vld [vmem:[%s359 + $0xc8] sm:$0xff]
          %v450 = vld [vmem:[%s359 + $0xd0] sm:$0xff]
          %v451 = vld [vmem:[%s359 + $0xd8] sm:$0xff]
          %v452 = vld [vmem:[%s359 + $0xe0] sm:$0xff]
          %v453 = vld [vmem:[%s359 + $0xe8] sm:$0xff]
          %v454 = vld [vmem:[%s359 + $0xf0] sm:$0xff]
          %v455 = vld [vmem:[%s359 + $0xf8] sm:$0xff]
          %v456 = vld [vmem:[%s1] sm:$0x1]
          %v457 = vld [vmem:[%s2] sm:$0x1]
          %458 = vadd.xlane.f32.xlu0 %v424
          %v459 = vpop.xlane.xlu0 %458
          %460 = vadd.xlane.f32.xlu0 %v425
          %v461 = vpop.xlane.xlu0 %460
          %462 = vadd.xlane.f32.xlu0 %v426
          %v463 = vpop.xlane.xlu0 %462
          %464 = vadd.xlane.f32.xlu0 %v427
          %v465 = vpop.xlane.xlu0 %464
          %466 = vadd.xlane.f32.xlu0 %v428
          %v467 = vpop.xlane.xlu0 %466
          %468 = vadd.xlane.f32.xlu0 %v429
          %v469 = vpop.xlane.xlu0 %468
          %470 = vadd.xlane.f32.xlu0 %v430
          %v471 = vpop.xlane.xlu0 %470
          %472 = vadd.xlane.f32.xlu0 %v431
          %v473 = vpop.xlane.xlu0 %472
          %474 = vadd.xlane.f32.xlu0 %v432
          %v475 = vpop.xlane.xlu0 %474
          %476 = vadd.xlane.f32.xlu0 %v433
          %v477 = vpop.xlane.xlu0 %476
          %478 = vadd.xlane.f32.xlu0 %v434
          %v479 = vpop.xlane.xlu0 %478
          %480 = vadd.xlane.f32.xlu0 %v435
          %v481 = vpop.xlane.xlu0 %480
          %482 = vadd.xlane.f32.xlu0 %v436
          %v483 = vpop.xlane.xlu0 %482
          %484 = vadd.xlane.f32.xlu0 %v437
          %v485 = vpop.xlane.xlu0 %484
          %486 = vadd.xlane.f32.xlu0 %v438
          %v487 = vpop.xlane.xlu0 %486
          %488 = vadd.xlane.f32.xlu0 %v439
          %v489 = vpop.xlane.xlu0 %488
          %490 = vadd.xlane.f32.xlu0 %v440
          %v491 = vpop.xlane.xlu0 %490
          %492 = vadd.xlane.f32.xlu0 %v441
          %v493 = vpop.xlane.xlu0 %492
          %494 = vadd.xlane.f32.xlu0 %v442
          %v495 = vpop.xlane.xlu0 %494
          %496 = vadd.xlane.f32.xlu0 %v443
          %v497 = vpop.xlane.xlu0 %496
          %498 = vadd.xlane.f32.xlu0 %v444
          %v499 = vpop.xlane.xlu0 %498
          %500 = vadd.xlane.f32.xlu0 %v445
          %v501 = vpop.xlane.xlu0 %500
          %502 = vadd.xlane.f32.xlu0 %v446
          %v503 = vpop.xlane.xlu0 %502
          %504 = vadd.xlane.f32.xlu0 %v447
          %v505 = vpop.xlane.xlu0 %504
          %506 = vadd.xlane.f32.xlu0 %v448
          %v507 = vpop.xlane.xlu0 %506
          %508 = vadd.xlane.f32.xlu0 %v449
          %v509 = vpop.xlane.xlu0 %508
          %510 = vadd.xlane.f32.xlu0 %v450
          %v511 = vpop.xlane.xlu0 %510
          %512 = vadd.xlane.f32.xlu0 %v451
          %v513 = vpop.xlane.xlu0 %512
          %514 = vadd.xlane.f32.xlu0 %v452
          %v515 = vpop.xlane.xlu0 %514
          %516 = vadd.xlane.f32.xlu0 %v453
          %v517 = vpop.xlane.xlu0 %516
          %518 = vadd.xlane.f32.xlu0 %v454
          %v519 = vpop.xlane.xlu0 %518
          %520 = vadd.xlane.f32.xlu0 %v455
          %v521 = vpop.xlane.xlu0 %520
          %v522 = vrcp.pop 128.0
          %v523 = vmul.f32 128.0, %v522
          %v524 = vsub.f32 1.0, %v523
          %v525 = vmul.f32 %v522, %v524
          %v526 = vadd.f32 %v522, %v525
          %vm527 = vweird.f32 %v522
          %v528 = vsel %vm527, %v522, %v526
          %v529 = vmul.f32 %v459, %v528
          %v530 = vmul.f32 %v461, %v528
          %v531 = vmul.f32 %v463, %v528
          %v532 = vmul.f32 %v465, %v528
          %v533 = vmul.f32 %v467, %v528
          %v534 = vmul.f32 %v469, %v528
          %v535 = vmul.f32 %v471, %v528
          %v536 = vmul.f32 %v473, %v528
          %v537 = vmul.f32 %v475, %v528
          %v538 = vmul.f32 %v477, %v528
          %v539 = vmul.f32 %v479, %v528
          %v540 = vmul.f32 %v481, %v528
          %v541 = vmul.f32 %v483, %v528
          %v542 = vmul.f32 %v485, %v528
          %v543 = vmul.f32 %v487, %v528
          %v544 = vmul.f32 %v489, %v528
          %v545 = vmul.f32 %v491, %v528
          %v546 = vmul.f32 %v493, %v528
          %v547 = vmul.f32 %v495, %v528
          %v548 = vmul.f32 %v497, %v528
          %v549 = vmul.f32 %v499, %v528
          %v550 = vmul.f32 %v501, %v528
          %v551 = vmul.f32 %v503, %v528
          %v552 = vmul.f32 %v505, %v528
          %v553 = vmul.f32 %v507, %v528
          %v554 = vmul.f32 %v509, %v528
          %v555 = vmul.f32 %v511, %v528
          %v556 = vmul.f32 %v513, %v528
          %v557 = vmul.f32 %v515, %v528
          %v558 = vmul.f32 %v517, %v528
          %v559 = vmul.f32 %v519, %v528
          %v560 = vmul.f32 %v521, %v528
          %v561 = vsub.f32 %v424, %v529
          %v562 = vsub.f32 %v425, %v530
          %v563 = vsub.f32 %v426, %v531
          %v564 = vsub.f32 %v427, %v532
          %v565 = vsub.f32 %v428, %v533
          %v566 = vsub.f32 %v429, %v534
          %v567 = vsub.f32 %v430, %v535
          %v568 = vsub.f32 %v431, %v536
          %v569 = vsub.f32 %v432, %v537
          %v570 = vsub.f32 %v433, %v538
          %v571 = vsub.f32 %v434, %v539
          %v572 = vsub.f32 %v435, %v540
          %v573 = vsub.f32 %v436, %v541
          %v574 = vsub.f32 %v437, %v542
          %v575 = vsub.f32 %v438, %v543
          %v576 = vsub.f32 %v439, %v544
          %v577 = vsub.f32 %v440, %v545
          %v578 = vsub.f32 %v441, %v546
          %v579 = vsub.f32 %v442, %v547
          %v580 = vsub.f32 %v443, %v548
          %v581 = vsub.f32 %v444, %v549
          %v582 = vsub.f32 %v445, %v550
          %v583 = vsub.f32 %v446, %v551
          %v584 = vsub.f32 %v447, %v552
          %v585 = vsub.f32 %v448, %v553
          %v586 = vsub.f32 %v449, %v554
          %v587 = vsub.f32 %v450, %v555
          %v588 = vsub.f32 %v451, %v556
          %v589 = vsub.f32 %v452, %v557
          %v590 = vsub.f32 %v453, %v558
          %v591 = vsub.f32 %v454, %v559
          %v592 = vsub.f32 %v455, %v560
          %v593 = vmul.f32 %v561, %v561
          %v594 = vmul.f32 %v562, %v562
          %v595 = vmul.f32 %v563, %v563
          %v596 = vmul.f32 %v564, %v564
          %v597 = vmul.f32 %v565, %v565
          %v598 = vmul.f32 %v566, %v566
          %v599 = vmul.f32 %v567, %v567
          %v600 = vmul.f32 %v568, %v568
          %v601 = vmul.f32 %v569, %v569
          %v602 = vmul.f32 %v570, %v570
          %v603 = vmul.f32 %v571, %v571
          %v604 = vmul.f32 %v572, %v572
          %v605 = vmul.f32 %v573, %v573
          %v606 = vmul.f32 %v574, %v574
          %v607 = vmul.f32 %v575, %v575
          %v608 = vmul.f32 %v576, %v576
          %v609 = vmul.f32 %v577, %v577
          %v610 = vmul.f32 %v578, %v578
          %v611 = vmul.f32 %v579, %v579
          %v612 = vmul.f32 %v580, %v580
          %v613 = vmul.f32 %v581, %v581
          %v614 = vmul.f32 %v582, %v582
          %v615 = vmul.f32 %v583, %v583
          %v616 = vmul.f32 %v584, %v584
          %v617 = vmul.f32 %v585, %v585
          %v618 = vmul.f32 %v586, %v586
          %v619 = vmul.f32 %v587, %v587
          %v620 = vmul.f32 %v588, %v588
          %v621 = vmul.f32 %v589, %v589
          %v622 = vmul.f32 %v590, %v590
          %v623 = vmul.f32 %v591, %v591
          %v624 = vmul.f32 %v592, %v592
          %625 = vadd.xlane.f32.xlu0 %v593
          %v626 = vpop.xlane.xlu0 %625
          %627 = vadd.xlane.f32.xlu0 %v594
          %v628 = vpop.xlane.xlu0 %627
          %629 = vadd.xlane.f32.xlu0 %v595
          %v630 = vpop.xlane.xlu0 %629
          %631 = vadd.xlane.f32.xlu0 %v596
          %v632 = vpop.xlane.xlu0 %631
          %633 = vadd.xlane.f32.xlu0 %v597
          %v634 = vpop.xlane.xlu0 %633
          %635 = vadd.xlane.f32.xlu0 %v598
          %v636 = vpop.xlane.xlu0 %635
          %637 = vadd.xlane.f32.xlu0 %v599
          %v638 = vpop.xlane.xlu0 %637
          %639 = vadd.xlane.f32.xlu0 %v600
          %v640 = vpop.xlane.xlu0 %639
          %641 = vadd.xlane.f32.xlu0 %v601
          %v642 = vpop.xlane.xlu0 %641
          %643 = vadd.xlane.f32.xlu0 %v602
          %v644 = vpop.xlane.xlu0 %643
          %645 = vadd.xlane.f32.xlu0 %v603
          %v646 = vpop.xlane.xlu0 %645
          %647 = vadd.xlane.f32.xlu0 %v604
          %v648 = vpop.xlane.xlu0 %647
          %649 = vadd.xlane.f32.xlu0 %v605
          %v650 = vpop.xlane.xlu0 %649
          %651 = vadd.xlane.f32.xlu0 %v606
          %v652 = vpop.xlane.xlu0 %651
          %653 = vadd.xlane.f32.xlu0 %v607
          %v654 = vpop.xlane.xlu0 %653
          %655 = vadd.xlane.f32.xlu0 %v608
          %v656 = vpop.xlane.xlu0 %655
          %657 = vadd.xlane.f32.xlu0 %v609
          %v658 = vpop.xlane.xlu0 %657
          %659 = vadd.xlane.f32.xlu0 %v610
          %v660 = vpop.xlane.xlu0 %659
          %661 = vadd.xlane.f32.xlu0 %v611
          %v662 = vpop.xlane.xlu0 %661
          %663 = vadd.xlane.f32.xlu0 %v612
          %v664 = vpop.xlane.xlu0 %663
          %665 = vadd.xlane.f32.xlu0 %v613
          %v666 = vpop.xlane.xlu0 %665
          %667 = vadd.xlane.f32.xlu0 %v614
          %v668 = vpop.xlane.xlu0 %667
          %669 = vadd.xlane.f32.xlu0 %v615
          %v670 = vpop.xlane.xlu0 %669
          %671 = vadd.xlane.f32.xlu0 %v616
          %v672 = vpop.xlane.xlu0 %671
          %673 = vadd.xlane.f32.xlu0 %v617
          %v674 = vpop.xlane.xlu0 %673
          %675 = vadd.xlane.f32.xlu0 %v618
          %v676 = vpop.xlane.xlu0 %675
          %677 = vadd.xlane.f32.xlu0 %v619
          %v678 = vpop.xlane.xlu0 %677
          %679 = vadd.xlane.f32.xlu0 %v620
          %v680 = vpop.xlane.xlu0 %679
          %681 = vadd.xlane.f32.xlu0 %v621
          %v682 = vpop.xlane.xlu0 %681
          %683 = vadd.xlane.f32.xlu0 %v622
          %v684 = vpop.xlane.xlu0 %683
          %685 = vadd.xlane.f32.xlu0 %v623
          %v686 = vpop.xlane.xlu0 %685
          %687 = vadd.xlane.f32.xlu0 %v624
          %v688 = vpop.xlane.xlu0 %687
          %v689 = vmul.f32 %v626, %v528
          %v690 = vmul.f32 %v628, %v528
          %v691 = vmul.f32 %v630, %v528
          %v692 = vmul.f32 %v632, %v528
          %v693 = vmul.f32 %v634, %v528
          %v694 = vmul.f32 %v636, %v528
          %v695 = vmul.f32 %v638, %v528
          %v696 = vmul.f32 %v640, %v528
          %v697 = vmul.f32 %v642, %v528
          %v698 = vmul.f32 %v644, %v528
          %v699 = vmul.f32 %v646, %v528
          %v700 = vmul.f32 %v648, %v528
          %v701 = vmul.f32 %v650, %v528
          %v702 = vmul.f32 %v652, %v528
          %v703 = vmul.f32 %v654, %v528
          %v704 = vmul.f32 %v656, %v528
          %v705 = vmul.f32 %v658, %v528
          %v706 = vmul.f32 %v660, %v528
          %v707 = vmul.f32 %v662, %v528
          %v708 = vmul.f32 %v664, %v528
          %v709 = vmul.f32 %v666, %v528
          %v710 = vmul.f32 %v668, %v528
          %v711 = vmul.f32 %v670, %v528
          %v712 = vmul.f32 %v672, %v528
          %v713 = vmul.f32 %v674, %v528
          %v714 = vmul.f32 %v676, %v528
          %v715 = vmul.f32 %v678, %v528
          %v716 = vmul.f32 %v680, %v528
          %v717 = vmul.f32 %v682, %v528
          %v718 = vmul.f32 %v684, %v528
          %v719 = vmul.f32 %v686, %v528
          %v720 = vmul.f32 %v688, %v528
          %v721 = vadd.f32 %v689, 1e-05
          %v722 = vadd.f32 %v690, 1e-05
          %v723 = vadd.f32 %v691, 1e-05
          %v724 = vadd.f32 %v692, 1e-05
          %v725 = vadd.f32 %v693, 1e-05
          %v726 = vadd.f32 %v694, 1e-05
          %v727 = vadd.f32 %v695, 1e-05
          %v728 = vadd.f32 %v696, 1e-05
          %v729 = vadd.f32 %v697, 1e-05
          %v730 = vadd.f32 %v698, 1e-05
          %v731 = vadd.f32 %v699, 1e-05
          %v732 = vadd.f32 %v700, 1e-05
          %v733 = vadd.f32 %v701, 1e-05
          %v734 = vadd.f32 %v702, 1e-05
          %v735 = vadd.f32 %v703, 1e-05
          %v736 = vadd.f32 %v704, 1e-05
          %v737 = vadd.f32 %v705, 1e-05
          %v738 = vadd.f32 %v706, 1e-05
          %v739 = vadd.f32 %v707, 1e-05
          %v740 = vadd.f32 %v708, 1e-05
          %v741 = vadd.f32 %v709, 1e-05
          %v742 = vadd.f32 %v710, 1e-05
          %v743 = vadd.f32 %v711, 1e-05
          %v744 = vadd.f32 %v712, 1e-05
          %v745 = vadd.f32 %v713, 1e-05
          %v746 = vadd.f32 %v714, 1e-05
          %v747 = vadd.f32 %v715, 1e-05
          %v748 = vadd.f32 %v716, 1e-05
          %v749 = vadd.f32 %v717, 1e-05
          %v750 = vadd.f32 %v718, 1e-05
          %v751 = vadd.f32 %v719, 1e-05
          %v752 = vadd.f32 %v720, 1e-05
          %v753 = vrsqrt.pop %v721
          %v754 = vmul.f32 %v753, %v721
          %v755 = vmul.f32 %v754, %v753
          %v756 = vmul.f32 0.5, %v755
          %v757 = vsub.f32 1.5, %v756
          %v758 = vmul.f32 %v753, %v757
          %vm759 = vweird.f32 %v721
          %vm760 = vweird.f32 %v753
          %vm761 = vmor %vm759, %vm760
          %v762 = vsel %vm761, %v753, %v758
          %v763 = vrsqrt.pop %v722
          %v764 = vmul.f32 %v763, %v722
          %v765 = vmul.f32 %v764, %v763
          %v766 = vmul.f32 0.5, %v765
          %v767 = vsub.f32 1.5, %v766
          %v768 = vmul.f32 %v763, %v767
          %vm769 = vweird.f32 %v722
          %vm770 = vweird.f32 %v763
          %vm771 = vmor %vm769, %vm770
          %v772 = vsel %vm771, %v763, %v768
          %v773 = vrsqrt.pop %v723
          %v774 = vmul.f32 %v773, %v723
          %v775 = vmul.f32 %v774, %v773
          %v776 = vmul.f32 0.5, %v775
          %v777 = vsub.f32 1.5, %v776
          %v778 = vmul.f32 %v773, %v777
          %vm779 = vweird.f32 %v723
          %vm780 = vweird.f32 %v773
          %vm781 = vmor %vm779, %vm780
          %v782 = vsel %vm781, %v773, %v778
          %v783 = vrsqrt.pop %v724
          %v784 = vmul.f32 %v783, %v724
          %v785 = vmul.f32 %v784, %v783
          %v786 = vmul.f32 0.5, %v785
          %v787 = vsub.f32 1.5, %v786
          %v788 = vmul.f32 %v783, %v787
          %vm789 = vweird.f32 %v724
          %vm790 = vweird.f32 %v783
          %vm791 = vmor %vm789, %vm790
          %v792 = vsel %vm791, %v783, %v788
          %v793 = vrsqrt.pop %v725
          %v794 = vmul.f32 %v793, %v725
          %v795 = vmul.f32 %v794, %v793
          %v796 = vmul.f32 0.5, %v795
          %v797 = vsub.f32 1.5, %v796
          %v798 = vmul.f32 %v793, %v797
          %vm799 = vweird.f32 %v725
          %vm800 = vweird.f32 %v793
          %vm801 = vmor %vm799, %vm800
          %v802 = vsel %vm801, %v793, %v798
          %v803 = vrsqrt.pop %v726
          %v804 = vmul.f32 %v803, %v726
          %v805 = vmul.f32 %v804, %v803
          %v806 = vmul.f32 0.5, %v805
          %v807 = vsub.f32 1.5, %v806
          %v808 = vmul.f32 %v803, %v807
          %vm809 = vweird.f32 %v726
          %vm810 = vweird.f32 %v803
          %vm811 = vmor %vm809, %vm810
          %v812 = vsel %vm811, %v803, %v808
          %v813 = vrsqrt.pop %v727
          %v814 = vmul.f32 %v813, %v727
          %v815 = vmul.f32 %v814, %v813
          %v816 = vmul.f32 0.5, %v815
          %v817 = vsub.f32 1.5, %v816
          %v818 = vmul.f32 %v813, %v817
          %vm819 = vweird.f32 %v727
          %vm820 = vweird.f32 %v813
          %vm821 = vmor %vm819, %vm820
          %v822 = vsel %vm821, %v813, %v818
          %v823 = vrsqrt.pop %v728
          %v824 = vmul.f32 %v823, %v728
          %v825 = vmul.f32 %v824, %v823
          %v826 = vmul.f32 0.5, %v825
          %v827 = vsub.f32 1.5, %v826
          %v828 = vmul.f32 %v823, %v827
          %vm829 = vweird.f32 %v728
          %vm830 = vweird.f32 %v823
          %vm831 = vmor %vm829, %vm830
          %v832 = vsel %vm831, %v823, %v828
          %v833 = vrsqrt.pop %v729
          %v834 = vmul.f32 %v833, %v729
          %v835 = vmul.f32 %v834, %v833
          %v836 = vmul.f32 0.5, %v835
          %v837 = vsub.f32 1.5, %v836
          %v838 = vmul.f32 %v833, %v837
          %vm839 = vweird.f32 %v729
          %vm840 = vweird.f32 %v833
          %vm841 = vmor %vm839, %vm840
          %v842 = vsel %vm841, %v833, %v838
          %v843 = vrsqrt.pop %v730
          %v844 = vmul.f32 %v843, %v730
          %v845 = vmul.f32 %v844, %v843
          %v846 = vmul.f32 0.5, %v845
          %v847 = vsub.f32 1.5, %v846
          %v848 = vmul.f32 %v843, %v847
          %vm849 = vweird.f32 %v730
          %vm850 = vweird.f32 %v843
          %vm851 = vmor %vm849, %vm850
          %v852 = vsel %vm851, %v843, %v848
          %v853 = vrsqrt.pop %v731
          %v854 = vmul.f32 %v853, %v731
          %v855 = vmul.f32 %v854, %v853
          %v856 = vmul.f32 0.5, %v855
          %v857 = vsub.f32 1.5, %v856
          %v858 = vmul.f32 %v853, %v857
          %vm859 = vweird.f32 %v731
          %vm860 = vweird.f32 %v853
          %vm861 = vmor %vm859, %vm860
          %v862 = vsel %vm861, %v853, %v858
          %v863 = vrsqrt.pop %v732
          %v864 = vmul.f32 %v863, %v732
          %v865 = vmul.f32 %v864, %v863
          %v866 = vmul.f32 0.5, %v865
          %v867 = vsub.f32 1.5, %v866
          %v868 = vmul.f32 %v863, %v867
          %vm869 = vweird.f32 %v732
          %vm870 = vweird.f32 %v863
          %vm871 = vmor %vm869, %vm870
          %v872 = vsel %vm871, %v863, %v868
          %v873 = vrsqrt.pop %v733
          %v874 = vmul.f32 %v873, %v733
          %v875 = vmul.f32 %v874, %v873
          %v876 = vmul.f32 0.5, %v875
          %v877 = vsub.f32 1.5, %v876
          %v878 = vmul.f32 %v873, %v877
          %vm879 = vweird.f32 %v733
          %vm880 = vweird.f32 %v873
          %vm881 = vmor %vm879, %vm880
          %v882 = vsel %vm881, %v873, %v878
          %v883 = vrsqrt.pop %v734
          %v884 = vmul.f32 %v883, %v734
          %v885 = vmul.f32 %v884, %v883
          %v886 = vmul.f32 0.5, %v885
          %v887 = vsub.f32 1.5, %v886
          %v888 = vmul.f32 %v883, %v887
          %vm889 = vweird.f32 %v734
          %vm890 = vweird.f32 %v883
          %vm891 = vmor %vm889, %vm890
          %v892 = vsel %vm891, %v883, %v888
          %v893 = vrsqrt.pop %v735
          %v894 = vmul.f32 %v893, %v735
          %v895 = vmul.f32 %v894, %v893
          %v896 = vmul.f32 0.5, %v895
          %v897 = vsub.f32 1.5, %v896
          %v898 = vmul.f32 %v893, %v897
          %vm899 = vweird.f32 %v735
          %vm900 = vweird.f32 %v893
          %vm901 = vmor %vm899, %vm900
          %v902 = vsel %vm901, %v893, %v898
          %v903 = vrsqrt.pop %v736
          %v904 = vmul.f32 %v903, %v736
          %v905 = vmul.f32 %v904, %v903
          %v906 = vmul.f32 0.5, %v905
          %v907 = vsub.f32 1.5, %v906
          %v908 = vmul.f32 %v903, %v907
          %vm909 = vweird.f32 %v736
          %vm910 = vweird.f32 %v903
          %vm911 = vmor %vm909, %vm910
          %v912 = vsel %vm911, %v903, %v908
          %v913 = vrsqrt.pop %v737
          %v914 = vmul.f32 %v913, %v737
          %v915 = vmul.f32 %v914, %v913
          %v916 = vmul.f32 0.5, %v915
          %v917 = vsub.f32 1.5, %v916
          %v918 = vmul.f32 %v913, %v917
          %vm919 = vweird.f32 %v737
          %vm920 = vweird.f32 %v913
          %vm921 = vmor %vm919, %vm920
          %v922 = vsel %vm921, %v913, %v918
          %v923 = vrsqrt.pop %v738
          %v924 = vmul.f32 %v923, %v738
          %v925 = vmul.f32 %v924, %v923
          %v926 = vmul.f32 0.5, %v925
          %v927 = vsub.f32 1.5, %v926
          %v928 = vmul.f32 %v923, %v927
          %vm929 = vweird.f32 %v738
          %vm930 = vweird.f32 %v923
          %vm931 = vmor %vm929, %vm930
          %v932 = vsel %vm931, %v923, %v928
          %v933 = vrsqrt.pop %v739
          %v934 = vmul.f32 %v933, %v739
          %v935 = vmul.f32 %v934, %v933
          %v936 = vmul.f32 0.5, %v935
          %v937 = vsub.f32 1.5, %v936
          %v938 = vmul.f32 %v933, %v937
          %vm939 = vweird.f32 %v739
          %vm940 = vweird.f32 %v933
          %vm941 = vmor %vm939, %vm940
          %v942 = vsel %vm941, %v933, %v938
          %v943 = vrsqrt.pop %v740
          %v944 = vmul.f32 %v943, %v740
          %v945 = vmul.f32 %v944, %v943
          %v946 = vmul.f32 0.5, %v945
          %v947 = vsub.f32 1.5, %v946
          %v948 = vmul.f32 %v943, %v947
          %vm949 = vweird.f32 %v740
          %vm950 = vweird.f32 %v943
          %vm951 = vmor %vm949, %vm950
          %v952 = vsel %vm951, %v943, %v948
          %v953 = vrsqrt.pop %v741
          %v954 = vmul.f32 %v953, %v741
          %v955 = vmul.f32 %v954, %v953
          %v956 = vmul.f32 0.5, %v955
          %v957 = vsub.f32 1.5, %v956
          %v958 = vmul.f32 %v953, %v957
          %vm959 = vweird.f32 %v741
          %vm960 = vweird.f32 %v953
          %vm961 = vmor %vm959, %vm960
          %v962 = vsel %vm961, %v953, %v958
          %v963 = vrsqrt.pop %v742
          %v964 = vmul.f32 %v963, %v742
          %v965 = vmul.f32 %v964, %v963
          %v966 = vmul.f32 0.5, %v965
          %v967 = vsub.f32 1.5, %v966
          %v968 = vmul.f32 %v963, %v967
          %vm969 = vweird.f32 %v742
          %vm970 = vweird.f32 %v963
          %vm971 = vmor %vm969, %vm970
          %v972 = vsel %vm971, %v963, %v968
          %v973 = vrsqrt.pop %v743
          %v974 = vmul.f32 %v973, %v743
          %v975 = vmul.f32 %v974, %v973
          %v976 = vmul.f32 0.5, %v975
          %v977 = vsub.f32 1.5, %v976
          %v978 = vmul.f32 %v973, %v977
          %vm979 = vweird.f32 %v743
          %vm980 = vweird.f32 %v973
          %vm981 = vmor %vm979, %vm980
          %v982 = vsel %vm981, %v973, %v978
          %v983 = vrsqrt.pop %v744
          %v984 = vmul.f32 %v983, %v744
          %v985 = vmul.f32 %v984, %v983
          %v986 = vmul.f32 0.5, %v985
          %v987 = vsub.f32 1.5, %v986
          %v988 = vmul.f32 %v983, %v987
          %vm989 = vweird.f32 %v744
          %vm990 = vweird.f32 %v983
          %vm991 = vmor %vm989, %vm990
          %v992 = vsel %vm991, %v983, %v988
          %v993 = vrsqrt.pop %v745
          %v994 = vmul.f32 %v993, %v745
          %v995 = vmul.f32 %v994, %v993
          %v996 = vmul.f32 0.5, %v995
          %v997 = vsub.f32 1.5, %v996
          %v998 = vmul.f32 %v993, %v997
          %vm999 = vweird.f32 %v745
          %vm1000 = vweird.f32 %v993
          %vm1001 = vmor %vm999, %vm1000
          %v1002 = vsel %vm1001, %v993, %v998
          %v1003 = vrsqrt.pop %v746
          %v1004 = vmul.f32 %v1003, %v746
          %v1005 = vmul.f32 %v1004, %v1003
          %v1006 = vmul.f32 0.5, %v1005
          %v1007 = vsub.f32 1.5, %v1006
          %v1008 = vmul.f32 %v1003, %v1007
          %vm1009 = vweird.f32 %v746
          %vm1010 = vweird.f32 %v1003
          %vm1011 = vmor %vm1009, %vm1010
          %v1012 = vsel %vm1011, %v1003, %v1008
          %v1013 = vrsqrt.pop %v747
          %v1014 = vmul.f32 %v1013, %v747
          %v1015 = vmul.f32 %v1014, %v1013
          %v1016 = vmul.f32 0.5, %v1015
          %v1017 = vsub.f32 1.5, %v1016
          %v1018 = vmul.f32 %v1013, %v1017
          %vm1019 = vweird.f32 %v747
          %vm1020 = vweird.f32 %v1013
          %vm1021 = vmor %vm1019, %vm1020
          %v1022 = vsel %vm1021, %v1013, %v1018
          %v1023 = vrsqrt.pop %v748
          %v1024 = vmul.f32 %v1023, %v748
          %v1025 = vmul.f32 %v1024, %v1023
          %v1026 = vmul.f32 0.5, %v1025
          %v1027 = vsub.f32 1.5, %v1026
          %v1028 = vmul.f32 %v1023, %v1027
          %vm1029 = vweird.f32 %v748
          %vm1030 = vweird.f32 %v1023
          %vm1031 = vmor %vm1029, %vm1030
          %v1032 = vsel %vm1031, %v1023, %v1028
          %v1033 = vrsqrt.pop %v749
          %v1034 = vmul.f32 %v1033, %v749
          %v1035 = vmul.f32 %v1034, %v1033
          %v1036 = vmul.f32 0.5, %v1035
          %v1037 = vsub.f32 1.5, %v1036
          %v1038 = vmul.f32 %v1033, %v1037
          %vm1039 = vweird.f32 %v749
          %vm1040 = vweird.f32 %v1033
          %vm1041 = vmor %vm1039, %vm1040
          %v1042 = vsel %vm1041, %v1033, %v1038
          %v1043 = vrsqrt.pop %v750
          %v1044 = vmul.f32 %v1043, %v750
          %v1045 = vmul.f32 %v1044, %v1043
          %v1046 = vmul.f32 0.5, %v1045
          %v1047 = vsub.f32 1.5, %v1046
          %v1048 = vmul.f32 %v1043, %v1047
          %vm1049 = vweird.f32 %v750
          %vm1050 = vweird.f32 %v1043
          %vm1051 = vmor %vm1049, %vm1050
          %v1052 = vsel %vm1051, %v1043, %v1048
          %v1053 = vrsqrt.pop %v751
          %v1054 = vmul.f32 %v1053, %v751
          %v1055 = vmul.f32 %v1054, %v1053
          %v1056 = vmul.f32 0.5, %v1055
          %v1057 = vsub.f32 1.5, %v1056
          %v1058 = vmul.f32 %v1053, %v1057
          %vm1059 = vweird.f32 %v751
          %vm1060 = vweird.f32 %v1053
          %vm1061 = vmor %vm1059, %vm1060
          %v1062 = vsel %vm1061, %v1053, %v1058
          %v1063 = vrsqrt.pop %v752
          %v1064 = vmul.f32 %v1063, %v752
          %v1065 = vmul.f32 %v1064, %v1063
          %v1066 = vmul.f32 0.5, %v1065
          %v1067 = vsub.f32 1.5, %v1066
          %v1068 = vmul.f32 %v1063, %v1067
          %vm1069 = vweird.f32 %v752
          %vm1070 = vweird.f32 %v1063
          %vm1071 = vmor %vm1069, %vm1070
          %v1072 = vsel %vm1071, %v1063, %v1068
          %v1073 = vmul.f32 %v561, %v762
          %v1074 = vmul.f32 %v562, %v772
          %v1075 = vmul.f32 %v563, %v782
          %v1076 = vmul.f32 %v564, %v792
          %v1077 = vmul.f32 %v565, %v802
          %v1078 = vmul.f32 %v566, %v812
          %v1079 = vmul.f32 %v567, %v822
          %v1080 = vmul.f32 %v568, %v832
          %v1081 = vmul.f32 %v569, %v842
          %v1082 = vmul.f32 %v570, %v852
          %v1083 = vmul.f32 %v571, %v862
          %v1084 = vmul.f32 %v572, %v872
          %v1085 = vmul.f32 %v573, %v882
          %v1086 = vmul.f32 %v574, %v892
          %v1087 = vmul.f32 %v575, %v902
          %v1088 = vmul.f32 %v576, %v912
          %v1089 = vmul.f32 %v577, %v922
          %v1090 = vmul.f32 %v578, %v932
          %v1091 = vmul.f32 %v579, %v942
          %v1092 = vmul.f32 %v580, %v952
          %v1093 = vmul.f32 %v581, %v962
          %v1094 = vmul.f32 %v582, %v972
          %v1095 = vmul.f32 %v583, %v982
          %v1096 = vmul.f32 %v584, %v992
          %v1097 = vmul.f32 %v585, %v1002
          %v1098 = vmul.f32 %v586, %v1012
          %v1099 = vmul.f32 %v587, %v1022
          %v1100 = vmul.f32 %v588, %v1032
          %v1101 = vmul.f32 %v589, %v1042
          %v1102 = vmul.f32 %v590, %v1052
          %v1103 = vmul.f32 %v591, %v1062
          %v1104 = vmul.f32 %v592, %v1072
          %v1106 = vperm.slane %v456, 0
          %v1108 = vmul.f32 %v1073, %v1106
          %v1109 = vmul.f32 %v1074, %v1106
          %v1110 = vmul.f32 %v1075, %v1106
          %v1111 = vmul.f32 %v1076, %v1106
          %v1112 = vmul.f32 %v1077, %v1106
          %v1113 = vmul.f32 %v1078, %v1106
          %v1114 = vmul.f32 %v1079, %v1106
          %v1115 = vmul.f32 %v1080, %v1106
          %v1116 = vmul.f32 %v1081, %v1106
          %v1117 = vmul.f32 %v1082, %v1106
          %v1118 = vmul.f32 %v1083, %v1106
          %v1119 = vmul.f32 %v1084, %v1106
          %v1120 = vmul.f32 %v1085, %v1106
          %v1121 = vmul.f32 %v1086, %v1106
          %v1122 = vmul.f32 %v1087, %v1106
          %v1123 = vmul.f32 %v1088, %v1106
          %v1124 = vmul.f32 %v1089, %v1106
          %v1125 = vmul.f32 %v1090, %v1106
          %v1126 = vmul.f32 %v1091, %v1106
          %v1127 = vmul.f32 %v1092, %v1106
          %v1128 = vmul.f32 %v1093, %v1106
          %v1129 = vmul.f32 %v1094, %v1106
          %v1130 = vmul.f32 %v1095, %v1106
          %v1131 = vmul.f32 %v1096, %v1106
          %v1132 = vmul.f32 %v1097, %v1106
          %v1133 = vmul.f32 %v1098, %v1106
          %v1134 = vmul.f32 %v1099, %v1106
          %v1135 = vmul.f32 %v1100, %v1106
          %v1136 = vmul.f32 %v1101, %v1106
          %v1137 = vmul.f32 %v1102, %v1106
          %v1138 = vmul.f32 %v1103, %v1106
          %v1139 = vmul.f32 %v1104, %v1106
          %v1141 = vperm.slane %v457, 0
          %v1143 = vadd.f32 %v1108, %v1141
          %v1144 = vadd.f32 %v1109, %v1141
          %v1145 = vadd.f32 %v1110, %v1141
          %v1146 = vadd.f32 %v1111, %v1141
          %v1147 = vadd.f32 %v1112, %v1141
          %v1148 = vadd.f32 %v1113, %v1141
          %v1149 = vadd.f32 %v1114, %v1141
          %v1150 = vadd.f32 %v1115, %v1141
          %v1151 = vadd.f32 %v1116, %v1141
          %v1152 = vadd.f32 %v1117, %v1141
          %v1153 = vadd.f32 %v1118, %v1141
          %v1154 = vadd.f32 %v1119, %v1141
          %v1155 = vadd.f32 %v1120, %v1141
          %v1156 = vadd.f32 %v1121, %v1141
          %v1157 = vadd.f32 %v1122, %v1141
          %v1158 = vadd.f32 %v1123, %v1141
          %v1159 = vadd.f32 %v1124, %v1141
          %v1160 = vadd.f32 %v1125, %v1141
          %v1161 = vadd.f32 %v1126, %v1141
          %v1162 = vadd.f32 %v1127, %v1141
          %v1163 = vadd.f32 %v1128, %v1141
          %v1164 = vadd.f32 %v1129, %v1141
          %v1165 = vadd.f32 %v1130, %v1141
          %v1166 = vadd.f32 %v1131, %v1141
          %v1167 = vadd.f32 %v1132, %v1141
          %v1168 = vadd.f32 %v1133, %v1141
          %v1169 = vadd.f32 %v1134, %v1141
          %v1170 = vadd.f32 %v1135, %v1141
          %v1171 = vadd.f32 %v1136, %v1141
          %v1172 = vadd.f32 %v1137, %v1141
          %v1173 = vadd.f32 %v1138, %v1141
          %v1174 = vadd.f32 %v1139, %v1141
          %v1175 = vpack.c.bf16 %v1143, %v1143
          %v1176 = vpack.c.bf16 %v1144, %v1144
          %v1177 = vpack.c.bf16 %v1145, %v1145
          %v1178 = vpack.c.bf16 %v1146, %v1146
          %v1179 = vpack.c.bf16 %v1147, %v1147
          %v1180 = vpack.c.bf16 %v1148, %v1148
          %v1181 = vpack.c.bf16 %v1149, %v1149
          %v1182 = vpack.c.bf16 %v1150, %v1150
          %v1183 = vpack.c.bf16 %v1151, %v1151
          %v1184 = vpack.c.bf16 %v1152, %v1152
          %v1185 = vpack.c.bf16 %v1153, %v1153
          %v1186 = vpack.c.bf16 %v1154, %v1154
          %v1187 = vpack.c.bf16 %v1155, %v1155
          %v1188 = vpack.c.bf16 %v1156, %v1156
          %v1189 = vpack.c.bf16 %v1157, %v1157
          %v1190 = vpack.c.bf16 %v1158, %v1158
          %v1191 = vpack.c.bf16 %v1159, %v1159
          %v1192 = vpack.c.bf16 %v1160, %v1160
          %v1193 = vpack.c.bf16 %v1161, %v1161
          %v1194 = vpack.c.bf16 %v1162, %v1162
          %v1195 = vpack.c.bf16 %v1163, %v1163
          %v1196 = vpack.c.bf16 %v1164, %v1164
          %v1197 = vpack.c.bf16 %v1165, %v1165
          %v1198 = vpack.c.bf16 %v1166, %v1166
          %v1199 = vpack.c.bf16 %v1167, %v1167
          %v1200 = vpack.c.bf16 %v1168, %v1168
          %v1201 = vpack.c.bf16 %v1169, %v1169
          %v1202 = vpack.c.bf16 %v1170, %v1170
          %v1203 = vpack.c.bf16 %v1171, %v1171
          %v1204 = vpack.c.bf16 %v1172, %v1172
          %v1205 = vpack.c.bf16 %v1173, %v1173
          %v1206 = vpack.c.bf16 %v1174, %v1174
          %s1207 = smul.u32 %s29, 256
          %s1208 = scalar_lea.vmem [#allocation6], %s1207
          %1209 = vst [vmem:[%s1208] sm:$0xff] %v424
          %1210 = vst [vmem:[%s1208 + $0x8] sm:$0xff] %v425
          %1211 = vst [vmem:[%s1208 + $0x10] sm:$0xff] %v426
          %1212 = vst [vmem:[%s1208 + $0x18] sm:$0xff] %v427
          %1213 = vst [vmem:[%s1208 + $0x20] sm:$0xff] %v428
          %1214 = vst [vmem:[%s1208 + $0x28] sm:$0xff] %v429
          %1215 = vst [vmem:[%s1208 + $0x30] sm:$0xff] %v430
          %1216 = vst [vmem:[%s1208 + $0x38] sm:$0xff] %v431
          %1217 = vst [vmem:[%s1208 + $0x40] sm:$0xff] %v432
          %1218 = vst [vmem:[%s1208 + $0x48] sm:$0xff] %v433
          %1219 = vst [vmem:[%s1208 + $0x50] sm:$0xff] %v434
          %1220 = vst [vmem:[%s1208 + $0x58] sm:$0xff] %v435
          %1221 = vst [vmem:[%s1208 + $0x60] sm:$0xff] %v436
          %1222 = vst [vmem:[%s1208 + $0x68] sm:$0xff] %v437
          %1223 = vst [vmem:[%s1208 + $0x70] sm:$0xff] %v438
          %1224 = vst [vmem:[%s1208 + $0x78] sm:$0xff] %v439
          %1225 = vst [vmem:[%s1208 + $0x80] sm:$0xff] %v440
          %1226 = vst [vmem:[%s1208 + $0x88] sm:$0xff] %v441
          %1227 = vst [vmem:[%s1208 + $0x90] sm:$0xff] %v442
          %1228 = vst [vmem:[%s1208 + $0x98] sm:$0xff] %v443
          %1229 = vst [vmem:[%s1208 + $0xa0] sm:$0xff] %v444
          %1230 = vst [vmem:[%s1208 + $0xa8] sm:$0xff] %v445
          %1231 = vst [vmem:[%s1208 + $0xb0] sm:$0xff] %v446
          %1232 = vst [vmem:[%s1208 + $0xb8] sm:$0xff] %v447
          %1233 = vst [vmem:[%s1208 + $0xc0] sm:$0xff] %v448
          %1234 = vst [vmem:[%s1208 + $0xc8] sm:$0xff] %v449
          %1235 = vst [vmem:[%s1208 + $0xd0] sm:$0xff] %v450
          %1236 = vst [vmem:[%s1208 + $0xd8] sm:$0xff] %v451
          %1237 = vst [vmem:[%s1208 + $0xe0] sm:$0xff] %v452
          %1238 = vst [vmem:[%s1208 + $0xe8] sm:$0xff] %v453
          %1239 = vst [vmem:[%s1208 + $0xf0] sm:$0xff] %v454
          %1240 = vst [vmem:[%s1208 + $0xf8] sm:$0xff] %v455
          %s1241 = smul.u32 %s29, 32
          %s1242 = smul.addr %s1241, 4
          %s1243 = scalar_lea.vmem [#allocation7], %s1242
          %1244 = vst [vmem:[%s1243] sm:$0xf] %v1175
          %1245 = vst [vmem:[%s1243 + $0x4] sm:$0xf] %v1176
          %1246 = vst [vmem:[%s1243 + $0x8] sm:$0xf] %v1177
          %1247 = vst [vmem:[%s1243 + $0xc] sm:$0xf] %v1178
          %1248 = vst [vmem:[%s1243 + $0x10] sm:$0xf] %v1179
          %1249 = vst [vmem:[%s1243 + $0x14] sm:$0xf] %v1180
          %1250 = vst [vmem:[%s1243 + $0x18] sm:$0xf] %v1181
          %1251 = vst [vmem:[%s1243 + $0x1c] sm:$0xf] %v1182
          %1252 = vst [vmem:[%s1243 + $0x20] sm:$0xf] %v1183
          %1253 = vst [vmem:[%s1243 + $0x24] sm:$0xf] %v1184
          %1254 = vst [vmem:[%s1243 + $0x28] sm:$0xf] %v1185
          %1255 = vst [vmem:[%s1243 + $0x2c] sm:$0xf] %v1186
          %1256 = vst [vmem:[%s1243 + $0x30] sm:$0xf] %v1187
          %1257 = vst [vmem:[%s1243 + $0x34] sm:$0xf] %v1188
          %1258 = vst [vmem:[%s1243 + $0x38] sm:$0xf] %v1189
          %1259 = vst [vmem:[%s1243 + $0x3c] sm:$0xf] %v1190
          %1260 = vst [vmem:[%s1243 + $0x40] sm:$0xf] %v1191
          %1261 = vst [vmem:[%s1243 + $0x44] sm:$0xf] %v1192
          %1262 = vst [vmem:[%s1243 + $0x48] sm:$0xf] %v1193
          %1263 = vst [vmem:[%s1243 + $0x4c] sm:$0xf] %v1194
          %1264 = vst [vmem:[%s1243 + $0x50] sm:$0xf] %v1195
          %1265 = vst [vmem:[%s1243 + $0x54] sm:$0xf] %v1196
          %1266 = vst [vmem:[%s1243 + $0x58] sm:$0xf] %v1197
          %1267 = vst [vmem:[%s1243 + $0x5c] sm:$0xf] %v1198
          %1268 = vst [vmem:[%s1243 + $0x60] sm:$0xf] %v1199
          %1269 = vst [vmem:[%s1243 + $0x64] sm:$0xf] %v1200
          %1270 = vst [vmem:[%s1243 + $0x68] sm:$0xf] %v1201
          %1271 = vst [vmem:[%s1243 + $0x6c] sm:$0xf] %v1202
          %1272 = vst [vmem:[%s1243 + $0x70] sm:$0xf] %v1203
          %1273 = vst [vmem:[%s1243 + $0x74] sm:$0xf] %v1204
          %1274 = vst [vmem:[%s1243 + $0x78] sm:$0xf] %v1205
          %1275 = vst [vmem:[%s1243 + $0x7c] sm:$0xf] %v1206
          %v1276 = vld [vmem:[%s3] sm:$0xf]
          %v1277 = vld [vmem:[%s3 + $0x4] sm:$0xf]
          %v1278 = vld [vmem:[%s3 + $0x8] sm:$0xf]
          %v1279 = vld [vmem:[%s3 + $0xc] sm:$0xf]
          %v1280 = vld [vmem:[%s3 + $0x10] sm:$0xf]
          %v1281 = vld [vmem:[%s3 + $0x14] sm:$0xf]
          %v1282 = vld [vmem:[%s3 + $0x18] sm:$0xf]
          %v1283 = vld [vmem:[%s3 + $0x1c] sm:$0xf]
          %v1284 = vld [vmem:[%s3 + $0x20] sm:$0xf]
          %v1285 = vld [vmem:[%s3 + $0x24] sm:$0xf]
          %v1286 = vld [vmem:[%s3 + $0x28] sm:$0xf]
          %v1287 = vld [vmem:[%s3 + $0x2c] sm:$0xf]
          %v1288 = vld [vmem:[%s3 + $0x30] sm:$0xf]
          %v1289 = vld [vmem:[%s3 + $0x34] sm:$0xf]
          %v1290 = vld [vmem:[%s3 + $0x38] sm:$0xf]
          %v1291 = vld [vmem:[%s3 + $0x3c] sm:$0xf]
          %v1308 = vunpack.c.l.b16 %v1276
          %v1309 = vunpack.c.l.b16 %v1277
          %v1310 = vunpack.c.l.b16 %v1278
          %v1311 = vunpack.c.l.b16 %v1279
          %v1312 = vunpack.c.l.b16 %v1280
          %v1313 = vunpack.c.l.b16 %v1281
          %v1314 = vunpack.c.l.b16 %v1282
          %v1315 = vunpack.c.l.b16 %v1283
          %v1316 = vunpack.c.l.b16 %v1284
          %v1317 = vunpack.c.l.b16 %v1285
          %v1318 = vunpack.c.l.b16 %v1286
          %v1319 = vunpack.c.l.b16 %v1287
          %v1320 = vunpack.c.l.b16 %v1288
          %v1321 = vunpack.c.l.b16 %v1289
          %v1322 = vunpack.c.l.b16 %v1290
          %v1323 = vunpack.c.l.b16 %v1291
          %v1324 = vpack.c.b16 %v1309, %v1308
          %v1325 = vpack.c.b16 %v1311, %v1310
          %v1326 = vpack.c.b16 %v1313, %v1312
          %v1327 = vpack.c.b16 %v1315, %v1314
          %v1328 = vpack.c.b16 %v1317, %v1316
          %v1329 = vpack.c.b16 %v1319, %v1318
          %v1330 = vpack.c.b16 %v1321, %v1320
          %v1331 = vpack.c.b16 %v1323, %v1322
          %v1372 = vunpack.c.l.b16 %v1175
          %v1373 = vunpack.c.l.b16 %v1176
          %v1374 = vunpack.c.l.b16 %v1177
          %v1375 = vunpack.c.l.b16 %v1178
          %v1376 = vunpack.c.l.b16 %v1179
          %v1377 = vunpack.c.l.b16 %v1180
          %v1378 = vunpack.c.l.b16 %v1181
          %v1379 = vunpack.c.l.b16 %v1182
          %v1380 = vunpack.c.l.b16 %v1183
          %v1381 = vunpack.c.l.b16 %v1184
          %v1382 = vunpack.c.l.b16 %v1185
          %v1383 = vunpack.c.l.b16 %v1186
          %v1384 = vunpack.c.l.b16 %v1187
          %v1385 = vunpack.c.l.b16 %v1188
          %v1386 = vunpack.c.l.b16 %v1189
          %v1387 = vunpack.c.l.b16 %v1190
          %v1388 = vunpack.c.l.b16 %v1191
          %v1389 = vunpack.c.l.b16 %v1192
          %v1390 = vunpack.c.l.b16 %v1193
          %v1391 = vunpack.c.l.b16 %v1194
          %v1392 = vunpack.c.l.b16 %v1195
          %v1393 = vunpack.c.l.b16 %v1196
          %v1394 = vunpack.c.l.b16 %v1197
          %v1395 = vunpack.c.l.b16 %v1198
          %v1396 = vunpack.c.l.b16 %v1199
          %v1397 = vunpack.c.l.b16 %v1200
          %v1398 = vunpack.c.l.b16 %v1201
          %v1399 = vunpack.c.l.b16 %v1202
          %v1400 = vunpack.c.l.b16 %v1203
          %v1401 = vunpack.c.l.b16 %v1204
          %v1402 = vunpack.c.l.b16 %v1205
          %v1403 = vunpack.c.l.b16 %v1206
          %v1404 = vpack.c.b16 %v1373, %v1372
          %v1405 = vpack.c.b16 %v1375, %v1374
          %v1406 = vpack.c.b16 %v1377, %v1376
          %v1407 = vpack.c.b16 %v1379, %v1378
          %v1408 = vpack.c.b16 %v1381, %v1380
          %v1409 = vpack.c.b16 %v1383, %v1382
          %v1410 = vpack.c.b16 %v1385, %v1384
          %v1411 = vpack.c.b16 %v1387, %v1386
          %v1412 = vpack.c.b16 %v1389, %v1388
          %v1413 = vpack.c.b16 %v1391, %v1390
          %v1414 = vpack.c.b16 %v1393, %v1392
          %v1415 = vpack.c.b16 %v1395, %v1394
          %v1416 = vpack.c.b16 %v1397, %v1396
          %v1417 = vpack.c.b16 %v1399, %v1398
          %v1418 = vpack.c.b16 %v1401, %v1400
          %v1419 = vpack.c.b16 %v1403, %v1402
          %1436 = vmatpush.bf16.xpose.msra.mxu0 %v1411
          %1437 = vmatpush.bf16.xpose.msra.mxu0 %v1410
          %1438 = vmatpush.bf16.xpose.msra.mxu0 %v1409
          %1439 = vmatpush.bf16.xpose.msra.mxu0 %v1408
          %1440 = vmatpush.bf16.xpose.msra.mxu0 %v1407
          %1441 = vmatpush.bf16.xpose.msra.mxu0 %v1406
          %1442 = vmatpush.bf16.xpose.msra.mxu0 %v1405
          %1443 = vmatpush.bf16.xpose.msra.mxu0 %v1404
          %1444 = vmatmul.bf16.gmra.mxu0 %v1324
          %v1445 = vpop.f32.mrf.mxu0
          %v1446 = vadd.f32 0.0, %v1445
          %v1447 = vpop.f32.mrf.mxu0
          %v1448 = vadd.f32 0.0, %v1447
          %1449 = vmatmul.bf16.gmra.mxu0 %v1325
          %v1450 = vpop.f32.mrf.mxu0
          %v1451 = vadd.f32 0.0, %v1450
          %v1452 = vpop.f32.mrf.mxu0
          %v1453 = vadd.f32 0.0, %v1452
          %1454 = vmatmul.bf16.gmra.mxu0 %v1326
          %v1455 = vpop.f32.mrf.mxu0
          %v1456 = vadd.f32 0.0, %v1455
          %v1457 = vpop.f32.mrf.mxu0
          %v1458 = vadd.f32 0.0, %v1457
          %1459 = vmatmul.bf16.gmra.mxu0 %v1327
          %v1460 = vpop.f32.mrf.mxu0
          %v1461 = vadd.f32 0.0, %v1460
          %v1462 = vpop.f32.mrf.mxu0
          %v1463 = vadd.f32 0.0, %v1462
          %1464 = vmatmul.bf16.gmra.mxu0 %v1328
          %v1465 = vpop.f32.mrf.mxu0
          %v1466 = vadd.f32 0.0, %v1465
          %v1467 = vpop.f32.mrf.mxu0
          %v1468 = vadd.f32 0.0, %v1467
          %1469 = vmatmul.bf16.gmra.mxu0 %v1329
          %v1470 = vpop.f32.mrf.mxu0
          %v1471 = vadd.f32 0.0, %v1470
          %v1472 = vpop.f32.mrf.mxu0
          %v1473 = vadd.f32 0.0, %v1472
          %1474 = vmatmul.bf16.gmra.mxu0 %v1330
          %v1475 = vpop.f32.mrf.mxu0
          %v1476 = vadd.f32 0.0, %v1475
          %v1477 = vpop.f32.mrf.mxu0
          %v1478 = vadd.f32 0.0, %v1477
          %1479 = vmatmul.bf16.gmra.mxu0 %v1331
          %v1480 = vpop.f32.mrf.mxu0
          %v1481 = vadd.f32 0.0, %v1480
          %v1482 = vpop.f32.mrf.mxu0
          %v1483 = vadd.f32 0.0, %v1482
          %1484 = vdwg.mxu0
          %1485 = vmatpush.bf16.xpose.msra.mxu0 %v1419
          %1486 = vmatpush.bf16.xpose.msra.mxu0 %v1418
          %1487 = vmatpush.bf16.xpose.msra.mxu0 %v1417
          %1488 = vmatpush.bf16.xpose.msra.mxu0 %v1416
          %1489 = vmatpush.bf16.xpose.msra.mxu0 %v1415
          %1490 = vmatpush.bf16.xpose.msra.mxu0 %v1414
          %1491 = vmatpush.bf16.xpose.msra.mxu0 %v1413
          %1492 = vmatpush.bf16.xpose.msra.mxu0 %v1412
          %1493 = vmatmul.bf16.gmra.mxu0 %v1324
          %v1494 = vpop.f32.mrf.mxu0
          %v1495 = vadd.f32 0.0, %v1494
          %v1496 = vpop.f32.mrf.mxu0
          %v1497 = vadd.f32 0.0, %v1496
          %1498 = vmatmul.bf16.gmra.mxu0 %v1325
          %v1499 = vpop.f32.mrf.mxu0
          %v1500 = vadd.f32 0.0, %v1499
          %v1501 = vpop.f32.mrf.mxu0
          %v1502 = vadd.f32 0.0, %v1501
          %1503 = vmatmul.bf16.gmra.mxu0 %v1326
          %v1504 = vpop.f32.mrf.mxu0
          %v1505 = vadd.f32 0.0, %v1504
          %v1506 = vpop.f32.mrf.mxu0
          %v1507 = vadd.f32 0.0, %v1506
          %1508 = vmatmul.bf16.gmra.mxu0 %v1327
          %v1509 = vpop.f32.mrf.mxu0
          %v1510 = vadd.f32 0.0, %v1509
          %v1511 = vpop.f32.mrf.mxu0
          %v1512 = vadd.f32 0.0, %v1511
          %1513 = vmatmul.bf16.gmra.mxu0 %v1328
          %v1514 = vpop.f32.mrf.mxu0
          %v1515 = vadd.f32 0.0, %v1514
          %v1516 = vpop.f32.mrf.mxu0
          %v1517 = vadd.f32 0.0, %v1516
          %1518 = vmatmul.bf16.gmra.mxu0 %v1329
          %v1519 = vpop.f32.mrf.mxu0
          %v1520 = vadd.f32 0.0, %v1519
          %v1521 = vpop.f32.mrf.mxu0
          %v1522 = vadd.f32 0.0, %v1521
          %1523 = vmatmul.bf16.gmra.mxu0 %v1330
          %v1524 = vpop.f32.mrf.mxu0
          %v1525 = vadd.f32 0.0, %v1524
          %v1526 = vpop.f32.mrf.mxu0
          %v1527 = vadd.f32 0.0, %v1526
          %1528 = vmatmul.bf16.gmra.mxu0 %v1331
          %v1529 = vpop.f32.mrf.mxu0
          %v1530 = vadd.f32 0.0, %v1529
          %v1531 = vpop.f32.mrf.mxu0
          %v1532 = vadd.f32 0.0, %v1531
          %1533 = vdwg.mxu0
          %v1534 = vld [vmem:[#allocation2] sm:$0xff]
          %v1535 = vld [vmem:[#allocation2 + $0x8] sm:$0xff]
          %v1536 = vld [vmem:[#allocation2 + $0x10] sm:$0xff]
          %v1537 = vld [vmem:[#allocation2 + $0x18] sm:$0xff]
          %v1538 = vld [vmem:[#allocation2 + $0x20] sm:$0xff]
          %v1539 = vld [vmem:[#allocation2 + $0x28] sm:$0xff]
          %v1540 = vld [vmem:[#allocation2 + $0x30] sm:$0xff]
          %v1541 = vld [vmem:[#allocation2 + $0x38] sm:$0xff]
          %v1542 = vld [vmem:[#allocation2 + $0x40] sm:$0xff]
          %v1543 = vld [vmem:[#allocation2 + $0x48] sm:$0xff]
          %v1544 = vld [vmem:[#allocation2 + $0x50] sm:$0xff]
          %v1545 = vld [vmem:[#allocation2 + $0x58] sm:$0xff]
          %v1546 = vld [vmem:[#allocation2 + $0x60] sm:$0xff]
          %v1547 = vld [vmem:[#allocation2 + $0x68] sm:$0xff]
          %v1548 = vld [vmem:[#allocation2 + $0x70] sm:$0xff]
          %v1549 = vld [vmem:[#allocation2 + $0x78] sm:$0xff]
          %v1550 = vmax.f32 %v1446, %v1495
          %1551 = vmax.xlane.f32.xlu0 %v1550
          %v1552 = vpop.xlane.xlu0 %1551
          %v1553 = vmax.f32 %v1448, %v1497
          %1554 = vmax.xlane.f32.xlu0 %v1553
          %v1555 = vpop.xlane.xlu0 %1554
          %v1556 = vmax.f32 %v1451, %v1500
          %1557 = vmax.xlane.f32.xlu0 %v1556
          %v1558 = vpop.xlane.xlu0 %1557
          %v1559 = vmax.f32 %v1453, %v1502
          %1560 = vmax.xlane.f32.xlu0 %v1559
          %v1561 = vpop.xlane.xlu0 %1560
          %v1562 = vmax.f32 %v1456, %v1505
          %1563 = vmax.xlane.f32.xlu0 %v1562
          %v1564 = vpop.xlane.xlu0 %1563
          %v1565 = vmax.f32 %v1458, %v1507
          %1566 = vmax.xlane.f32.xlu0 %v1565
          %v1567 = vpop.xlane.xlu0 %1566
          %v1568 = vmax.f32 %v1461, %v1510
          %1569 = vmax.xlane.f32.xlu0 %v1568
          %v1570 = vpop.xlane.xlu0 %1569
          %v1571 = vmax.f32 %v1463, %v1512
          %1572 = vmax.xlane.f32.xlu0 %v1571
          %v1573 = vpop.xlane.xlu0 %1572
          %v1574 = vmax.f32 %v1466, %v1515
          %1575 = vmax.xlane.f32.xlu0 %v1574
          %v1576 = vpop.xlane.xlu0 %1575
          %v1577 = vmax.f32 %v1468, %v1517
          %1578 = vmax.xlane.f32.xlu0 %v1577
          %v1579 = vpop.xlane.xlu0 %1578
          %v1580 = vmax.f32 %v1471, %v1520
          %1581 = vmax.xlane.f32.xlu0 %v1580
          %v1582 = vpop.xlane.xlu0 %1581
          %v1583 = vmax.f32 %v1473, %v1522
          %1584 = vmax.xlane.f32.xlu0 %v1583
          %v1585 = vpop.xlane.xlu0 %1584
          %v1586 = vmax.f32 %v1476, %v1525
          %1587 = vmax.xlane.f32.xlu0 %v1586
          %v1588 = vpop.xlane.xlu0 %1587
          %v1589 = vmax.f32 %v1478, %v1527
          %1590 = vmax.xlane.f32.xlu0 %v1589
          %v1591 = vpop.xlane.xlu0 %1590
          %v1592 = vmax.f32 %v1481, %v1530
          %1593 = vmax.xlane.f32.xlu0 %v1592
          %v1594 = vpop.xlane.xlu0 %1593
          %v1595 = vmax.f32 %v1483, %v1532
          %1596 = vmax.xlane.f32.xlu0 %v1595
          %v1597 = vpop.xlane.xlu0 %1596
          %v1598 = vmax.f32 %v1534, %v1552
          %v1599 = vmax.f32 %v1535, %v1555
          %v1600 = vmax.f32 %v1536, %v1558
          %v1601 = vmax.f32 %v1537, %v1561
          %v1602 = vmax.f32 %v1538, %v1564
          %v1603 = vmax.f32 %v1539, %v1567
          %v1604 = vmax.f32 %v1540, %v1570
          %v1605 = vmax.f32 %v1541, %v1573
          %v1606 = vmax.f32 %v1542, %v1576
          %v1607 = vmax.f32 %v1543, %v1579
          %v1608 = vmax.f32 %v1544, %v1582
          %v1609 = vmax.f32 %v1545, %v1585
          %v1610 = vmax.f32 %v1546, %v1588
          %v1611 = vmax.f32 %v1547, %v1591
          %v1612 = vmax.f32 %v1548, %v1594
          %v1613 = vmax.f32 %v1549, %v1597
          %v1614 = vsub.f32 %v1534, %v1598
          %v1615 = vsub.f32 %v1535, %v1599
          %v1616 = vsub.f32 %v1536, %v1600
          %v1617 = vsub.f32 %v1537, %v1601
          %v1618 = vsub.f32 %v1538, %v1602
          %v1619 = vsub.f32 %v1539, %v1603
          %v1620 = vsub.f32 %v1540, %v1604
          %v1621 = vsub.f32 %v1541, %v1605
          %v1622 = vsub.f32 %v1542, %v1606
          %v1623 = vsub.f32 %v1543, %v1607
          %v1624 = vsub.f32 %v1544, %v1608
          %v1625 = vsub.f32 %v1545, %v1609
          %v1626 = vsub.f32 %v1546, %v1610
          %v1627 = vsub.f32 %v1547, %v1611
          %v1628 = vsub.f32 %v1548, %v1612
          %v1629 = vsub.f32 %v1549, %v1613
          %v1630 = vmul.f32 %v1614, 1.442695
          %v1631 = vpow.pop %v1630
          %v1632 = vmul.f32 %v1615, 1.442695
          %v1633 = vpow.pop %v1632
          %v1634 = vmul.f32 %v1616, 1.442695
          %v1635 = vpow.pop %v1634
          %v1636 = vmul.f32 %v1617, 1.442695
          %v1637 = vpow.pop %v1636
          %v1638 = vmul.f32 %v1618, 1.442695
          %v1639 = vpow.pop %v1638
          %v1640 = vmul.f32 %v1619, 1.442695
          %v1641 = vpow.pop %v1640
          %v1642 = vmul.f32 %v1620, 1.442695
          %v1643 = vpow.pop %v1642
          %v1644 = vmul.f32 %v1621, 1.442695
          %v1645 = vpow.pop %v1644
          %v1646 = vmul.f32 %v1622, 1.442695
          %v1647 = vpow.pop %v1646
          %v1648 = vmul.f32 %v1623, 1.442695
          %v1649 = vpow.pop %v1648
          %v1650 = vmul.f32 %v1624, 1.442695
          %v1651 = vpow.pop %v1650
          %v1652 = vmul.f32 %v1625, 1.442695
          %v1653 = vpow.pop %v1652
          %v1654 = vmul.f32 %v1626, 1.442695
          %v1655 = vpow.pop %v1654
          %v1656 = vmul.f32 %v1627, 1.442695
          %v1657 = vpow.pop %v1656
          %v1658 = vmul.f32 %v1628, 1.442695
          %v1659 = vpow.pop %v1658
          %v1660 = vmul.f32 %v1629, 1.442695
          %v1661 = vpow.pop %v1660
          %1663 = vset.pattern.permute.xlu0 0
          %1664 = vperm.xlu0 %1663, %v1598
          %v1665 = vpop.permute.xlu0 %1664
          %1668 = vset.pattern.permute.xlu0 0
          %1669 = vperm.xlu0 %1668, %v1599
          %v1670 = vpop.permute.xlu0 %1669
          %1673 = vset.pattern.permute.xlu0 0
          %1674 = vperm.xlu0 %1673, %v1600
          %v1675 = vpop.permute.xlu0 %1674
          %1678 = vset.pattern.permute.xlu0 0
          %1679 = vperm.xlu0 %1678, %v1601
          %v1680 = vpop.permute.xlu0 %1679
          %1683 = vset.pattern.permute.xlu0 0
          %1684 = vperm.xlu0 %1683, %v1602
          %v1685 = vpop.permute.xlu0 %1684
          %1688 = vset.pattern.permute.xlu0 0
          %1689 = vperm.xlu0 %1688, %v1603
          %v1690 = vpop.permute.xlu0 %1689
          %1693 = vset.pattern.permute.xlu0 0
          %1694 = vperm.xlu0 %1693, %v1604
          %v1695 = vpop.permute.xlu0 %1694
          %1698 = vset.pattern.permute.xlu0 0
          %1699 = vperm.xlu0 %1698, %v1605
          %v1700 = vpop.permute.xlu0 %1699
          %1703 = vset.pattern.permute.xlu0 0
          %1704 = vperm.xlu0 %1703, %v1606
          %v1705 = vpop.permute.xlu0 %1704
          %1708 = vset.pattern.permute.xlu0 0
          %1709 = vperm.xlu0 %1708, %v1607
          %v1710 = vpop.permute.xlu0 %1709
          %1713 = vset.pattern.permute.xlu0 0
          %1714 = vperm.xlu0 %1713, %v1608
          %v1715 = vpop.permute.xlu0 %1714
          %1718 = vset.pattern.permute.xlu0 0
          %1719 = vperm.xlu0 %1718, %v1609
          %v1720 = vpop.permute.xlu0 %1719
          %1723 = vset.pattern.permute.xlu0 0
          %1724 = vperm.xlu0 %1723, %v1610
          %v1725 = vpop.permute.xlu0 %1724
          %1728 = vset.pattern.permute.xlu0 0
          %1729 = vperm.xlu0 %1728, %v1611
          %v1730 = vpop.permute.xlu0 %1729
          %1733 = vset.pattern.permute.xlu0 0
          %1734 = vperm.xlu0 %1733, %v1612
          %v1735 = vpop.permute.xlu0 %1734
          %1738 = vset.pattern.permute.xlu0 0
          %1739 = vperm.xlu0 %1738, %v1613
          %v1740 = vpop.permute.xlu0 %1739
          %v1742 = vsub.f32 %v1446, %v1665
          %v1743 = vsub.f32 %v1495, %v1665
          %v1744 = vsub.f32 %v1448, %v1670
          %v1745 = vsub.f32 %v1497, %v1670
          %v1746 = vsub.f32 %v1451, %v1675
          %v1747 = vsub.f32 %v1500, %v1675
          %v1748 = vsub.f32 %v1453, %v1680
          %v1749 = vsub.f32 %v1502, %v1680
          %v1750 = vsub.f32 %v1456, %v1685
          %v1751 = vsub.f32 %v1505, %v1685
          %v1752 = vsub.f32 %v1458, %v1690
          %v1753 = vsub.f32 %v1507, %v1690
          %v1754 = vsub.f32 %v1461, %v1695
          %v1755 = vsub.f32 %v1510, %v1695
          %v1756 = vsub.f32 %v1463, %v1700
          %v1757 = vsub.f32 %v1512, %v1700
          %v1758 = vsub.f32 %v1466, %v1705
          %v1759 = vsub.f32 %v1515, %v1705
          %v1760 = vsub.f32 %v1468, %v1710
          %v1761 = vsub.f32 %v1517, %v1710
          %v1762 = vsub.f32 %v1471, %v1715
          %v1763 = vsub.f32 %v1520, %v1715
          %v1764 = vsub.f32 %v1473, %v1720
          %v1765 = vsub.f32 %v1522, %v1720
          %v1766 = vsub.f32 %v1476, %v1725
          %v1767 = vsub.f32 %v1525, %v1725
          %v1768 = vsub.f32 %v1478, %v1730
          %v1769 = vsub.f32 %v1527, %v1730
          %v1770 = vsub.f32 %v1481, %v1735
          %v1771 = vsub.f32 %v1530, %v1735
          %v1772 = vsub.f32 %v1483, %v1740
          %v1773 = vsub.f32 %v1532, %v1740
          %v1774 = vmul.f32 %v1742, 1.442695
          %v1775 = vpow.pop %v1774
          %v1776 = vmul.f32 %v1743, 1.442695
          %v1777 = vpow.pop %v1776
          %v1778 = vmul.f32 %v1744, 1.442695
          %v1779 = vpow.pop %v1778
          %v1780 = vmul.f32 %v1745, 1.442695
          %v1781 = vpow.pop %v1780
          %v1782 = vmul.f32 %v1746, 1.442695
          %v1783 = vpow.pop %v1782
          %v1784 = vmul.f32 %v1747, 1.442695
          %v1785 = vpow.pop %v1784
          %v1786 = vmul.f32 %v1748, 1.442695
          %v1787 = vpow.pop %v1786
          %v1788 = vmul.f32 %v1749, 1.442695
          %v1789 = vpow.pop %v1788
          %v1790 = vmul.f32 %v1750, 1.442695
          %v1791 = vpow.pop %v1790
          %v1792 = vmul.f32 %v1751, 1.442695
          %v1793 = vpow.pop %v1792
          %v1794 = vmul.f32 %v1752, 1.442695
          %v1795 = vpow.pop %v1794
          %v1796 = vmul.f32 %v1753, 1.442695
          %v1797 = vpow.pop %v1796
          %v1798 = vmul.f32 %v1754, 1.442695
          %v1799 = vpow.pop %v1798
          %v1800 = vmul.f32 %v1755, 1.442695
          %v1801 = vpow.pop %v1800
          %v1802 = vmul.f32 %v1756, 1.442695
          %v1803 = vpow.pop %v1802
          %v1804 = vmul.f32 %v1757, 1.442695
          %v1805 = vpow.pop %v1804
          %v1806 = vmul.f32 %v1758, 1.442695
          %v1807 = vpow.pop %v1806
          %v1808 = vmul.f32 %v1759, 1.442695
          %v1809 = vpow.pop %v1808
          %v1810 = vmul.f32 %v1760, 1.442695
          %v1811 = vpow.pop %v1810
          %v1812 = vmul.f32 %v1761, 1.442695
          %v1813 = vpow.pop %v1812
          %v1814 = vmul.f32 %v1762, 1.442695
          %v1815 = vpow.pop %v1814
          %v1816 = vmul.f32 %v1763, 1.442695
          %v1817 = vpow.pop %v1816
          %v1818 = vmul.f32 %v1764, 1.442695
          %v1819 = vpow.pop %v1818
          %v1820 = vmul.f32 %v1765, 1.442695
          %v1821 = vpow.pop %v1820
          %v1822 = vmul.f32 %v1766, 1.442695
          %v1823 = vpow.pop %v1822
          %v1824 = vmul.f32 %v1767, 1.442695
          %v1825 = vpow.pop %v1824
          %v1826 = vmul.f32 %v1768, 1.442695
          %v1827 = vpow.pop %v1826
          %v1828 = vmul.f32 %v1769, 1.442695
          %v1829 = vpow.pop %v1828
          %v1830 = vmul.f32 %v1770, 1.442695
          %v1831 = vpow.pop %v1830
          %v1832 = vmul.f32 %v1771, 1.442695
          %v1833 = vpow.pop %v1832
          %v1834 = vmul.f32 %v1772, 1.442695
          %v1835 = vpow.pop %v1834
          %v1836 = vmul.f32 %v1773, 1.442695
          %v1837 = vpow.pop %v1836
          %v1838 = vld [vmem:[#allocation3] sm:$0xff]
          %v1839 = vld [vmem:[#allocation3 + $0x8] sm:$0xff]
          %v1840 = vld [vmem:[#allocation3 + $0x10] sm:$0xff]
          %v1841 = vld [vmem:[#allocation3 + $0x18] sm:$0xff]
          %v1842 = vld [vmem:[#allocation3 + $0x20] sm:$0xff]
          %v1843 = vld [vmem:[#allocation3 + $0x28] sm:$0xff]
          %v1844 = vld [vmem:[#allocation3 + $0x30] sm:$0xff]
          %v1845 = vld [vmem:[#allocation3 + $0x38] sm:$0xff]
          %v1846 = vld [vmem:[#allocation3 + $0x40] sm:$0xff]
          %v1847 = vld [vmem:[#allocation3 + $0x48] sm:$0xff]
          %v1848 = vld [vmem:[#allocation3 + $0x50] sm:$0xff]
          %v1849 = vld [vmem:[#allocation3 + $0x58] sm:$0xff]
          %v1850 = vld [vmem:[#allocation3 + $0x60] sm:$0xff]
          %v1851 = vld [vmem:[#allocation3 + $0x68] sm:$0xff]
          %v1852 = vld [vmem:[#allocation3 + $0x70] sm:$0xff]
          %v1853 = vld [vmem:[#allocation3 + $0x78] sm:$0xff]
          %v1854 = vmul.f32 %v1631, %v1838
          %v1855 = vmul.f32 %v1633, %v1839
          %v1856 = vmul.f32 %v1635, %v1840
          %v1857 = vmul.f32 %v1637, %v1841
          %v1858 = vmul.f32 %v1639, %v1842
          %v1859 = vmul.f32 %v1641, %v1843
          %v1860 = vmul.f32 %v1643, %v1844
          %v1861 = vmul.f32 %v1645, %v1845
          %v1862 = vmul.f32 %v1647, %v1846
          %v1863 = vmul.f32 %v1649, %v1847
          %v1864 = vmul.f32 %v1651, %v1848
          %v1865 = vmul.f32 %v1653, %v1849
          %v1866 = vmul.f32 %v1655, %v1850
          %v1867 = vmul.f32 %v1657, %v1851
          %v1868 = vmul.f32 %v1659, %v1852
          %v1869 = vmul.f32 %v1661, %v1853
          %v1870 = vadd.f32 %v1775, %v1777
          %1871 = vadd.xlane.f32.xlu0 %v1870
          %v1872 = vpop.xlane.xlu0 %1871
          %v1873 = vadd.f32 %v1779, %v1781
          %1874 = vadd.xlane.f32.xlu0 %v1873
          %v1875 = vpop.xlane.xlu0 %1874
          %v1876 = vadd.f32 %v1783, %v1785
          %1877 = vadd.xlane.f32.xlu0 %v1876
          %v1878 = vpop.xlane.xlu0 %1877
          %v1879 = vadd.f32 %v1787, %v1789
          %1880 = vadd.xlane.f32.xlu0 %v1879
          %v1881 = vpop.xlane.xlu0 %1880
          %v1882 = vadd.f32 %v1791, %v1793
          %1883 = vadd.xlane.f32.xlu0 %v1882
          %v1884 = vpop.xlane.xlu0 %1883
          %v1885 = vadd.f32 %v1795, %v1797
          %1886 = vadd.xlane.f32.xlu0 %v1885
          %v1887 = vpop.xlane.xlu0 %1886
          %v1888 = vadd.f32 %v1799, %v1801
          %1889 = vadd.xlane.f32.xlu0 %v1888
          %v1890 = vpop.xlane.xlu0 %1889
          %v1891 = vadd.f32 %v1803, %v1805
          %1892 = vadd.xlane.f32.xlu0 %v1891
          %v1893 = vpop.xlane.xlu0 %1892
          %v1894 = vadd.f32 %v1807, %v1809
          %1895 = vadd.xlane.f32.xlu0 %v1894
          %v1896 = vpop.xlane.xlu0 %1895
          %v1897 = vadd.f32 %v1811, %v1813
          %1898 = vadd.xlane.f32.xlu0 %v1897
          %v1899 = vpop.xlane.xlu0 %1898
          %v1900 = vadd.f32 %v1815, %v1817
          %1901 = vadd.xlane.f32.xlu0 %v1900
          %v1902 = vpop.xlane.xlu0 %1901
          %v1903 = vadd.f32 %v1819, %v1821
          %1904 = vadd.xlane.f32.xlu0 %v1903
          %v1905 = vpop.xlane.xlu0 %1904
          %v1906 = vadd.f32 %v1823, %v1825
          %1907 = vadd.xlane.f32.xlu0 %v1906
          %v1908 = vpop.xlane.xlu0 %1907
          %v1909 = vadd.f32 %v1827, %v1829
          %1910 = vadd.xlane.f32.xlu0 %v1909
          %v1911 = vpop.xlane.xlu0 %1910
          %v1912 = vadd.f32 %v1831, %v1833
          %1913 = vadd.xlane.f32.xlu0 %v1912
          %v1914 = vpop.xlane.xlu0 %1913
          %v1915 = vadd.f32 %v1835, %v1837
          %1916 = vadd.xlane.f32.xlu0 %v1915
          %v1917 = vpop.xlane.xlu0 %1916
          %v1918 = vadd.f32 %v1854, %v1872
          %v1919 = vadd.f32 %v1855, %v1875
          %v1920 = vadd.f32 %v1856, %v1878
          %v1921 = vadd.f32 %v1857, %v1881
          %v1922 = vadd.f32 %v1858, %v1884
          %v1923 = vadd.f32 %v1859, %v1887
          %v1924 = vadd.f32 %v1860, %v1890
          %v1925 = vadd.f32 %v1861, %v1893
          %v1926 = vadd.f32 %v1862, %v1896
          %v1927 = vadd.f32 %v1863, %v1899
          %v1928 = vadd.f32 %v1864, %v1902
          %v1929 = vadd.f32 %v1865, %v1905
          %v1930 = vadd.f32 %v1866, %v1908
          %v1931 = vadd.f32 %v1867, %v1911
          %v1932 = vadd.f32 %v1868, %v1914
          %v1933 = vadd.f32 %v1869, %v1917
          %vm1934 = vcmask 7168
          %1935 = vst.msk [vmem:[#allocation3] sm:$0xff] %vm1934, %v1918
          %1936 = vst.msk [vmem:[#allocation3 + $0x8] sm:$0xff] %vm1934, %v1919
          %1937 = vst.msk [vmem:[#allocation3 + $0x10] sm:$0xff] %vm1934, %v1920
          %1938 = vst.msk [vmem:[#allocation3 + $0x18] sm:$0xff] %vm1934, %v1921
          %1939 = vst.msk [vmem:[#allocation3 + $0x20] sm:$0xff] %vm1934, %v1922
          %1940 = vst.msk [vmem:[#allocation3 + $0x28] sm:$0xff] %vm1934, %v1923
          %1941 = vst.msk [vmem:[#allocation3 + $0x30] sm:$0xff] %vm1934, %v1924
          %1942 = vst.msk [vmem:[#allocation3 + $0x38] sm:$0xff] %vm1934, %v1925
          %1943 = vst.msk [vmem:[#allocation3 + $0x40] sm:$0xff] %vm1934, %v1926
          %1944 = vst.msk [vmem:[#allocation3 + $0x48] sm:$0xff] %vm1934, %v1927
          %1945 = vst.msk [vmem:[#allocation3 + $0x50] sm:$0xff] %vm1934, %v1928
          %1946 = vst.msk [vmem:[#allocation3 + $0x58] sm:$0xff] %vm1934, %v1929
          %1947 = vst.msk [vmem:[#allocation3 + $0x60] sm:$0xff] %vm1934, %v1930
          %1948 = vst.msk [vmem:[#allocation3 + $0x68] sm:$0xff] %vm1934, %v1931
          %1949 = vst.msk [vmem:[#allocation3 + $0x70] sm:$0xff] %vm1934, %v1932
          %1950 = vst.msk [vmem:[#allocation3 + $0x78] sm:$0xff] %vm1934, %v1933
          %v1951 = vld [vmem:[#allocation4] sm:$0xff]
          %v1952 = vld [vmem:[#allocation4 + $0x8] sm:$0xff]
          %v1953 = vld [vmem:[#allocation4 + $0x10] sm:$0xff]
          %v1954 = vld [vmem:[#allocation4 + $0x18] sm:$0xff]
          %v1955 = vld [vmem:[#allocation4 + $0x20] sm:$0xff]
          %v1956 = vld [vmem:[#allocation4 + $0x28] sm:$0xff]
          %v1957 = vld [vmem:[#allocation4 + $0x30] sm:$0xff]
          %v1958 = vld [vmem:[#allocation4 + $0x38] sm:$0xff]
          %v1959 = vld [vmem:[#allocation4 + $0x40] sm:$0xff]
          %v1960 = vld [vmem:[#allocation4 + $0x48] sm:$0xff]
          %v1961 = vld [vmem:[#allocation4 + $0x50] sm:$0xff]
          %v1962 = vld [vmem:[#allocation4 + $0x58] sm:$0xff]
          %v1963 = vld [vmem:[#allocation4 + $0x60] sm:$0xff]
          %v1964 = vld [vmem:[#allocation4 + $0x68] sm:$0xff]
          %v1965 = vld [vmem:[#allocation4 + $0x70] sm:$0xff]
          %v1966 = vld [vmem:[#allocation4 + $0x78] sm:$0xff]
          %1968 = vset.pattern.permute.xlu0 0
          %1969 = vperm.xlu0 %1968, %v1631
          %v1970 = vpop.permute.xlu0 %1969
          %1973 = vset.pattern.permute.xlu0 0
          %1974 = vperm.xlu0 %1973, %v1633
          %v1975 = vpop.permute.xlu0 %1974
          %1978 = vset.pattern.permute.xlu0 0
          %1979 = vperm.xlu0 %1978, %v1635
          %v1980 = vpop.permute.xlu0 %1979
          %1983 = vset.pattern.permute.xlu0 0
          %1984 = vperm.xlu0 %1983, %v1637
          %v1985 = vpop.permute.xlu0 %1984
          %1988 = vset.pattern.permute.xlu0 0
          %1989 = vperm.xlu0 %1988, %v1639
          %v1990 = vpop.permute.xlu0 %1989
          %1993 = vset.pattern.permute.xlu0 0
          %1994 = vperm.xlu0 %1993, %v1641
          %v1995 = vpop.permute.xlu0 %1994
          %1998 = vset.pattern.permute.xlu0 0
          %1999 = vperm.xlu0 %1998, %v1643
          %v2000 = vpop.permute.xlu0 %1999
          %2003 = vset.pattern.permute.xlu0 0
          %2004 = vperm.xlu0 %2003, %v1645
          %v2005 = vpop.permute.xlu0 %2004
          %2008 = vset.pattern.permute.xlu0 0
          %2009 = vperm.xlu0 %2008, %v1647
          %v2010 = vpop.permute.xlu0 %2009
          %2013 = vset.pattern.permute.xlu0 0
          %2014 = vperm.xlu0 %2013, %v1649
          %v2015 = vpop.permute.xlu0 %2014
          %2018 = vset.pattern.permute.xlu0 0
          %2019 = vperm.xlu0 %2018, %v1651
          %v2020 = vpop.permute.xlu0 %2019
          %2023 = vset.pattern.permute.xlu0 0
          %2024 = vperm.xlu0 %2023, %v1653
          %v2025 = vpop.permute.xlu0 %2024
          %2028 = vset.pattern.permute.xlu0 0
          %2029 = vperm.xlu0 %2028, %v1655
          %v2030 = vpop.permute.xlu0 %2029
          %2033 = vset.pattern.permute.xlu0 0
          %2034 = vperm.xlu0 %2033, %v1657
          %v2035 = vpop.permute.xlu0 %2034
          %2038 = vset.pattern.permute.xlu0 0
          %2039 = vperm.xlu0 %2038, %v1659
          %v2040 = vpop.permute.xlu0 %2039
          %2043 = vset.pattern.permute.xlu0 0
          %2044 = vperm.xlu0 %2043, %v1661
          %v2045 = vpop.permute.xlu0 %2044
          %v2047 = vmul.f32 %v1970, %v1951
          %v2048 = vmul.f32 %v1975, %v1952
          %v2049 = vmul.f32 %v1980, %v1953
          %v2050 = vmul.f32 %v1985, %v1954
          %v2051 = vmul.f32 %v1990, %v1955
          %v2052 = vmul.f32 %v1995, %v1956
          %v2053 = vmul.f32 %v2000, %v1957
          %v2054 = vmul.f32 %v2005, %v1958
          %v2055 = vmul.f32 %v2010, %v1959
          %v2056 = vmul.f32 %v2015, %v1960
          %v2057 = vmul.f32 %v2020, %v1961
          %v2058 = vmul.f32 %v2025, %v1962
          %v2059 = vmul.f32 %v2030, %v1963
          %v2060 = vmul.f32 %v2035, %v1964
          %v2061 = vmul.f32 %v2040, %v1965
          %v2062 = vmul.f32 %v2045, %v1966
          %v2063 = vpack.c.bf16 %v1779, %v1775
          %v2064 = vpack.c.bf16 %v1781, %v1777
          %v2065 = vpack.c.bf16 %v1787, %v1783
          %v2066 = vpack.c.bf16 %v1789, %v1785
          %v2067 = vpack.c.bf16 %v1795, %v1791
          %v2068 = vpack.c.bf16 %v1797, %v1793
          %v2069 = vpack.c.bf16 %v1803, %v1799
          %v2070 = vpack.c.bf16 %v1805, %v1801
          %v2071 = vpack.c.bf16 %v1811, %v1807
          %v2072 = vpack.c.bf16 %v1813, %v1809
          %v2073 = vpack.c.bf16 %v1819, %v1815
          %v2074 = vpack.c.bf16 %v1821, %v1817
          %v2075 = vpack.c.bf16 %v1827, %v1823
          %v2076 = vpack.c.bf16 %v1829, %v1825
          %v2077 = vpack.c.bf16 %v1835, %v1831
          %v2078 = vpack.c.bf16 %v1837, %v1833
          %2079 = vmatpush.bf16.msra.mxu0 %v1411
          %2080 = vmatpush.bf16.msra.mxu0 %v1410
          %2081 = vmatpush.bf16.msra.mxu0 %v1409
          %2082 = vmatpush.bf16.msra.mxu0 %v1408
          %2083 = vmatpush.bf16.msra.mxu0 %v1407
          %2084 = vmatpush.bf16.msra.mxu0 %v1406
          %2085 = vmatpush.bf16.msra.mxu0 %v1405
          %2086 = vmatpush.bf16.msra.mxu0 %v1404
          %2087 = vmatmul.bf16.gmra.mxu0 %v2063
          %v2088 = vpop.f32.mrf.mxu0
          %v2089 = vadd.f32 0.0, %v2088
          %v2090 = vpop.f32.mrf.mxu0
          %v2091 = vadd.f32 0.0, %v2090
          %2092 = vmatmul.bf16.gmra.mxu0 %v2065
          %v2093 = vpop.f32.mrf.mxu0
          %v2094 = vadd.f32 0.0, %v2093
          %v2095 = vpop.f32.mrf.mxu0
          %v2096 = vadd.f32 0.0, %v2095
          %2097 = vmatmul.bf16.gmra.mxu0 %v2067
          %v2098 = vpop.f32.mrf.mxu0
          %v2099 = vadd.f32 0.0, %v2098
          %v2100 = vpop.f32.mrf.mxu0
          %v2101 = vadd.f32 0.0, %v2100
          %2102 = vmatmul.bf16.gmra.mxu0 %v2069
          %v2103 = vpop.f32.mrf.mxu0
          %v2104 = vadd.f32 0.0, %v2103
          %v2105 = vpop.f32.mrf.mxu0
          %v2106 = vadd.f32 0.0, %v2105
          %2107 = vmatmul.bf16.gmra.mxu0 %v2071
          %v2108 = vpop.f32.mrf.mxu0
          %v2109 = vadd.f32 0.0, %v2108
          %v2110 = vpop.f32.mrf.mxu0
          %v2111 = vadd.f32 0.0, %v2110
          %2112 = vmatmul.bf16.gmra.mxu0 %v2073
          %v2113 = vpop.f32.mrf.mxu0
          %v2114 = vadd.f32 0.0, %v2113
          %v2115 = vpop.f32.mrf.mxu0
          %v2116 = vadd.f32 0.0, %v2115
          %2117 = vmatmul.bf16.gmra.mxu0 %v2075
          %v2118 = vpop.f32.mrf.mxu0
          %v2119 = vadd.f32 0.0, %v2118
          %v2120 = vpop.f32.mrf.mxu0
          %v2121 = vadd.f32 0.0, %v2120
          %2122 = vmatmul.bf16.gmra.mxu0 %v2077
          %v2123 = vpop.f32.mrf.mxu0
          %v2124 = vadd.f32 0.0, %v2123
          %v2125 = vpop.f32.mrf.mxu0
          %v2126 = vadd.f32 0.0, %v2125
          %2127 = vdwg.mxu0
          %2128 = vmatpush.bf16.msra.mxu0 %v1419
          %2129 = vmatpush.bf16.msra.mxu0 %v1418
          %2130 = vmatpush.bf16.msra.mxu0 %v1417
          %2131 = vmatpush.bf16.msra.mxu0 %v1416
          %2132 = vmatpush.bf16.msra.mxu0 %v1415
          %2133 = vmatpush.bf16.msra.mxu0 %v1414
          %2134 = vmatpush.bf16.msra.mxu0 %v1413
          %2135 = vmatpush.bf16.msra.mxu0 %v1412
          %2136 = vmatmul.bf16.gmra.mxu0 %v2064
          %v2137 = vpop.f32.mrf.mxu0
          %v2138 = vadd.f32 %v2089, %v2137
          %v2139 = vpop.f32.mrf.mxu0
          %v2140 = vadd.f32 %v2091, %v2139
          %2141 = vmatmul.bf16.gmra.mxu0 %v2066
          %v2142 = vpop.f32.mrf.mxu0
          %v2143 = vadd.f32 %v2094, %v2142
          %v2144 = vpop.f32.mrf.mxu0
          %v2145 = vadd.f32 %v2096, %v2144
          %2146 = vmatmul.bf16.gmra.mxu0 %v2068
          %v2147 = vpop.f32.mrf.mxu0
          %v2148 = vadd.f32 %v2099, %v2147
          %v2149 = vpop.f32.mrf.mxu0
          %v2150 = vadd.f32 %v2101, %v2149
          %2151 = vmatmul.bf16.gmra.mxu0 %v2070
          %v2152 = vpop.f32.mrf.mxu0
          %v2153 = vadd.f32 %v2104, %v2152
          %v2154 = vpop.f32.mrf.mxu0
          %v2155 = vadd.f32 %v2106, %v2154
          %2156 = vmatmul.bf16.gmra.mxu0 %v2072
          %v2157 = vpop.f32.mrf.mxu0
          %v2158 = vadd.f32 %v2109, %v2157
          %v2159 = vpop.f32.mrf.mxu0
          %v2160 = vadd.f32 %v2111, %v2159
          %2161 = vmatmul.bf16.gmra.mxu0 %v2074
          %v2162 = vpop.f32.mrf.mxu0
          %v2163 = vadd.f32 %v2114, %v2162
          %v2164 = vpop.f32.mrf.mxu0
          %v2165 = vadd.f32 %v2116, %v2164
          %2166 = vmatmul.bf16.gmra.mxu0 %v2076
          %v2167 = vpop.f32.mrf.mxu0
          %v2168 = vadd.f32 %v2119, %v2167
          %v2169 = vpop.f32.mrf.mxu0
          %v2170 = vadd.f32 %v2121, %v2169
          %2171 = vmatmul.bf16.gmra.mxu0 %v2078
          %v2172 = vpop.f32.mrf.mxu0
          %v2173 = vadd.f32 %v2124, %v2172
          %v2174 = vpop.f32.mrf.mxu0
          %v2175 = vadd.f32 %v2126, %v2174
          %2176 = vdwg.mxu0
          %v2177 = vadd.f32 %v2047, %v2138
          %v2178 = vadd.f32 %v2048, %v2140
          %v2179 = vadd.f32 %v2049, %v2143
          %v2180 = vadd.f32 %v2050, %v2145
          %v2181 = vadd.f32 %v2051, %v2148
          %v2182 = vadd.f32 %v2052, %v2150
          %v2183 = vadd.f32 %v2053, %v2153
          %v2184 = vadd.f32 %v2054, %v2155
          %v2185 = vadd.f32 %v2055, %v2158
          %v2186 = vadd.f32 %v2056, %v2160
          %v2187 = vadd.f32 %v2057, %v2163
          %v2188 = vadd.f32 %v2058, %v2165
          %v2189 = vadd.f32 %v2059, %v2168
          %v2190 = vadd.f32 %v2060, %v2170
          %v2191 = vadd.f32 %v2061, %v2173
          %v2192 = vadd.f32 %v2062, %v2175
          %2193 = vst [vmem:[#allocation4] sm:$0xff] %v2177
          %2194 = vst [vmem:[#allocation4 + $0x8] sm:$0xff] %v2178
          %2195 = vst [vmem:[#allocation4 + $0x10] sm:$0xff] %v2179
          %2196 = vst [vmem:[#allocation4 + $0x18] sm:$0xff] %v2180
          %2197 = vst [vmem:[#allocation4 + $0x20] sm:$0xff] %v2181
          %2198 = vst [vmem:[#allocation4 + $0x28] sm:$0xff] %v2182
          %2199 = vst [vmem:[#allocation4 + $0x30] sm:$0xff] %v2183
          %2200 = vst [vmem:[#allocation4 + $0x38] sm:$0xff] %v2184
          %2201 = vst [vmem:[#allocation4 + $0x40] sm:$0xff] %v2185
          %2202 = vst [vmem:[#allocation4 + $0x48] sm:$0xff] %v2186
          %2203 = vst [vmem:[#allocation4 + $0x50] sm:$0xff] %v2187
          %2204 = vst [vmem:[#allocation4 + $0x58] sm:$0xff] %v2188
          %2205 = vst [vmem:[#allocation4 + $0x60] sm:$0xff] %v2189
          %2206 = vst [vmem:[#allocation4 + $0x68] sm:$0xff] %v2190
          %2207 = vst [vmem:[#allocation4 + $0x70] sm:$0xff] %v2191
          %2208 = vst [vmem:[#allocation4 + $0x78] sm:$0xff] %v2192
          %2209 = vst.msk [vmem:[#allocation2] sm:$0xff] %vm1934, %v1598
          %2210 = vst.msk [vmem:[#allocation2 + $0x8] sm:$0xff] %vm1934, %v1599
          %2211 = vst.msk [vmem:[#allocation2 + $0x10] sm:$0xff] %vm1934, %v1600
          %2212 = vst.msk [vmem:[#allocation2 + $0x18] sm:$0xff] %vm1934, %v1601
          %2213 = vst.msk [vmem:[#allocation2 + $0x20] sm:$0xff] %vm1934, %v1602
          %2214 = vst.msk [vmem:[#allocation2 + $0x28] sm:$0xff] %vm1934, %v1603
          %2215 = vst.msk [vmem:[#allocation2 + $0x30] sm:$0xff] %vm1934, %v1604
          %2216 = vst.msk [vmem:[#allocation2 + $0x38] sm:$0xff] %vm1934, %v1605
          %2217 = vst.msk [vmem:[#allocation2 + $0x40] sm:$0xff] %vm1934, %v1606
          %2218 = vst.msk [vmem:[#allocation2 + $0x48] sm:$0xff] %vm1934, %v1607
          %2219 = vst.msk [vmem:[#allocation2 + $0x50] sm:$0xff] %vm1934, %v1608
          %2220 = vst.msk [vmem:[#allocation2 + $0x58] sm:$0xff] %vm1934, %v1609
          %2221 = vst.msk [vmem:[#allocation2 + $0x60] sm:$0xff] %vm1934, %v1610
          %2222 = vst.msk [vmem:[#allocation2 + $0x68] sm:$0xff] %vm1934, %v1611
          %2223 = vst.msk [vmem:[#allocation2 + $0x70] sm:$0xff] %vm1934, %v1612
          %2224 = vst.msk [vmem:[#allocation2 + $0x78] sm:$0xff] %vm1934, %v1613
        $region60: #{amd_layer_forward.1} parent=51 // pred_fallthru
          _
        %p2225 = scmp.eq.s32.totalorder %s29, 1
        %p2226 = pnand %p366, %p2225
        %p2227 = pneg %p2226
        // Predicated region
        $region61: #{amd_layer_forward.1} parent=51 // pred_check
          _
        $region62: #{amd_layer_forward.1} parent=51 // pred_check_branch
          %2229 = sbr.rel (%p2226) target = $region64
        $region63: #{amd_layer_forward.1} parent=51 // pred_region
          %v2230 = vld [vmem:[#allocation4] sm:$0xff]
          %v2231 = vld [vmem:[#allocation4 + $0x8] sm:$0xff]
          %v2232 = vld [vmem:[#allocation4 + $0x10] sm:$0xff]
          %v2233 = vld [vmem:[#allocation4 + $0x18] sm:$0xff]
          %v2234 = vld [vmem:[#allocation4 + $0x20] sm:$0xff]
          %v2235 = vld [vmem:[#allocation4 + $0x28] sm:$0xff]
          %v2236 = vld [vmem:[#allocation4 + $0x30] sm:$0xff]
          %v2237 = vld [vmem:[#allocation4 + $0x38] sm:$0xff]
          %v2238 = vld [vmem:[#allocation4 + $0x40] sm:$0xff]
          %v2239 = vld [vmem:[#allocation4 + $0x48] sm:$0xff]
          %v2240 = vld [vmem:[#allocation4 + $0x50] sm:$0xff]
          %v2241 = vld [vmem:[#allocation4 + $0x58] sm:$0xff]
          %v2242 = vld [vmem:[#allocation4 + $0x60] sm:$0xff]
          %v2243 = vld [vmem:[#allocation4 + $0x68] sm:$0xff]
          %v2244 = vld [vmem:[#allocation4 + $0x70] sm:$0xff]
          %v2245 = vld [vmem:[#allocation4 + $0x78] sm:$0xff]
          %v2246 = vld [vmem:[#allocation3] sm:$0xff]
          %v2247 = vld [vmem:[#allocation3 + $0x8] sm:$0xff]
          %v2248 = vld [vmem:[#allocation3 + $0x10] sm:$0xff]
          %v2249 = vld [vmem:[#allocation3 + $0x18] sm:$0xff]
          %v2250 = vld [vmem:[#allocation3 + $0x20] sm:$0xff]
          %v2251 = vld [vmem:[#allocation3 + $0x28] sm:$0xff]
          %v2252 = vld [vmem:[#allocation3 + $0x30] sm:$0xff]
          %v2253 = vld [vmem:[#allocation3 + $0x38] sm:$0xff]
          %v2254 = vld [vmem:[#allocation3 + $0x40] sm:$0xff]
          %v2255 = vld [vmem:[#allocation3 + $0x48] sm:$0xff]
          %v2256 = vld [vmem:[#allocation3 + $0x50] sm:$0xff]
          %v2257 = vld [vmem:[#allocation3 + $0x58] sm:$0xff]
          %v2258 = vld [vmem:[#allocation3 + $0x60] sm:$0xff]
          %v2259 = vld [vmem:[#allocation3 + $0x68] sm:$0xff]
          %v2260 = vld [vmem:[#allocation3 + $0x70] sm:$0xff]
          %v2261 = vld [vmem:[#allocation3 + $0x78] sm:$0xff]
          %v2262 = vrcp.pop %v2246
          %v2263 = vrcp.pop %v2247
          %v2264 = vrcp.pop %v2248
          %v2265 = vrcp.pop %v2249
          %v2266 = vrcp.pop %v2250
          %v2267 = vrcp.pop %v2251
          %v2268 = vrcp.pop %v2252
          %v2269 = vrcp.pop %v2253
          %v2270 = vrcp.pop %v2254
          %v2271 = vrcp.pop %v2255
          %v2272 = vrcp.pop %v2256
          %v2273 = vrcp.pop %v2257
          %v2274 = vrcp.pop %v2258
          %v2275 = vrcp.pop %v2259
          %v2276 = vrcp.pop %v2260
          %v2277 = vrcp.pop %v2261
          %2279 = vset.pattern.permute.xlu0 0
          %2280 = vperm.xlu0 %2279, %v2262
          %v2281 = vpop.permute.xlu0 %2280
          %2284 = vset.pattern.permute.xlu0 0
          %2285 = vperm.xlu0 %2284, %v2263
          %v2286 = vpop.permute.xlu0 %2285
          %2289 = vset.pattern.permute.xlu0 0
          %2290 = vperm.xlu0 %2289, %v2264
          %v2291 = vpop.permute.xlu0 %2290
          %2294 = vset.pattern.permute.xlu0 0
          %2295 = vperm.xlu0 %2294, %v2265
          %v2296 = vpop.permute.xlu0 %2295
          %2299 = vset.pattern.permute.xlu0 0
          %2300 = vperm.xlu0 %2299, %v2266
          %v2301 = vpop.permute.xlu0 %2300
          %2304 = vset.pattern.permute.xlu0 0
          %2305 = vperm.xlu0 %2304, %v2267
          %v2306 = vpop.permute.xlu0 %2305
          %2309 = vset.pattern.permute.xlu0 0
          %2310 = vperm.xlu0 %2309, %v2268
          %v2311 = vpop.permute.xlu0 %2310
          %2314 = vset.pattern.permute.xlu0 0
          %2315 = vperm.xlu0 %2314, %v2269
          %v2316 = vpop.permute.xlu0 %2315
          %2319 = vset.pattern.permute.xlu0 0
          %2320 = vperm.xlu0 %2319, %v2270
          %v2321 = vpop.permute.xlu0 %2320
          %2324 = vset.pattern.permute.xlu0 0
          %2325 = vperm.xlu0 %2324, %v2271
          %v2326 = vpop.permute.xlu0 %2325
          %2329 = vset.pattern.permute.xlu0 0
          %2330 = vperm.xlu0 %2329, %v2272
          %v2331 = vpop.permute.xlu0 %2330
          %2334 = vset.pattern.permute.xlu0 0
          %2335 = vperm.xlu0 %2334, %v2273
          %v2336 = vpop.permute.xlu0 %2335
          %2339 = vset.pattern.permute.xlu0 0
          %2340 = vperm.xlu0 %2339, %v2274
          %v2341 = vpop.permute.xlu0 %2340
          %2344 = vset.pattern.permute.xlu0 0
          %2345 = vperm.xlu0 %2344, %v2275
          %v2346 = vpop.permute.xlu0 %2345
          %2349 = vset.pattern.permute.xlu0 0
          %2350 = vperm.xlu0 %2349, %v2276
          %v2351 = vpop.permute.xlu0 %2350
          %2354 = vset.pattern.permute.xlu0 0
          %2355 = vperm.xlu0 %2354, %v2277
          %v2356 = vpop.permute.xlu0 %2355
          %v2358 = vmul.f32 %v2230, %v2281
          %v2359 = vmul.f32 %v2231, %v2286
          %v2360 = vmul.f32 %v2232, %v2291
          %v2361 = vmul.f32 %v2233, %v2296
          %v2362 = vmul.f32 %v2234, %v2301
          %v2363 = vmul.f32 %v2235, %v2306
          %v2364 = vmul.f32 %v2236, %v2311
          %v2365 = vmul.f32 %v2237, %v2316
          %v2366 = vmul.f32 %v2238, %v2321
          %v2367 = vmul.f32 %v2239, %v2326
          %v2368 = vmul.f32 %v2240, %v2331
          %v2369 = vmul.f32 %v2241, %v2336
          %v2370 = vmul.f32 %v2242, %v2341
          %v2371 = vmul.f32 %v2243, %v2346
          %v2372 = vmul.f32 %v2244, %v2351
          %v2373 = vmul.f32 %v2245, %v2356
          %v2374 = vpack.c.bf16 %v2358, %v2358
          %v2375 = vpack.c.bf16 %v2359, %v2359
          %v2376 = vpack.c.bf16 %v2360, %v2360
          %v2377 = vpack.c.bf16 %v2361, %v2361
          %v2378 = vpack.c.bf16 %v2362, %v2362
          %v2379 = vpack.c.bf16 %v2363, %v2363
          %v2380 = vpack.c.bf16 %v2364, %v2364
          %v2381 = vpack.c.bf16 %v2365, %v2365
          %v2382 = vpack.c.bf16 %v2366, %v2366
          %v2383 = vpack.c.bf16 %v2367, %v2367
          %v2384 = vpack.c.bf16 %v2368, %v2368
          %v2385 = vpack.c.bf16 %v2369, %v2369
          %v2386 = vpack.c.bf16 %v2370, %v2370
          %v2387 = vpack.c.bf16 %v2371, %v2371
          %v2388 = vpack.c.bf16 %v2372, %v2372
          %v2389 = vpack.c.bf16 %v2373, %v2373
          %v2390 = vld [vmem:[%s6] sm:$0xf]
          %v2391 = vld [vmem:[%s6 + $0x4] sm:$0xf]
          %v2392 = vld [vmem:[%s6 + $0x8] sm:$0xf]
          %v2393 = vld [vmem:[%s6 + $0xc] sm:$0xf]
          %v2394 = vld [vmem:[%s6 + $0x10] sm:$0xf]
          %v2395 = vld [vmem:[%s6 + $0x14] sm:$0xf]
          %v2396 = vld [vmem:[%s6 + $0x18] sm:$0xf]
          %v2397 = vld [vmem:[%s6 + $0x1c] sm:$0xf]
          %v2398 = vld [vmem:[%s6 + $0x20] sm:$0xf]
          %v2399 = vld [vmem:[%s6 + $0x24] sm:$0xf]
          %v2400 = vld [vmem:[%s6 + $0x28] sm:$0xf]
          %v2401 = vld [vmem:[%s6 + $0x2c] sm:$0xf]
          %v2402 = vld [vmem:[%s6 + $0x30] sm:$0xf]
          %v2403 = vld [vmem:[%s6 + $0x34] sm:$0xf]
          %v2404 = vld [vmem:[%s6 + $0x38] sm:$0xf]
          %v2405 = vld [vmem:[%s6 + $0x3c] sm:$0xf]
          %v2406 = vld [vmem:[%s6 + $0x40] sm:$0xf]
          %v2407 = vld [vmem:[%s6 + $0x44] sm:$0xf]
          %v2408 = vld [vmem:[%s6 + $0x48] sm:$0xf]
          %v2409 = vld [vmem:[%s6 + $0x4c] sm:$0xf]
          %v2410 = vld [vmem:[%s6 + $0x50] sm:$0xf]
          %v2411 = vld [vmem:[%s6 + $0x54] sm:$0xf]
          %v2412 = vld [vmem:[%s6 + $0x58] sm:$0xf]
          %v2413 = vld [vmem:[%s6 + $0x5c] sm:$0xf]
          %v2414 = vld [vmem:[%s6 + $0x60] sm:$0xf]
          %v2415 = vld [vmem:[%s6 + $0x64] sm:$0xf]
          %v2416 = vld [vmem:[%s6 + $0x68] sm:$0xf]
          %v2417 = vld [vmem:[%s6 + $0x6c] sm:$0xf]
          %v2418 = vld [vmem:[%s6 + $0x70] sm:$0xf]
          %v2419 = vld [vmem:[%s6 + $0x74] sm:$0xf]
          %v2420 = vld [vmem:[%s6 + $0x78] sm:$0xf]
          %v2421 = vld [vmem:[%s6 + $0x7c] sm:$0xf]
          %v2422 = vld [vmem:[%s6 + $0x80] sm:$0xf]
          %v2423 = vld [vmem:[%s6 + $0x84] sm:$0xf]
          %v2424 = vld [vmem:[%s6 + $0x88] sm:$0xf]
          %v2425 = vld [vmem:[%s6 + $0x8c] sm:$0xf]
          %v2426 = vld [vmem:[%s6 + $0x90] sm:$0xf]
          %v2427 = vld [vmem:[%s6 + $0x94] sm:$0xf]
          %v2428 = vld [vmem:[%s6 + $0x98] sm:$0xf]
          %v2429 = vld [vmem:[%s6 + $0x9c] sm:$0xf]
          %v2430 = vld [vmem:[%s6 + $0xa0] sm:$0xf]
          %v2431 = vld [vmem:[%s6 + $0xa4] sm:$0xf]
          %v2432 = vld [vmem:[%s6 + $0xa8] sm:$0xf]
          %v2433 = vld [vmem:[%s6 + $0xac] sm:$0xf]
          %v2434 = vld [vmem:[%s6 + $0xb0] sm:$0xf]
          %v2435 = vld [vmem:[%s6 + $0xb4] sm:$0xf]
          %v2436 = vld [vmem:[%s6 + $0xb8] sm:$0xf]
          %v2437 = vld [vmem:[%s6 + $0xbc] sm:$0xf]
          %v2438 = vld [vmem:[%s6 + $0xc0] sm:$0xf]
          %v2439 = vld [vmem:[%s6 + $0xc4] sm:$0xf]
          %v2440 = vld [vmem:[%s6 + $0xc8] sm:$0xf]
          %v2441 = vld [vmem:[%s6 + $0xcc] sm:$0xf]
          %v2442 = vld [vmem:[%s6 + $0xd0] sm:$0xf]
          %v2443 = vld [vmem:[%s6 + $0xd4] sm:$0xf]
          %v2444 = vld [vmem:[%s6 + $0xd8] sm:$0xf]
          %v2445 = vld [vmem:[%s6 + $0xdc] sm:$0xf]
          %v2446 = vld [vmem:[%s6 + $0xe0] sm:$0xf]
          %v2447 = vld [vmem:[%s6 + $0xe4] sm:$0xf]
          %v2448 = vld [vmem:[%s6 + $0xe8] sm:$0xf]
          %v2449 = vld [vmem:[%s6 + $0xec] sm:$0xf]
          %v2450 = vld [vmem:[%s6 + $0xf0] sm:$0xf]
          %v2451 = vld [vmem:[%s6 + $0xf4] sm:$0xf]
          %v2452 = vld [vmem:[%s6 + $0xf8] sm:$0xf]
          %v2453 = vld [vmem:[%s6 + $0xfc] sm:$0xf]
          %v2454 = vld [vmem:[%s6 + $0x100] sm:$0xf]
          %v2455 = vld [vmem:[%s6 + $0x104] sm:$0xf]
          %v2456 = vld [vmem:[%s6 + $0x108] sm:$0xf]
          %v2457 = vld [vmem:[%s6 + $0x10c] sm:$0xf]
          %v2458 = vld [vmem:[%s6 + $0x110] sm:$0xf]
          %v2459 = vld [vmem:[%s6 + $0x114] sm:$0xf]
          %v2460 = vld [vmem:[%s6 + $0x118] sm:$0xf]
          %v2461 = vld [vmem:[%s6 + $0x11c] sm:$0xf]
          %v2462 = vld [vmem:[%s6 + $0x120] sm:$0xf]
          %v2463 = vld [vmem:[%s6 + $0x124] sm:$0xf]
          %v2464 = vld [vmem:[%s6 + $0x128] sm:$0xf]
          %v2465 = vld [vmem:[%s6 + $0x12c] sm:$0xf]
          %v2466 = vld [vmem:[%s6 + $0x130] sm:$0xf]
          %v2467 = vld [vmem:[%s6 + $0x134] sm:$0xf]
          %v2468 = vld [vmem:[%s6 + $0x138] sm:$0xf]
          %v2469 = vld [vmem:[%s6 + $0x13c] sm:$0xf]
          %v2470 = vld [vmem:[%s6 + $0x140] sm:$0xf]
          %v2471 = vld [vmem:[%s6 + $0x144] sm:$0xf]
          %v2472 = vld [vmem:[%s6 + $0x148] sm:$0xf]
          %v2473 = vld [vmem:[%s6 + $0x14c] sm:$0xf]
          %v2474 = vld [vmem:[%s6 + $0x150] sm:$0xf]
          %v2475 = vld [vmem:[%s6 + $0x154] sm:$0xf]
          %v2476 = vld [vmem:[%s6 + $0x158] sm:$0xf]
          %v2477 = vld [vmem:[%s6 + $0x15c] sm:$0xf]
          %v2478 = vld [vmem:[%s6 + $0x160] sm:$0xf]
          %v2479 = vld [vmem:[%s6 + $0x164] sm:$0xf]
          %v2480 = vld [vmem:[%s6 + $0x168] sm:$0xf]
          %v2481 = vld [vmem:[%s6 + $0x16c] sm:$0xf]
          %v2482 = vld [vmem:[%s6 + $0x170] sm:$0xf]
          %v2483 = vld [vmem:[%s6 + $0x174] sm:$0xf]
          %v2484 = vld [vmem:[%s6 + $0x178] sm:$0xf]
          %v2485 = vld [vmem:[%s6 + $0x17c] sm:$0xf]
          %v2486 = vld [vmem:[%s6 + $0x180] sm:$0xf]
          %v2487 = vld [vmem:[%s6 + $0x184] sm:$0xf]
          %v2488 = vld [vmem:[%s6 + $0x188] sm:$0xf]
          %v2489 = vld [vmem:[%s6 + $0x18c] sm:$0xf]
          %v2490 = vld [vmem:[%s6 + $0x190] sm:$0xf]
          %v2491 = vld [vmem:[%s6 + $0x194] sm:$0xf]
          %v2492 = vld [vmem:[%s6 + $0x198] sm:$0xf]
          %v2493 = vld [vmem:[%s6 + $0x19c] sm:$0xf]
          %v2494 = vld [vmem:[%s6 + $0x1a0] sm:$0xf]
          %v2495 = vld [vmem:[%s6 + $0x1a4] sm:$0xf]
          %v2496 = vld [vmem:[%s6 + $0x1a8] sm:$0xf]
          %v2497 = vld [vmem:[%s6 + $0x1ac] sm:$0xf]
          %v2498 = vld [vmem:[%s6 + $0x1b0] sm:$0xf]
          %v2499 = vld [vmem:[%s6 + $0x1b4] sm:$0xf]
          %v2500 = vld [vmem:[%s6 + $0x1b8] sm:$0xf]
          %v2501 = vld [vmem:[%s6 + $0x1bc] sm:$0xf]
          %v2502 = vld [vmem:[%s6 + $0x1c0] sm:$0xf]
          %v2503 = vld [vmem:[%s6 + $0x1c4] sm:$0xf]
          %v2504 = vld [vmem:[%s6 + $0x1c8] sm:$0xf]
          %v2505 = vld [vmem:[%s6 + $0x1cc] sm:$0xf]
          %v2506 = vld [vmem:[%s6 + $0x1d0] sm:$0xf]
          %v2507 = vld [vmem:[%s6 + $0x1d4] sm:$0xf]
          %v2508 = vld [vmem:[%s6 + $0x1d8] sm:$0xf]
          %v2509 = vld [vmem:[%s6 + $0x1dc] sm:$0xf]
          %v2510 = vld [vmem:[%s6 + $0x1e0] sm:$0xf]
          %v2511 = vld [vmem:[%s6 + $0x1e4] sm:$0xf]
          %v2512 = vld [vmem:[%s6 + $0x1e8] sm:$0xf]
          %v2513 = vld [vmem:[%s6 + $0x1ec] sm:$0xf]
          %v2514 = vld [vmem:[%s6 + $0x1f0] sm:$0xf]
          %v2515 = vld [vmem:[%s6 + $0x1f4] sm:$0xf]
          %v2516 = vld [vmem:[%s6 + $0x1f8] sm:$0xf]
          %v2517 = vld [vmem:[%s6 + $0x1fc] sm:$0xf]
          %v2520 = vunpack.c.l.b16 %v2374
          %v2521 = vunpack.c.l.b16 %v2375
          %v2522 = vpack.c.b16 %v2521, %v2520
          %v2540 = vunpack.c.l.b16 %v2390
          %v2541 = vunpack.c.l.b16 %v2391
          %v2542 = vunpack.c.l.b16 %v2392
          %v2543 = vunpack.c.l.b16 %v2393
          %v2544 = vunpack.c.l.b16 %v2394
          %v2545 = vunpack.c.l.b16 %v2395
          %v2546 = vunpack.c.l.b16 %v2396
          %v2547 = vunpack.c.l.b16 %v2397
          %v2548 = vunpack.c.l.b16 %v2398
          %v2549 = vunpack.c.l.b16 %v2399
          %v2550 = vunpack.c.l.b16 %v2400
          %v2551 = vunpack.c.l.b16 %v2401
          %v2552 = vunpack.c.l.b16 %v2402
          %v2553 = vunpack.c.l.b16 %v2403
          %v2554 = vunpack.c.l.b16 %v2404
          %v2555 = vunpack.c.l.b16 %v2405
          %v2556 = vpack.c.b16 %v2541, %v2540
          %v2557 = vpack.c.b16 %v2543, %v2542
          %v2558 = vpack.c.b16 %v2545, %v2544
          %v2559 = vpack.c.b16 %v2547, %v2546
          %v2560 = vpack.c.b16 %v2549, %v2548
          %v2561 = vpack.c.b16 %v2551, %v2550
          %v2562 = vpack.c.b16 %v2553, %v2552
          %v2563 = vpack.c.b16 %v2555, %v2554
          %2572 = vmatpush.bf16.msra.mxu0 %v2563
          %2573 = vmatpush.bf16.msra.mxu0 %v2562
          %2574 = vmatpush.bf16.msra.mxu0 %v2561
          %2575 = vmatpush.bf16.msra.mxu0 %v2560
          %2576 = vmatpush.bf16.msra.mxu0 %v2559
          %2577 = vmatpush.bf16.msra.mxu0 %v2558
          %2578 = vmatpush.bf16.msra.mxu0 %v2557
          %2579 = vmatpush.bf16.msra.mxu0 %v2556
          %2580 = vmatmul.bf16.gmra.mxu0 %v2522
          %v2581 = vpop.f32.mrf.mxu0
          %v2582 = vadd.f32 0.0, %v2581
          %v2583 = vpop.f32.mrf.mxu0
          %v2584 = vadd.f32 0.0, %v2583
          %2585 = vdwg.mxu0
          %v2588 = vunpack.c.l.b16 %v2376
          %v2589 = vunpack.c.l.b16 %v2377
          %v2590 = vpack.c.b16 %v2589, %v2588
          %v2608 = vunpack.c.l.b16 %v2406
          %v2609 = vunpack.c.l.b16 %v2407
          %v2610 = vunpack.c.l.b16 %v2408
          %v2611 = vunpack.c.l.b16 %v2409
          %v2612 = vunpack.c.l.b16 %v2410
          %v2613 = vunpack.c.l.b16 %v2411
          %v2614 = vunpack.c.l.b16 %v2412
          %v2615 = vunpack.c.l.b16 %v2413
          %v2616 = vunpack.c.l.b16 %v2414
          %v2617 = vunpack.c.l.b16 %v2415
          %v2618 = vunpack.c.l.b16 %v2416
          %v2619 = vunpack.c.l.b16 %v2417
          %v2620 = vunpack.c.l.b16 %v2418
          %v2621 = vunpack.c.l.b16 %v2419
          %v2622 = vunpack.c.l.b16 %v2420
          %v2623 = vunpack.c.l.b16 %v2421
          %v2624 = vpack.c.b16 %v2609, %v2608
          %v2625 = vpack.c.b16 %v2611, %v2610
          %v2626 = vpack.c.b16 %v2613, %v2612
          %v2627 = vpack.c.b16 %v2615, %v2614
          %v2628 = vpack.c.b16 %v2617, %v2616
          %v2629 = vpack.c.b16 %v2619, %v2618
          %v2630 = vpack.c.b16 %v2621, %v2620
          %v2631 = vpack.c.b16 %v2623, %v2622
          %2640 = vmatpush.bf16.msra.mxu0 %v2631
          %2641 = vmatpush.bf16.msra.mxu0 %v2630
          %2642 = vmatpush.bf16.msra.mxu0 %v2629
          %2643 = vmatpush.bf16.msra.mxu0 %v2628
          %2644 = vmatpush.bf16.msra.mxu0 %v2627
          %2645 = vmatpush.bf16.msra.mxu0 %v2626
          %2646 = vmatpush.bf16.msra.mxu0 %v2625
          %2647 = vmatpush.bf16.msra.mxu0 %v2624
          %2648 = vmatmul.bf16.gmra.mxu0 %v2590
          %v2649 = vpop.f32.mrf.mxu0
          %v2650 = vadd.f32 0.0, %v2649
          %v2651 = vpop.f32.mrf.mxu0
          %v2652 = vadd.f32 0.0, %v2651
          %2653 = vdwg.mxu0
          %v2656 = vunpack.c.l.b16 %v2378
          %v2657 = vunpack.c.l.b16 %v2379
          %v2658 = vpack.c.b16 %v2657, %v2656
          %v2676 = vunpack.c.l.b16 %v2422
          %v2677 = vunpack.c.l.b16 %v2423
          %v2678 = vunpack.c.l.b16 %v2424
          %v2679 = vunpack.c.l.b16 %v2425
          %v2680 = vunpack.c.l.b16 %v2426
          %v2681 = vunpack.c.l.b16 %v2427
          %v2682 = vunpack.c.l.b16 %v2428
          %v2683 = vunpack.c.l.b16 %v2429
          %v2684 = vunpack.c.l.b16 %v2430
          %v2685 = vunpack.c.l.b16 %v2431
          %v2686 = vunpack.c.l.b16 %v2432
          %v2687 = vunpack.c.l.b16 %v2433
          %v2688 = vunpack.c.l.b16 %v2434
          %v2689 = vunpack.c.l.b16 %v2435
          %v2690 = vunpack.c.l.b16 %v2436
          %v2691 = vunpack.c.l.b16 %v2437
          %v2692 = vpack.c.b16 %v2677, %v2676
          %v2693 = vpack.c.b16 %v2679, %v2678
          %v2694 = vpack.c.b16 %v2681, %v2680
          %v2695 = vpack.c.b16 %v2683, %v2682
          %v2696 = vpack.c.b16 %v2685, %v2684
          %v2697 = vpack.c.b16 %v2687, %v2686
          %v2698 = vpack.c.b16 %v2689, %v2688
          %v2699 = vpack.c.b16 %v2691, %v2690
          %2708 = vmatpush.bf16.msra.mxu0 %v2699
          %2709 = vmatpush.bf16.msra.mxu0 %v2698
          %2710 = vmatpush.bf16.msra.mxu0 %v2697
          %2711 = vmatpush.bf16.msra.mxu0 %v2696
          %2712 = vmatpush.bf16.msra.mxu0 %v2695
          %2713 = vmatpush.bf16.msra.mxu0 %v2694
          %2714 = vmatpush.bf16.msra.mxu0 %v2693
          %2715 = vmatpush.bf16.msra.mxu0 %v2692
          %2716 = vmatmul.bf16.gmra.mxu0 %v2658
          %v2717 = vpop.f32.mrf.mxu0
          %v2718 = vadd.f32 0.0, %v2717
          %v2719 = vpop.f32.mrf.mxu0
          %v2720 = vadd.f32 0.0, %v2719
          %2721 = vdwg.mxu0
          %v2724 = vunpack.c.l.b16 %v2380
          %v2725 = vunpack.c.l.b16 %v2381
          %v2726 = vpack.c.b16 %v2725, %v2724
          %v2744 = vunpack.c.l.b16 %v2438
          %v2745 = vunpack.c.l.b16 %v2439
          %v2746 = vunpack.c.l.b16 %v2440
          %v2747 = vunpack.c.l.b16 %v2441
          %v2748 = vunpack.c.l.b16 %v2442
          %v2749 = vunpack.c.l.b16 %v2443
          %v2750 = vunpack.c.l.b16 %v2444
          %v2751 = vunpack.c.l.b16 %v2445
          %v2752 = vunpack.c.l.b16 %v2446
          %v2753 = vunpack.c.l.b16 %v2447
          %v2754 = vunpack.c.l.b16 %v2448
          %v2755 = vunpack.c.l.b16 %v2449
          %v2756 = vunpack.c.l.b16 %v2450
          %v2757 = vunpack.c.l.b16 %v2451
          %v2758 = vunpack.c.l.b16 %v2452
          %v2759 = vunpack.c.l.b16 %v2453
          %v2760 = vpack.c.b16 %v2745, %v2744
          %v2761 = vpack.c.b16 %v2747, %v2746
          %v2762 = vpack.c.b16 %v2749, %v2748
          %v2763 = vpack.c.b16 %v2751, %v2750
          %v2764 = vpack.c.b16 %v2753, %v2752
          %v2765 = vpack.c.b16 %v2755, %v2754
          %v2766 = vpack.c.b16 %v2757, %v2756
          %v2767 = vpack.c.b16 %v2759, %v2758
          %2776 = vmatpush.bf16.msra.mxu0 %v2767
          %2777 = vmatpush.bf16.msra.mxu0 %v2766
          %2778 = vmatpush.bf16.msra.mxu0 %v2765
          %2779 = vmatpush.bf16.msra.mxu0 %v2764
          %2780 = vmatpush.bf16.msra.mxu0 %v2763
          %2781 = vmatpush.bf16.msra.mxu0 %v2762
          %2782 = vmatpush.bf16.msra.mxu0 %v2761
          %2783 = vmatpush.bf16.msra.mxu0 %v2760
          %2784 = vmatmul.bf16.gmra.mxu0 %v2726
          %v2785 = vpop.f32.mrf.mxu0
          %v2786 = vadd.f32 0.0, %v2785
          %v2787 = vpop.f32.mrf.mxu0
          %v2788 = vadd.f32 0.0, %v2787
          %2789 = vdwg.mxu0
          %v2792 = vunpack.c.l.b16 %v2382
          %v2793 = vunpack.c.l.b16 %v2383
          %v2794 = vpack.c.b16 %v2793, %v2792
          %v2812 = vunpack.c.l.b16 %v2454
          %v2813 = vunpack.c.l.b16 %v2455
          %v2814 = vunpack.c.l.b16 %v2456
          %v2815 = vunpack.c.l.b16 %v2457
          %v2816 = vunpack.c.l.b16 %v2458
          %v2817 = vunpack.c.l.b16 %v2459
          %v2818 = vunpack.c.l.b16 %v2460
          %v2819 = vunpack.c.l.b16 %v2461
          %v2820 = vunpack.c.l.b16 %v2462
          %v2821 = vunpack.c.l.b16 %v2463
          %v2822 = vunpack.c.l.b16 %v2464
          %v2823 = vunpack.c.l.b16 %v2465
          %v2824 = vunpack.c.l.b16 %v2466
          %v2825 = vunpack.c.l.b16 %v2467
          %v2826 = vunpack.c.l.b16 %v2468
          %v2827 = vunpack.c.l.b16 %v2469
          %v2828 = vpack.c.b16 %v2813, %v2812
          %v2829 = vpack.c.b16 %v2815, %v2814
          %v2830 = vpack.c.b16 %v2817, %v2816
          %v2831 = vpack.c.b16 %v2819, %v2818
          %v2832 = vpack.c.b16 %v2821, %v2820
          %v2833 = vpack.c.b16 %v2823, %v2822
          %v2834 = vpack.c.b16 %v2825, %v2824
          %v2835 = vpack.c.b16 %v2827, %v2826
          %2844 = vmatpush.bf16.msra.mxu0 %v2835
          %2845 = vmatpush.bf16.msra.mxu0 %v2834
          %2846 = vmatpush.bf16.msra.mxu0 %v2833
          %2847 = vmatpush.bf16.msra.mxu0 %v2832
          %2848 = vmatpush.bf16.msra.mxu0 %v2831
          %2849 = vmatpush.bf16.msra.mxu0 %v2830
          %2850 = vmatpush.bf16.msra.mxu0 %v2829
          %2851 = vmatpush.bf16.msra.mxu0 %v2828
          %2852 = vmatmul.bf16.gmra.mxu0 %v2794
          %v2853 = vpop.f32.mrf.mxu0
          %v2854 = vadd.f32 0.0, %v2853
          %v2855 = vpop.f32.mrf.mxu0
          %v2856 = vadd.f32 0.0, %v2855
          %2857 = vdwg.mxu0
          %v2860 = vunpack.c.l.b16 %v2384
          %v2861 = vunpack.c.l.b16 %v2385
          %v2862 = vpack.c.b16 %v2861, %v2860
          %v2880 = vunpack.c.l.b16 %v2470
          %v2881 = vunpack.c.l.b16 %v2471
          %v2882 = vunpack.c.l.b16 %v2472
          %v2883 = vunpack.c.l.b16 %v2473
          %v2884 = vunpack.c.l.b16 %v2474
          %v2885 = vunpack.c.l.b16 %v2475
          %v2886 = vunpack.c.l.b16 %v2476
          %v2887 = vunpack.c.l.b16 %v2477
          %v2888 = vunpack.c.l.b16 %v2478
          %v2889 = vunpack.c.l.b16 %v2479
          %v2890 = vunpack.c.l.b16 %v2480
          %v2891 = vunpack.c.l.b16 %v2481
          %v2892 = vunpack.c.l.b16 %v2482
          %v2893 = vunpack.c.l.b16 %v2483
          %v2894 = vunpack.c.l.b16 %v2484
          %v2895 = vunpack.c.l.b16 %v2485
          %v2896 = vpack.c.b16 %v2881, %v2880
          %v2897 = vpack.c.b16 %v2883, %v2882
          %v2898 = vpack.c.b16 %v2885, %v2884
          %v2899 = vpack.c.b16 %v2887, %v2886
          %v2900 = vpack.c.b16 %v2889, %v2888
          %v2901 = vpack.c.b16 %v2891, %v2890
          %v2902 = vpack.c.b16 %v2893, %v2892
          %v2903 = vpack.c.b16 %v2895, %v2894
          %2912 = vmatpush.bf16.msra.mxu0 %v2903
          %2913 = vmatpush.bf16.msra.mxu0 %v2902
          %2914 = vmatpush.bf16.msra.mxu0 %v2901
          %2915 = vmatpush.bf16.msra.mxu0 %v2900
          %2916 = vmatpush.bf16.msra.mxu0 %v2899
          %2917 = vmatpush.bf16.msra.mxu0 %v2898
          %2918 = vmatpush.bf16.msra.mxu0 %v2897
          %2919 = vmatpush.bf16.msra.mxu0 %v2896
          %2920 = vmatmul.bf16.gmra.mxu0 %v2862
          %v2921 = vpop.f32.mrf.mxu0
          %v2922 = vadd.f32 0.0, %v2921
          %v2923 = vpop.f32.mrf.mxu0
          %v2924 = vadd.f32 0.0, %v2923
          %2925 = vdwg.mxu0
          %v2928 = vunpack.c.l.b16 %v2386
          %v2929 = vunpack.c.l.b16 %v2387
          %v2930 = vpack.c.b16 %v2929, %v2928
          %v2948 = vunpack.c.l.b16 %v2486
          %v2949 = vunpack.c.l.b16 %v2487
          %v2950 = vunpack.c.l.b16 %v2488
          %v2951 = vunpack.c.l.b16 %v2489
          %v2952 = vunpack.c.l.b16 %v2490
          %v2953 = vunpack.c.l.b16 %v2491
          %v2954 = vunpack.c.l.b16 %v2492
          %v2955 = vunpack.c.l.b16 %v2493
          %v2956 = vunpack.c.l.b16 %v2494
          %v2957 = vunpack.c.l.b16 %v2495
          %v2958 = vunpack.c.l.b16 %v2496
          %v2959 = vunpack.c.l.b16 %v2497
          %v2960 = vunpack.c.l.b16 %v2498
          %v2961 = vunpack.c.l.b16 %v2499
          %v2962 = vunpack.c.l.b16 %v2500
          %v2963 = vunpack.c.l.b16 %v2501
          %v2964 = vpack.c.b16 %v2949, %v2948
          %v2965 = vpack.c.b16 %v2951, %v2950
          %v2966 = vpack.c.b16 %v2953, %v2952
          %v2967 = vpack.c.b16 %v2955, %v2954
          %v2968 = vpack.c.b16 %v2957, %v2956
          %v2969 = vpack.c.b16 %v2959, %v2958
          %v2970 = vpack.c.b16 %v2961, %v2960
          %v2971 = vpack.c.b16 %v2963, %v2962
          %2980 = vmatpush.bf16.msra.mxu0 %v2971
          %2981 = vmatpush.bf16.msra.mxu0 %v2970
          %2982 = vmatpush.bf16.msra.mxu0 %v2969
          %2983 = vmatpush.bf16.msra.mxu0 %v2968
          %2984 = vmatpush.bf16.msra.mxu0 %v2967
          %2985 = vmatpush.bf16.msra.mxu0 %v2966
          %2986 = vmatpush.bf16.msra.mxu0 %v2965
          %2987 = vmatpush.bf16.msra.mxu0 %v2964
          %2988 = vmatmul.bf16.gmra.mxu0 %v2930
          %v2989 = vpop.f32.mrf.mxu0
          %v2990 = vadd.f32 0.0, %v2989
          %v2991 = vpop.f32.mrf.mxu0
          %v2992 = vadd.f32 0.0, %v2991
          %2993 = vdwg.mxu0
          %v2996 = vunpack.c.l.b16 %v2388
          %v2997 = vunpack.c.l.b16 %v2389
          %v2998 = vpack.c.b16 %v2997, %v2996
          %v3016 = vunpack.c.l.b16 %v2502
          %v3017 = vunpack.c.l.b16 %v2503
          %v3018 = vunpack.c.l.b16 %v2504
          %v3019 = vunpack.c.l.b16 %v2505
          %v3020 = vunpack.c.l.b16 %v2506
          %v3021 = vunpack.c.l.b16 %v2507
          %v3022 = vunpack.c.l.b16 %v2508
          %v3023 = vunpack.c.l.b16 %v2509
          %v3024 = vunpack.c.l.b16 %v2510
          %v3025 = vunpack.c.l.b16 %v2511
          %v3026 = vunpack.c.l.b16 %v2512
          %v3027 = vunpack.c.l.b16 %v2513
          %v3028 = vunpack.c.l.b16 %v2514
          %v3029 = vunpack.c.l.b16 %v2515
          %v3030 = vunpack.c.l.b16 %v2516
          %v3031 = vunpack.c.l.b16 %v2517
          %v3032 = vpack.c.b16 %v3017, %v3016
          %v3033 = vpack.c.b16 %v3019, %v3018
          %v3034 = vpack.c.b16 %v3021, %v3020
          %v3035 = vpack.c.b16 %v3023, %v3022
          %v3036 = vpack.c.b16 %v3025, %v3024
          %v3037 = vpack.c.b16 %v3027, %v3026
          %v3038 = vpack.c.b16 %v3029, %v3028
          %v3039 = vpack.c.b16 %v3031, %v3030
          %3048 = vmatpush.bf16.msra.mxu0 %v3039
          %3049 = vmatpush.bf16.msra.mxu0 %v3038
          %3050 = vmatpush.bf16.msra.mxu0 %v3037
          %3051 = vmatpush.bf16.msra.mxu0 %v3036
          %3052 = vmatpush.bf16.msra.mxu0 %v3035
          %3053 = vmatpush.bf16.msra.mxu0 %v3034
          %3054 = vmatpush.bf16.msra.mxu0 %v3033
          %3055 = vmatpush.bf16.msra.mxu0 %v3032
          %3056 = vmatmul.bf16.gmra.mxu0 %v2998
          %v3057 = vpop.f32.mrf.mxu0
          %v3058 = vadd.f32 0.0, %v3057
          %v3059 = vpop.f32.mrf.mxu0
          %v3060 = vadd.f32 0.0, %v3059
          %3061 = vdwg.mxu0
          %v3062 = vpack.c.bf16 %v2582, %v2582
          %v3063 = vpack.c.bf16 %v2584, %v2584
          %v3064 = vpack.c.bf16 %v2650, %v2650
          %v3065 = vpack.c.bf16 %v2652, %v2652
          %v3066 = vpack.c.bf16 %v2718, %v2718
          %v3067 = vpack.c.bf16 %v2720, %v2720
          %v3068 = vpack.c.bf16 %v2786, %v2786
          %v3069 = vpack.c.bf16 %v2788, %v2788
          %v3070 = vpack.c.bf16 %v2854, %v2854
          %v3071 = vpack.c.bf16 %v2856, %v2856
          %v3072 = vpack.c.bf16 %v2922, %v2922
          %v3073 = vpack.c.bf16 %v2924, %v2924
          %v3074 = vpack.c.bf16 %v2990, %v2990
          %v3075 = vpack.c.bf16 %v2992, %v2992
          %v3076 = vpack.c.bf16 %v3058, %v3058
          %v3077 = vpack.c.bf16 %v3060, %v3060
          %3078 = vst [vmem:[#allocation5] sm:$0xf] %v3062
          %3079 = vst [vmem:[#allocation5 + $0x4] sm:$0xf] %v3063
          %3080 = vst [vmem:[#allocation5 + $0x8] sm:$0xf] %v3064
          %3081 = vst [vmem:[#allocation5 + $0xc] sm:$0xf] %v3065
          %3082 = vst [vmem:[#allocation5 + $0x10] sm:$0xf] %v3066
          %3083 = vst [vmem:[#allocation5 + $0x14] sm:$0xf] %v3067
          %3084 = vst [vmem:[#allocation5 + $0x18] sm:$0xf] %v3068
          %3085 = vst [vmem:[#allocation5 + $0x1c] sm:$0xf] %v3069
          %3086 = vst [vmem:[#allocation5 + $0x20] sm:$0xf] %v3070
          %3087 = vst [vmem:[#allocation5 + $0x24] sm:$0xf] %v3071
          %3088 = vst [vmem:[#allocation5 + $0x28] sm:$0xf] %v3072
          %3089 = vst [vmem:[#allocation5 + $0x2c] sm:$0xf] %v3073
          %3090 = vst [vmem:[#allocation5 + $0x30] sm:$0xf] %v3074
          %3091 = vst [vmem:[#allocation5 + $0x34] sm:$0xf] %v3075
          %3092 = vst [vmem:[#allocation5 + $0x38] sm:$0xf] %v3076
          %3093 = vst [vmem:[#allocation5 + $0x3c] sm:$0xf] %v3077
        $region64: #{amd_layer_forward.1} parent=51 // pred_fallthru
          _
        %p3094 = scmp.eq.s32.totalorder %s28, 1
        // Predicated region
        $region65: #{amd_layer_forward.1} parent=51 // pred_check
          %p3095 = pneg %p3094
        $region66: #{amd_layer_forward.1} parent=51 // pred_check_branch
          %3097 = sbr.rel (%p3095) target = $region68
        $region67: #{amd_layer_forward.1} parent=51 // pred_region
          %s3098 = smul.u32 %s29, 32
          %s3099 = smul.addr %s3098, 4
          %s3100 = scalar_lea.vmem [#allocation7], %s3099
          %v3101 = vld [vmem:[%s3100] sm:$0xf]
          %v3102 = vld [vmem:[%s3100 + $0x4] sm:$0xf]
          %v3103 = vld [vmem:[%s3100 + $0x8] sm:$0xf]
          %v3104 = vld [vmem:[%s3100 + $0xc] sm:$0xf]
          %v3105 = vld [vmem:[%s3100 + $0x10] sm:$0xf]
          %v3106 = vld [vmem:[%s3100 + $0x14] sm:$0xf]
          %v3107 = vld [vmem:[%s3100 + $0x18] sm:$0xf]
          %v3108 = vld [vmem:[%s3100 + $0x1c] sm:$0xf]
          %v3109 = vld [vmem:[%s3100 + $0x20] sm:$0xf]
          %v3110 = vld [vmem:[%s3100 + $0x24] sm:$0xf]
          %v3111 = vld [vmem:[%s3100 + $0x28] sm:$0xf]
          %v3112 = vld [vmem:[%s3100 + $0x2c] sm:$0xf]
          %v3113 = vld [vmem:[%s3100 + $0x30] sm:$0xf]
          %v3114 = vld [vmem:[%s3100 + $0x34] sm:$0xf]
          %v3115 = vld [vmem:[%s3100 + $0x38] sm:$0xf]
          %v3116 = vld [vmem:[%s3100 + $0x3c] sm:$0xf]
          %v3117 = vld [vmem:[%s3100 + $0x40] sm:$0xf]
          %v3118 = vld [vmem:[%s3100 + $0x44] sm:$0xf]
          %v3119 = vld [vmem:[%s3100 + $0x48] sm:$0xf]
          %v3120 = vld [vmem:[%s3100 + $0x4c] sm:$0xf]
          %v3121 = vld [vmem:[%s3100 + $0x50] sm:$0xf]
          %v3122 = vld [vmem:[%s3100 + $0x54] sm:$0xf]
          %v3123 = vld [vmem:[%s3100 + $0x58] sm:$0xf]
          %v3124 = vld [vmem:[%s3100 + $0x5c] sm:$0xf]
          %v3125 = vld [vmem:[%s3100 + $0x60] sm:$0xf]
          %v3126 = vld [vmem:[%s3100 + $0x64] sm:$0xf]
          %v3127 = vld [vmem:[%s3100 + $0x68] sm:$0xf]
          %v3128 = vld [vmem:[%s3100 + $0x6c] sm:$0xf]
          %v3129 = vld [vmem:[%s3100 + $0x70] sm:$0xf]
          %v3130 = vld [vmem:[%s3100 + $0x74] sm:$0xf]
          %v3131 = vld [vmem:[%s3100 + $0x78] sm:$0xf]
          %v3132 = vld [vmem:[%s3100 + $0x7c] sm:$0xf]
          %v3133 = vld [vmem:[%s4] sm:$0xf]
          %v3134 = vld [vmem:[%s4 + $0x4] sm:$0xf]
          %v3135 = vld [vmem:[%s4 + $0x8] sm:$0xf]
          %v3136 = vld [vmem:[%s4 + $0xc] sm:$0xf]
          %v3137 = vld [vmem:[%s4 + $0x10] sm:$0xf]
          %v3138 = vld [vmem:[%s4 + $0x14] sm:$0xf]
          %v3139 = vld [vmem:[%s4 + $0x18] sm:$0xf]
          %v3140 = vld [vmem:[%s4 + $0x1c] sm:$0xf]
          %v3141 = vld [vmem:[%s4 + $0x20] sm:$0xf]
          %v3142 = vld [vmem:[%s4 + $0x24] sm:$0xf]
          %v3143 = vld [vmem:[%s4 + $0x28] sm:$0xf]
          %v3144 = vld [vmem:[%s4 + $0x2c] sm:$0xf]
          %v3145 = vld [vmem:[%s4 + $0x30] sm:$0xf]
          %v3146 = vld [vmem:[%s4 + $0x34] sm:$0xf]
          %v3147 = vld [vmem:[%s4 + $0x38] sm:$0xf]
          %v3148 = vld [vmem:[%s4 + $0x3c] sm:$0xf]
          %v3149 = vld [vmem:[%s5] sm:$0xff]
          %v3150 = vld [vmem:[%s5 + $0x8] sm:$0xff]
          %v3151 = vld [vmem:[%s5 + $0x10] sm:$0xff]
          %v3152 = vld [vmem:[%s5 + $0x18] sm:$0xff]
          %v3153 = vld [vmem:[%s5 + $0x20] sm:$0xff]
          %v3154 = vld [vmem:[%s5 + $0x28] sm:$0xff]
          %v3155 = vld [vmem:[%s5 + $0x30] sm:$0xff]
          %v3156 = vld [vmem:[%s5 + $0x38] sm:$0xff]
          %v3157 = vld [vmem:[%s5 + $0x40] sm:$0xff]
          %v3158 = vld [vmem:[%s5 + $0x48] sm:$0xff]
          %v3159 = vld [vmem:[%s5 + $0x50] sm:$0xff]
          %v3160 = vld [vmem:[%s5 + $0x58] sm:$0xff]
          %v3161 = vld [vmem:[%s5 + $0x60] sm:$0xff]
          %v3162 = vld [vmem:[%s5 + $0x68] sm:$0xff]
          %v3163 = vld [vmem:[%s5 + $0x70] sm:$0xff]
          %v3164 = vld [vmem:[%s5 + $0x78] sm:$0xff]
          %3166 = vset.pattern.permute.xlu0 0
          %3167 = vperm.xlu0 %3166, %v3149
          %v3168 = vpop.permute.xlu0 %3167
          %3171 = vset.pattern.permute.xlu0 0
          %3172 = vperm.xlu0 %3171, %v3150
          %v3173 = vpop.permute.xlu0 %3172
          %3176 = vset.pattern.permute.xlu0 0
          %3177 = vperm.xlu0 %3176, %v3151
          %v3178 = vpop.permute.xlu0 %3177
          %3181 = vset.pattern.permute.xlu0 0
          %3182 = vperm.xlu0 %3181, %v3152
          %v3183 = vpop.permute.xlu0 %3182
          %3186 = vset.pattern.permute.xlu0 0
          %3187 = vperm.xlu0 %3186, %v3153
          %v3188 = vpop.permute.xlu0 %3187
          %3191 = vset.pattern.permute.xlu0 0
          %3192 = vperm.xlu0 %3191, %v3154
          %v3193 = vpop.permute.xlu0 %3192
          %3196 = vset.pattern.permute.xlu0 0
          %3197 = vperm.xlu0 %3196, %v3155
          %v3198 = vpop.permute.xlu0 %3197
          %3201 = vset.pattern.permute.xlu0 0
          %3202 = vperm.xlu0 %3201, %v3156
          %v3203 = vpop.permute.xlu0 %3202
          %3206 = vset.pattern.permute.xlu0 0
          %3207 = vperm.xlu0 %3206, %v3157
          %v3208 = vpop.permute.xlu0 %3207
          %3211 = vset.pattern.permute.xlu0 0
          %3212 = vperm.xlu0 %3211, %v3158
          %v3213 = vpop.permute.xlu0 %3212
          %3216 = vset.pattern.permute.xlu0 0
          %3217 = vperm.xlu0 %3216, %v3159
          %v3218 = vpop.permute.xlu0 %3217
          %3221 = vset.pattern.permute.xlu0 0
          %3222 = vperm.xlu0 %3221, %v3160
          %v3223 = vpop.permute.xlu0 %3222
          %3226 = vset.pattern.permute.xlu0 0
          %3227 = vperm.xlu0 %3226, %v3161
          %v3228 = vpop.permute.xlu0 %3227
          %3231 = vset.pattern.permute.xlu0 0
          %3232 = vperm.xlu0 %3231, %v3162
          %v3233 = vpop.permute.xlu0 %3232
          %3236 = vset.pattern.permute.xlu0 0
          %3237 = vperm.xlu0 %3236, %v3163
          %v3238 = vpop.permute.xlu0 %3237
          %3241 = vset.pattern.permute.xlu0 0
          %3242 = vperm.xlu0 %3241, %v3164
          %v3243 = vpop.permute.xlu0 %3242
          %v3261 = vunpack.c.l.b16 %v3133
          %v3262 = vunpack.c.l.b16 %v3134
          %v3263 = vunpack.c.l.b16 %v3135
          %v3264 = vunpack.c.l.b16 %v3136
          %v3265 = vunpack.c.l.b16 %v3137
          %v3266 = vunpack.c.l.b16 %v3138
          %v3267 = vunpack.c.l.b16 %v3139
          %v3268 = vunpack.c.l.b16 %v3140
          %v3269 = vunpack.c.l.b16 %v3141
          %v3270 = vunpack.c.l.b16 %v3142
          %v3271 = vunpack.c.l.b16 %v3143
          %v3272 = vunpack.c.l.b16 %v3144
          %v3273 = vunpack.c.l.b16 %v3145
          %v3274 = vunpack.c.l.b16 %v3146
          %v3275 = vunpack.c.l.b16 %v3147
          %v3276 = vunpack.c.l.b16 %v3148
          %v3277 = vpack.c.b16 %v3262, %v3261
          %v3278 = vpack.c.b16 %v3264, %v3263
          %v3279 = vpack.c.b16 %v3266, %v3265
          %v3280 = vpack.c.b16 %v3268, %v3267
          %v3281 = vpack.c.b16 %v3270, %v3269
          %v3282 = vpack.c.b16 %v3272, %v3271
          %v3283 = vpack.c.b16 %v3274, %v3273
          %v3284 = vpack.c.b16 %v3276, %v3275
          %v3325 = vunpack.c.l.b16 %v3101
          %v3326 = vunpack.c.l.b16 %v3102
          %v3327 = vunpack.c.l.b16 %v3103
          %v3328 = vunpack.c.l.b16 %v3104
          %v3329 = vunpack.c.l.b16 %v3105
          %v3330 = vunpack.c.l.b16 %v3106
          %v3331 = vunpack.c.l.b16 %v3107
          %v3332 = vunpack.c.l.b16 %v3108
          %v3333 = vunpack.c.l.b16 %v3109
          %v3334 = vunpack.c.l.b16 %v3110
          %v3335 = vunpack.c.l.b16 %v3111
          %v3336 = vunpack.c.l.b16 %v3112
          %v3337 = vunpack.c.l.b16 %v3113
          %v3338 = vunpack.c.l.b16 %v3114
          %v3339 = vunpack.c.l.b16 %v3115
          %v3340 = vunpack.c.l.b16 %v3116
          %v3341 = vunpack.c.l.b16 %v3117
          %v3342 = vunpack.c.l.b16 %v3118
          %v3343 = vunpack.c.l.b16 %v3119
          %v3344 = vunpack.c.l.b16 %v3120
          %v3345 = vunpack.c.l.b16 %v3121
          %v3346 = vunpack.c.l.b16 %v3122
          %v3347 = vunpack.c.l.b16 %v3123
          %v3348 = vunpack.c.l.b16 %v3124
          %v3349 = vunpack.c.l.b16 %v3125
          %v3350 = vunpack.c.l.b16 %v3126
          %v3351 = vunpack.c.l.b16 %v3127
          %v3352 = vunpack.c.l.b16 %v3128
          %v3353 = vunpack.c.l.b16 %v3129
          %v3354 = vunpack.c.l.b16 %v3130
          %v3355 = vunpack.c.l.b16 %v3131
          %v3356 = vunpack.c.l.b16 %v3132
          %v3357 = vpack.c.b16 %v3326, %v3325
          %v3358 = vpack.c.b16 %v3328, %v3327
          %v3359 = vpack.c.b16 %v3330, %v3329
          %v3360 = vpack.c.b16 %v3332, %v3331
          %v3361 = vpack.c.b16 %v3334, %v3333
          %v3362 = vpack.c.b16 %v3336, %v3335
          %v3363 = vpack.c.b16 %v3338, %v3337
          %v3364 = vpack.c.b16 %v3340, %v3339
          %v3365 = vpack.c.b16 %v3342, %v3341
          %v3366 = vpack.c.b16 %v3344, %v3343
          %v3367 = vpack.c.b16 %v3346, %v3345
          %v3368 = vpack.c.b16 %v3348, %v3347
          %v3369 = vpack.c.b16 %v3350, %v3349
          %v3370 = vpack.c.b16 %v3352, %v3351
          %v3371 = vpack.c.b16 %v3354, %v3353
          %v3372 = vpack.c.b16 %v3356, %v3355
          %3389 = vmatpush.bf16.xpose.msra.mxu0 %v3364
          %3390 = vmatpush.bf16.xpose.msra.mxu0 %v3363
          %3391 = vmatpush.bf16.xpose.msra.mxu0 %v3362
          %3392 = vmatpush.bf16.xpose.msra.mxu0 %v3361
          %3393 = vmatpush.bf16.xpose.msra.mxu0 %v3360
          %3394 = vmatpush.bf16.xpose.msra.mxu0 %v3359
          %3395 = vmatpush.bf16.xpose.msra.mxu0 %v3358
          %3396 = vmatpush.bf16.xpose.msra.mxu0 %v3357
          %3397 = vmatmul.bf16.gmra.mxu0 %v3277
          %v3398 = vpop.f32.mrf.mxu0
          %v3399 = vadd.f32 %v3168, %v3398
          %v3400 = vpop.f32.mrf.mxu0
          %v3401 = vadd.f32 %v3173, %v3400
          %3402 = vmatmul.bf16.gmra.mxu0 %v3278
          %v3403 = vpop.f32.mrf.mxu0
          %v3404 = vadd.f32 %v3178, %v3403
          %v3405 = vpop.f32.mrf.mxu0
          %v3406 = vadd.f32 %v3183, %v3405
          %3407 = vmatmul.bf16.gmra.mxu0 %v3279
          %v3408 = vpop.f32.mrf.mxu0
          %v3409 = vadd.f32 %v3188, %v3408
          %v3410 = vpop.f32.mrf.mxu0
          %v3411 = vadd.f32 %v3193, %v3410
          %3412 = vmatmul.bf16.gmra.mxu0 %v3280
          %v3413 = vpop.f32.mrf.mxu0
          %v3414 = vadd.f32 %v3198, %v3413
          %v3415 = vpop.f32.mrf.mxu0
          %v3416 = vadd.f32 %v3203, %v3415
          %3417 = vmatmul.bf16.gmra.mxu0 %v3281
          %v3418 = vpop.f32.mrf.mxu0
          %v3419 = vadd.f32 %v3208, %v3418
          %v3420 = vpop.f32.mrf.mxu0
          %v3421 = vadd.f32 %v3213, %v3420
          %3422 = vmatmul.bf16.gmra.mxu0 %v3282
          %v3423 = vpop.f32.mrf.mxu0
          %v3424 = vadd.f32 %v3218, %v3423
          %v3425 = vpop.f32.mrf.mxu0
          %v3426 = vadd.f32 %v3223, %v3425
          %3427 = vmatmul.bf16.gmra.mxu0 %v3283
          %v3428 = vpop.f32.mrf.mxu0
          %v3429 = vadd.f32 %v3228, %v3428
          %v3430 = vpop.f32.mrf.mxu0
          %v3431 = vadd.f32 %v3233, %v3430
          %3432 = vmatmul.bf16.gmra.mxu0 %v3284
          %v3433 = vpop.f32.mrf.mxu0
          %v3434 = vadd.f32 %v3238, %v3433
          %v3435 = vpop.f32.mrf.mxu0
          %v3436 = vadd.f32 %v3243, %v3435
          %3437 = vdwg.mxu0
          %3438 = vmatpush.bf16.xpose.msra.mxu0 %v3372
          %3439 = vmatpush.bf16.xpose.msra.mxu0 %v3371
          %3440 = vmatpush.bf16.xpose.msra.mxu0 %v3370
          %3441 = vmatpush.bf16.xpose.msra.mxu0 %v3369
          %3442 = vmatpush.bf16.xpose.msra.mxu0 %v3368
          %3443 = vmatpush.bf16.xpose.msra.mxu0 %v3367
          %3444 = vmatpush.bf16.xpose.msra.mxu0 %v3366
          %3445 = vmatpush.bf16.xpose.msra.mxu0 %v3365
          %3446 = vmatmul.bf16.gmra.mxu0 %v3277
          %v3447 = vpop.f32.mrf.mxu0
          %v3448 = vadd.f32 %v3168, %v3447
          %v3449 = vpop.f32.mrf.mxu0
          %v3450 = vadd.f32 %v3173, %v3449
          %3451 = vmatmul.bf16.gmra.mxu0 %v3278
          %v3452 = vpop.f32.mrf.mxu0
          %v3453 = vadd.f32 %v3178, %v3452
          %v3454 = vpop.f32.mrf.mxu0
          %v3455 = vadd.f32 %v3183, %v3454
          %3456 = vmatmul.bf16.gmra.mxu0 %v3279
          %v3457 = vpop.f32.mrf.mxu0
          %v3458 = vadd.f32 %v3188, %v3457
          %v3459 = vpop.f32.mrf.mxu0
          %v3460 = vadd.f32 %v3193, %v3459
          %3461 = vmatmul.bf16.gmra.mxu0 %v3280
          %v3462 = vpop.f32.mrf.mxu0
          %v3463 = vadd.f32 %v3198, %v3462
          %v3464 = vpop.f32.mrf.mxu0
          %v3465 = vadd.f32 %v3203, %v3464
          %3466 = vmatmul.bf16.gmra.mxu0 %v3281
          %v3467 = vpop.f32.mrf.mxu0
          %v3468 = vadd.f32 %v3208, %v3467
          %v3469 = vpop.f32.mrf.mxu0
          %v3470 = vadd.f32 %v3213, %v3469
          %3471 = vmatmul.bf16.gmra.mxu0 %v3282
          %v3472 = vpop.f32.mrf.mxu0
          %v3473 = vadd.f32 %v3218, %v3472
          %v3474 = vpop.f32.mrf.mxu0
          %v3475 = vadd.f32 %v3223, %v3474
          %3476 = vmatmul.bf16.gmra.mxu0 %v3283
          %v3477 = vpop.f32.mrf.mxu0
          %v3478 = vadd.f32 %v3228, %v3477
          %v3479 = vpop.f32.mrf.mxu0
          %v3480 = vadd.f32 %v3233, %v3479
          %3481 = vmatmul.bf16.gmra.mxu0 %v3284
          %v3482 = vpop.f32.mrf.mxu0
          %v3483 = vadd.f32 %v3238, %v3482
          %v3484 = vpop.f32.mrf.mxu0
          %v3485 = vadd.f32 %v3243, %v3484
          %3486 = vdwg.mxu0
          %v3487 = vmax.f32 %v3399, %v3401
          %v3488 = vrot.slane %v3487, 4
          %v3489 = vmax.f32 %v3487, %v3488
          %v3490 = vrot.slane %v3489, 2
          %v3491 = vmax.f32 %v3489, %v3490
          %v3492 = vrot.slane %v3491, 1
          %v3493 = vmax.f32 %v3491, %v3492
          %v3494 = vmax.f32 %v3448, %v3450
          %v3495 = vrot.slane %v3494, 4
          %v3496 = vmax.f32 %v3494, %v3495
          %v3497 = vrot.slane %v3496, 2
          %v3498 = vmax.f32 %v3496, %v3497
          %v3499 = vrot.slane %v3498, 1
          %v3500 = vmax.f32 %v3498, %v3499
          %v3501 = vmax.f32 %v3404, %v3406
          %v3502 = vrot.slane %v3501, 4
          %v3503 = vmax.f32 %v3501, %v3502
          %v3504 = vrot.slane %v3503, 2
          %v3505 = vmax.f32 %v3503, %v3504
          %v3506 = vrot.slane %v3505, 1
          %v3507 = vmax.f32 %v3505, %v3506
          %v3508 = vmax.f32 %v3453, %v3455
          %v3509 = vrot.slane %v3508, 4
          %v3510 = vmax.f32 %v3508, %v3509
          %v3511 = vrot.slane %v3510, 2
          %v3512 = vmax.f32 %v3510, %v3511
          %v3513 = vrot.slane %v3512, 1
          %v3514 = vmax.f32 %v3512, %v3513
          %v3515 = vmax.f32 %v3409, %v3411
          %v3516 = vrot.slane %v3515, 4
          %v3517 = vmax.f32 %v3515, %v3516
          %v3518 = vrot.slane %v3517, 2
          %v3519 = vmax.f32 %v3517, %v3518
          %v3520 = vrot.slane %v3519, 1
          %v3521 = vmax.f32 %v3519, %v3520
          %v3522 = vmax.f32 %v3458, %v3460
          %v3523 = vrot.slane %v3522, 4
          %v3524 = vmax.f32 %v3522, %v3523
          %v3525 = vrot.slane %v3524, 2
          %v3526 = vmax.f32 %v3524, %v3525
          %v3527 = vrot.slane %v3526, 1
          %v3528 = vmax.f32 %v3526, %v3527
          %v3529 = vmax.f32 %v3414, %v3416
          %v3530 = vrot.slane %v3529, 4
          %v3531 = vmax.f32 %v3529, %v3530
          %v3532 = vrot.slane %v3531, 2
          %v3533 = vmax.f32 %v3531, %v3532
          %v3534 = vrot.slane %v3533, 1
          %v3535 = vmax.f32 %v3533, %v3534
          %v3536 = vmax.f32 %v3463, %v3465
          %v3537 = vrot.slane %v3536, 4
          %v3538 = vmax.f32 %v3536, %v3537
          %v3539 = vrot.slane %v3538, 2
          %v3540 = vmax.f32 %v3538, %v3539
          %v3541 = vrot.slane %v3540, 1
          %v3542 = vmax.f32 %v3540, %v3541
          %v3543 = vmax.f32 %v3419, %v3421
          %v3544 = vrot.slane %v3543, 4
          %v3545 = vmax.f32 %v3543, %v3544
          %v3546 = vrot.slane %v3545, 2
          %v3547 = vmax.f32 %v3545, %v3546
          %v3548 = vrot.slane %v3547, 1
          %v3549 = vmax.f32 %v3547, %v3548
          %v3550 = vmax.f32 %v3468, %v3470
          %v3551 = vrot.slane %v3550, 4
          %v3552 = vmax.f32 %v3550, %v3551
          %v3553 = vrot.slane %v3552, 2
          %v3554 = vmax.f32 %v3552, %v3553
          %v3555 = vrot.slane %v3554, 1
          %v3556 = vmax.f32 %v3554, %v3555
          %v3557 = vmax.f32 %v3424, %v3426
          %v3558 = vrot.slane %v3557, 4
          %v3559 = vmax.f32 %v3557, %v3558
          %v3560 = vrot.slane %v3559, 2
          %v3561 = vmax.f32 %v3559, %v3560
          %v3562 = vrot.slane %v3561, 1
          %v3563 = vmax.f32 %v3561, %v3562
          %v3564 = vmax.f32 %v3473, %v3475
          %v3565 = vrot.slane %v3564, 4
          %v3566 = vmax.f32 %v3564, %v3565
          %v3567 = vrot.slane %v3566, 2
          %v3568 = vmax.f32 %v3566, %v3567
          %v3569 = vrot.slane %v3568, 1
          %v3570 = vmax.f32 %v3568, %v3569
          %v3571 = vmax.f32 %v3429, %v3431
          %v3572 = vrot.slane %v3571, 4
          %v3573 = vmax.f32 %v3571, %v3572
          %v3574 = vrot.slane %v3573, 2
          %v3575 = vmax.f32 %v3573, %v3574
          %v3576 = vrot.slane %v3575, 1
          %v3577 = vmax.f32 %v3575, %v3576
          %v3578 = vmax.f32 %v3478, %v3480
          %v3579 = vrot.slane %v3578, 4
          %v3580 = vmax.f32 %v3578, %v3579
          %v3581 = vrot.slane %v3580, 2
          %v3582 = vmax.f32 %v3580, %v3581
          %v3583 = vrot.slane %v3582, 1
          %v3584 = vmax.f32 %v3582, %v3583
          %v3585 = vmax.f32 %v3434, %v3436
          %v3586 = vrot.slane %v3585, 4
          %v3587 = vmax.f32 %v3585, %v3586
          %v3588 = vrot.slane %v3587, 2
          %v3589 = vmax.f32 %v3587, %v3588
          %v3590 = vrot.slane %v3589, 1
          %v3591 = vmax.f32 %v3589, %v3590
          %v3592 = vmax.f32 %v3483, %v3485
          %v3593 = vrot.slane %v3592, 4
          %v3594 = vmax.f32 %v3592, %v3593
          %v3595 = vrot.slane %v3594, 2
          %v3596 = vmax.f32 %v3594, %v3595
          %v3597 = vrot.slane %v3596, 1
          %v3598 = vmax.f32 %v3596, %v3597
          %v3599 = vsub.f32 %v3399, %v3493
          %v3600 = vsub.f32 %v3448, %v3500
          %v3601 = vsub.f32 %v3401, %v3493
          %v3602 = vsub.f32 %v3450, %v3500
          %v3603 = vsub.f32 %v3404, %v3507
          %v3604 = vsub.f32 %v3453, %v3514
          %v3605 = vsub.f32 %v3406, %v3507
          %v3606 = vsub.f32 %v3455, %v3514
          %v3607 = vsub.f32 %v3409, %v3521
          %v3608 = vsub.f32 %v3458, %v3528
          %v3609 = vsub.f32 %v3411, %v3521
          %v3610 = vsub.f32 %v3460, %v3528
          %v3611 = vsub.f32 %v3414, %v3535
          %v3612 = vsub.f32 %v3463, %v3542
          %v3613 = vsub.f32 %v3416, %v3535
          %v3614 = vsub.f32 %v3465, %v3542
          %v3615 = vsub.f32 %v3419, %v3549
          %v3616 = vsub.f32 %v3468, %v3556
          %v3617 = vsub.f32 %v3421, %v3549
          %v3618 = vsub.f32 %v3470, %v3556
          %v3619 = vsub.f32 %v3424, %v3563
          %v3620 = vsub.f32 %v3473, %v3570
          %v3621 = vsub.f32 %v3426, %v3563
          %v3622 = vsub.f32 %v3475, %v3570
          %v3623 = vsub.f32 %v3429, %v3577
          %v3624 = vsub.f32 %v3478, %v3584
          %v3625 = vsub.f32 %v3431, %v3577
          %v3626 = vsub.f32 %v3480, %v3584
          %v3627 = vsub.f32 %v3434, %v3591
          %v3628 = vsub.f32 %v3483, %v3598
          %v3629 = vsub.f32 %v3436, %v3591
          %v3630 = vsub.f32 %v3485, %v3598
          %v3631 = vmul.f32 %v3599, 1.442695
          %v3632 = vpow.pop %v3631
          %v3633 = vmul.f32 %v3600, 1.442695
          %v3634 = vpow.pop %v3633
          %v3635 = vmul.f32 %v3601, 1.442695
          %v3636 = vpow.pop %v3635
          %v3637 = vmul.f32 %v3602, 1.442695
          %v3638 = vpow.pop %v3637
          %v3639 = vmul.f32 %v3603, 1.442695
          %v3640 = vpow.pop %v3639
          %v3641 = vmul.f32 %v3604, 1.442695
          %v3642 = vpow.pop %v3641
          %v3643 = vmul.f32 %v3605, 1.442695
          %v3644 = vpow.pop %v3643
          %v3645 = vmul.f32 %v3606, 1.442695
          %v3646 = vpow.pop %v3645
          %v3647 = vmul.f32 %v3607, 1.442695
          %v3648 = vpow.pop %v3647
          %v3649 = vmul.f32 %v3608, 1.442695
          %v3650 = vpow.pop %v3649
          %v3651 = vmul.f32 %v3609, 1.442695
          %v3652 = vpow.pop %v3651
          %v3653 = vmul.f32 %v3610, 1.442695
          %v3654 = vpow.pop %v3653
          %v3655 = vmul.f32 %v3611, 1.442695
          %v3656 = vpow.pop %v3655
          %v3657 = vmul.f32 %v3612, 1.442695
          %v3658 = vpow.pop %v3657
          %v3659 = vmul.f32 %v3613, 1.442695
          %v3660 = vpow.pop %v3659
          %v3661 = vmul.f32 %v3614, 1.442695
          %v3662 = vpow.pop %v3661
          %v3663 = vmul.f32 %v3615, 1.442695
          %v3664 = vpow.pop %v3663
          %v3665 = vmul.f32 %v3616, 1.442695
          %v3666 = vpow.pop %v3665
          %v3667 = vmul.f32 %v3617, 1.442695
          %v3668 = vpow.pop %v3667
          %v3669 = vmul.f32 %v3618, 1.442695
          %v3670 = vpow.pop %v3669
          %v3671 = vmul.f32 %v3619, 1.442695
          %v3672 = vpow.pop %v3671
          %v3673 = vmul.f32 %v3620, 1.442695
          %v3674 = vpow.pop %v3673
          %v3675 = vmul.f32 %v3621, 1.442695
          %v3676 = vpow.pop %v3675
          %v3677 = vmul.f32 %v3622, 1.442695
          %v3678 = vpow.pop %v3677
          %v3679 = vmul.f32 %v3623, 1.442695
          %v3680 = vpow.pop %v3679
          %v3681 = vmul.f32 %v3624, 1.442695
          %v3682 = vpow.pop %v3681
          %v3683 = vmul.f32 %v3625, 1.442695
          %v3684 = vpow.pop %v3683
          %v3685 = vmul.f32 %v3626, 1.442695
          %v3686 = vpow.pop %v3685
          %v3687 = vmul.f32 %v3627, 1.442695
          %v3688 = vpow.pop %v3687
          %v3689 = vmul.f32 %v3628, 1.442695
          %v3690 = vpow.pop %v3689
          %v3691 = vmul.f32 %v3629, 1.442695
          %v3692 = vpow.pop %v3691
          %v3693 = vmul.f32 %v3630, 1.442695
          %v3694 = vpow.pop %v3693
          %v3695 = vadd.f32 %v3632, %v3636
          %v3696 = vrot.slane %v3695, 4
          %v3697 = vadd.f32 %v3695, %v3696
          %v3698 = vrot.slane %v3697, 2
          %v3699 = vadd.f32 %v3697, %v3698
          %v3700 = vrot.slane %v3699, 1
          %v3701 = vadd.f32 %v3699, %v3700
          %v3702 = vadd.f32 %v3634, %v3638
          %v3703 = vrot.slane %v3702, 4
          %v3704 = vadd.f32 %v3702, %v3703
          %v3705 = vrot.slane %v3704, 2
          %v3706 = vadd.f32 %v3704, %v3705
          %v3707 = vrot.slane %v3706, 1
          %v3708 = vadd.f32 %v3706, %v3707
          %v3709 = vadd.f32 %v3640, %v3644
          %v3710 = vrot.slane %v3709, 4
          %v3711 = vadd.f32 %v3709, %v3710
          %v3712 = vrot.slane %v3711, 2
          %v3713 = vadd.f32 %v3711, %v3712
          %v3714 = vrot.slane %v3713, 1
          %v3715 = vadd.f32 %v3713, %v3714
          %v3716 = vadd.f32 %v3642, %v3646
          %v3717 = vrot.slane %v3716, 4
          %v3718 = vadd.f32 %v3716, %v3717
          %v3719 = vrot.slane %v3718, 2
          %v3720 = vadd.f32 %v3718, %v3719
          %v3721 = vrot.slane %v3720, 1
          %v3722 = vadd.f32 %v3720, %v3721
          %v3723 = vadd.f32 %v3648, %v3652
          %v3724 = vrot.slane %v3723, 4
          %v3725 = vadd.f32 %v3723, %v3724
          %v3726 = vrot.slane %v3725, 2
          %v3727 = vadd.f32 %v3725, %v3726
          %v3728 = vrot.slane %v3727, 1
          %v3729 = vadd.f32 %v3727, %v3728
          %v3730 = vadd.f32 %v3650, %v3654
          %v3731 = vrot.slane %v3730, 4
          %v3732 = vadd.f32 %v3730, %v3731
          %v3733 = vrot.slane %v3732, 2
          %v3734 = vadd.f32 %v3732, %v3733
          %v3735 = vrot.slane %v3734, 1
          %v3736 = vadd.f32 %v3734, %v3735
          %v3737 = vadd.f32 %v3656, %v3660
          %v3738 = vrot.slane %v3737, 4
          %v3739 = vadd.f32 %v3737, %v3738
          %v3740 = vrot.slane %v3739, 2
          %v3741 = vadd.f32 %v3739, %v3740
          %v3742 = vrot.slane %v3741, 1
          %v3743 = vadd.f32 %v3741, %v3742
          %v3744 = vadd.f32 %v3658, %v3662
          %v3745 = vrot.slane %v3744, 4
          %v3746 = vadd.f32 %v3744, %v3745
          %v3747 = vrot.slane %v3746, 2
          %v3748 = vadd.f32 %v3746, %v3747
          %v3749 = vrot.slane %v3748, 1
          %v3750 = vadd.f32 %v3748, %v3749
          %v3751 = vadd.f32 %v3664, %v3668
          %v3752 = vrot.slane %v3751, 4
          %v3753 = vadd.f32 %v3751, %v3752
          %v3754 = vrot.slane %v3753, 2
          %v3755 = vadd.f32 %v3753, %v3754
          %v3756 = vrot.slane %v3755, 1
          %v3757 = vadd.f32 %v3755, %v3756
          %v3758 = vadd.f32 %v3666, %v3670
          %v3759 = vrot.slane %v3758, 4
          %v3760 = vadd.f32 %v3758, %v3759
          %v3761 = vrot.slane %v3760, 2
          %v3762 = vadd.f32 %v3760, %v3761
          %v3763 = vrot.slane %v3762, 1
          %v3764 = vadd.f32 %v3762, %v3763
          %v3765 = vadd.f32 %v3672, %v3676
          %v3766 = vrot.slane %v3765, 4
          %v3767 = vadd.f32 %v3765, %v3766
          %v3768 = vrot.slane %v3767, 2
          %v3769 = vadd.f32 %v3767, %v3768
          %v3770 = vrot.slane %v3769, 1
          %v3771 = vadd.f32 %v3769, %v3770
          %v3772 = vadd.f32 %v3674, %v3678
          %v3773 = vrot.slane %v3772, 4
          %v3774 = vadd.f32 %v3772, %v3773
          %v3775 = vrot.slane %v3774, 2
          %v3776 = vadd.f32 %v3774, %v3775
          %v3777 = vrot.slane %v3776, 1
          %v3778 = vadd.f32 %v3776, %v3777
          %v3779 = vadd.f32 %v3680, %v3684
          %v3780 = vrot.slane %v3779, 4
          %v3781 = vadd.f32 %v3779, %v3780
          %v3782 = vrot.slane %v3781, 2
          %v3783 = vadd.f32 %v3781, %v3782
          %v3784 = vrot.slane %v3783, 1
          %v3785 = vadd.f32 %v3783, %v3784
          %v3786 = vadd.f32 %v3682, %v3686
          %v3787 = vrot.slane %v3786, 4
          %v3788 = vadd.f32 %v3786, %v3787
          %v3789 = vrot.slane %v3788, 2
          %v3790 = vadd.f32 %v3788, %v3789
          %v3791 = vrot.slane %v3790, 1
          %v3792 = vadd.f32 %v3790, %v3791
          %v3793 = vadd.f32 %v3688, %v3692
          %v3794 = vrot.slane %v3793, 4
          %v3795 = vadd.f32 %v3793, %v3794
          %v3796 = vrot.slane %v3795, 2
          %v3797 = vadd.f32 %v3795, %v3796
          %v3798 = vrot.slane %v3797, 1
          %v3799 = vadd.f32 %v3797, %v3798
          %v3800 = vadd.f32 %v3690, %v3694
          %v3801 = vrot.slane %v3800, 4
          %v3802 = vadd.f32 %v3800, %v3801
          %v3803 = vrot.slane %v3802, 2
          %v3804 = vadd.f32 %v3802, %v3803
          %v3805 = vrot.slane %v3804, 1
          %v3806 = vadd.f32 %v3804, %v3805
          %v3807 = vrcp.pop %v3701
          %v3808 = vrcp.pop %v3708
          %v3809 = vrcp.pop %v3715
          %v3810 = vrcp.pop %v3722
          %v3811 = vrcp.pop %v3729
          %v3812 = vrcp.pop %v3736
          %v3813 = vrcp.pop %v3743
          %v3814 = vrcp.pop %v3750
          %v3815 = vrcp.pop %v3757
          %v3816 = vrcp.pop %v3764
          %v3817 = vrcp.pop %v3771
          %v3818 = vrcp.pop %v3778
          %v3819 = vrcp.pop %v3785
          %v3820 = vrcp.pop %v3792
          %v3821 = vrcp.pop %v3799
          %v3822 = vrcp.pop %v3806
          %v3823 = vmul.f32 %v3632, %v3807
          %v3824 = vmul.f32 %v3634, %v3808
          %v3825 = vmul.f32 %v3636, %v3807
          %v3826 = vmul.f32 %v3638, %v3808
          %v3827 = vmul.f32 %v3640, %v3809
          %v3828 = vmul.f32 %v3642, %v3810
          %v3829 = vmul.f32 %v3644, %v3809
          %v3830 = vmul.f32 %v3646, %v3810
          %v3831 = vmul.f32 %v3648, %v3811
          %v3832 = vmul.f32 %v3650, %v3812
          %v3833 = vmul.f32 %v3652, %v3811
          %v3834 = vmul.f32 %v3654, %v3812
          %v3835 = vmul.f32 %v3656, %v3813
          %v3836 = vmul.f32 %v3658, %v3814
          %v3837 = vmul.f32 %v3660, %v3813
          %v3838 = vmul.f32 %v3662, %v3814
          %v3839 = vmul.f32 %v3664, %v3815
          %v3840 = vmul.f32 %v3666, %v3816
          %v3841 = vmul.f32 %v3668, %v3815
          %v3842 = vmul.f32 %v3670, %v3816
          %v3843 = vmul.f32 %v3672, %v3817
          %v3844 = vmul.f32 %v3674, %v3818
          %v3845 = vmul.f32 %v3676, %v3817
          %v3846 = vmul.f32 %v3678, %v3818
          %v3847 = vmul.f32 %v3680, %v3819
          %v3848 = vmul.f32 %v3682, %v3820
          %v3849 = vmul.f32 %v3684, %v3819
          %v3850 = vmul.f32 %v3686, %v3820
          %v3851 = vmul.f32 %v3688, %v3821
          %v3852 = vmul.f32 %v3690, %v3822
          %v3853 = vmul.f32 %v3692, %v3821
          %v3854 = vmul.f32 %v3694, %v3822
          %v3855 = vpack.c.bf16 %v3825, %v3823
          %v3856 = vpack.c.bf16 %v3826, %v3824
          %v3857 = vpack.c.bf16 %v3829, %v3827
          %v3858 = vpack.c.bf16 %v3830, %v3828
          %v3859 = vpack.c.bf16 %v3833, %v3831
          %v3860 = vpack.c.bf16 %v3834, %v3832
          %v3861 = vpack.c.bf16 %v3837, %v3835
          %v3862 = vpack.c.bf16 %v3838, %v3836
          %v3863 = vpack.c.bf16 %v3841, %v3839
          %v3864 = vpack.c.bf16 %v3842, %v3840
          %v3865 = vpack.c.bf16 %v3845, %v3843
          %v3866 = vpack.c.bf16 %v3846, %v3844
          %v3867 = vpack.c.bf16 %v3849, %v3847
          %v3868 = vpack.c.bf16 %v3850, %v3848
          %v3869 = vpack.c.bf16 %v3853, %v3851
          %v3870 = vpack.c.bf16 %v3854, %v3852
          %v3871 = vld [vmem:[#allocation5] sm:$0xf]
          %v3872 = vld [vmem:[#allocation5 + $0x4] sm:$0xf]
          %v3873 = vld [vmem:[#allocation5 + $0x8] sm:$0xf]
          %v3874 = vld [vmem:[#allocation5 + $0xc] sm:$0xf]
          %v3875 = vld [vmem:[#allocation5 + $0x10] sm:$0xf]
          %v3876 = vld [vmem:[#allocation5 + $0x14] sm:$0xf]
          %v3877 = vld [vmem:[#allocation5 + $0x18] sm:$0xf]
          %v3878 = vld [vmem:[#allocation5 + $0x1c] sm:$0xf]
          %v3879 = vld [vmem:[#allocation5 + $0x20] sm:$0xf]
          %v3880 = vld [vmem:[#allocation5 + $0x24] sm:$0xf]
          %v3881 = vld [vmem:[#allocation5 + $0x28] sm:$0xf]
          %v3882 = vld [vmem:[#allocation5 + $0x2c] sm:$0xf]
          %v3883 = vld [vmem:[#allocation5 + $0x30] sm:$0xf]
          %v3884 = vld [vmem:[#allocation5 + $0x34] sm:$0xf]
          %v3885 = vld [vmem:[#allocation5 + $0x38] sm:$0xf]
          %v3886 = vld [vmem:[#allocation5 + $0x3c] sm:$0xf]
          %3887 = vxpose.binary.xlu0.c.b16.start [1/16] %v3856, %v3855, 128
          %3888 = vxpose.binary.xlu0.c.b16.cont [2/16] %v3858, %v3857, 128
          %3889 = vxpose.binary.xlu0.c.b16.cont [3/16] %v3860, %v3859, 128
          %3890 = vxpose.binary.xlu0.c.b16.cont [4/16] %v3862, %v3861, 128
          %3891 = vxpose.binary.xlu0.c.b16.cont [5/16] %v3864, %v3863, 128
          %3892 = vxpose.binary.xlu0.c.b16.cont [6/16] %v3866, %v3865, 128
          %3893 = vxpose.binary.xlu0.c.b16.cont [7/16] %v3868, %v3867, 128
          %3894 = vxpose.binary.xlu0.c.b16.end [8/16] %v3870, %v3869, 128
          %v3895 = vpop.trf.xlu0
          %v3896 = vpop.trf.xlu0
          %v3897 = vpop.trf.xlu0
          %v3898 = vpop.trf.xlu0
          %v3899 = vpop.trf.xlu0
          %v3900 = vpop.trf.xlu0
          %v3901 = vpop.trf.xlu0
          %v3902 = vpop.trf.xlu0
          %v3903 = vpop.trf.xlu0
          %v3904 = vpop.trf.xlu0
          %v3905 = vpop.trf.xlu0
          %v3906 = vpop.trf.xlu0
          %v3907 = vpop.trf.xlu0
          %v3908 = vpop.trf.xlu0
          %v3909 = vpop.trf.xlu0
          %v3910 = vpop.trf.xlu0
          %v3927 = vunpack.c.l.b16 %v3871
          %v3928 = vunpack.c.l.b16 %v3872
          %v3929 = vunpack.c.l.b16 %v3873
          %v3930 = vunpack.c.l.b16 %v3874
          %v3931 = vunpack.c.l.b16 %v3875
          %v3932 = vunpack.c.l.b16 %v3876
          %v3933 = vunpack.c.l.b16 %v3877
          %v3934 = vunpack.c.l.b16 %v3878
          %v3935 = vunpack.c.l.b16 %v3879
          %v3936 = vunpack.c.l.b16 %v3880
          %v3937 = vunpack.c.l.b16 %v3881
          %v3938 = vunpack.c.l.b16 %v3882
          %v3939 = vunpack.c.l.b16 %v3883
          %v3940 = vunpack.c.l.b16 %v3884
          %v3941 = vunpack.c.l.b16 %v3885
          %v3942 = vunpack.c.l.b16 %v3886
          %v3943 = vpack.c.b16 %v3928, %v3927
          %v3944 = vpack.c.b16 %v3930, %v3929
          %v3945 = vpack.c.b16 %v3932, %v3931
          %v3946 = vpack.c.b16 %v3934, %v3933
          %v3947 = vpack.c.b16 %v3936, %v3935
          %v3948 = vpack.c.b16 %v3938, %v3937
          %v3949 = vpack.c.b16 %v3940, %v3939
          %v3950 = vpack.c.b16 %v3942, %v3941
          %3959 = vmatpush.bf16.msra.mxu0 %v3950
          %3960 = vmatpush.bf16.msra.mxu0 %v3949
          %3961 = vmatpush.bf16.msra.mxu0 %v3948
          %3962 = vmatpush.bf16.msra.mxu0 %v3947
          %3963 = vmatpush.bf16.msra.mxu0 %v3946
          %3964 = vmatpush.bf16.msra.mxu0 %v3945
          %3965 = vmatpush.bf16.msra.mxu0 %v3944
          %3966 = vmatpush.bf16.msra.mxu0 %v3943
          %3967 = vmatmul.bf16.gmra.mxu0 %v3895
          %v3968 = vpop.f32.mrf.mxu0
          %v3969 = vadd.f32 0.0, %v3968
          %v3970 = vpop.f32.mrf.mxu0
          %v3971 = vadd.f32 0.0, %v3970
          %3972 = vmatmul.bf16.gmra.mxu0 %v3897
          %v3973 = vpop.f32.mrf.mxu0
          %v3974 = vadd.f32 0.0, %v3973
          %v3975 = vpop.f32.mrf.mxu0
          %v3976 = vadd.f32 0.0, %v3975
          %3977 = vmatmul.bf16.gmra.mxu0 %v3899
          %v3978 = vpop.f32.mrf.mxu0
          %v3979 = vadd.f32 0.0, %v3978
          %v3980 = vpop.f32.mrf.mxu0
          %v3981 = vadd.f32 0.0, %v3980
          %3982 = vmatmul.bf16.gmra.mxu0 %v3901
          %v3983 = vpop.f32.mrf.mxu0
          %v3984 = vadd.f32 0.0, %v3983
          %v3985 = vpop.f32.mrf.mxu0
          %v3986 = vadd.f32 0.0, %v3985
          %3987 = vmatmul.bf16.gmra.mxu0 %v3903
          %v3988 = vpop.f32.mrf.mxu0
          %v3989 = vadd.f32 0.0, %v3988
          %v3990 = vpop.f32.mrf.mxu0
          %v3991 = vadd.f32 0.0, %v3990
          %3992 = vmatmul.bf16.gmra.mxu0 %v3905
          %v3993 = vpop.f32.mrf.mxu0
          %v3994 = vadd.f32 0.0, %v3993
          %v3995 = vpop.f32.mrf.mxu0
          %v3996 = vadd.f32 0.0, %v3995
          %3997 = vmatmul.bf16.gmra.mxu0 %v3907
          %v3998 = vpop.f32.mrf.mxu0
          %v3999 = vadd.f32 0.0, %v3998
          %v4000 = vpop.f32.mrf.mxu0
          %v4001 = vadd.f32 0.0, %v4000
          %4002 = vmatmul.bf16.gmra.mxu0 %v3909
          %v4003 = vpop.f32.mrf.mxu0
          %v4004 = vadd.f32 0.0, %v4003
          %v4005 = vpop.f32.mrf.mxu0
          %v4006 = vadd.f32 0.0, %v4005
          %4007 = vmatmul.bf16.gmra.mxu0 %v3896
          %v4008 = vpop.f32.mrf.mxu0
          %v4009 = vadd.f32 0.0, %v4008
          %v4010 = vpop.f32.mrf.mxu0
          %v4011 = vadd.f32 0.0, %v4010
          %4012 = vmatmul.bf16.gmra.mxu0 %v3898
          %v4013 = vpop.f32.mrf.mxu0
          %v4014 = vadd.f32 0.0, %v4013
          %v4015 = vpop.f32.mrf.mxu0
          %v4016 = vadd.f32 0.0, %v4015
          %4017 = vmatmul.bf16.gmra.mxu0 %v3900
          %v4018 = vpop.f32.mrf.mxu0
          %v4019 = vadd.f32 0.0, %v4018
          %v4020 = vpop.f32.mrf.mxu0
          %v4021 = vadd.f32 0.0, %v4020
          %4022 = vmatmul.bf16.gmra.mxu0 %v3902
          %v4023 = vpop.f32.mrf.mxu0
          %v4024 = vadd.f32 0.0, %v4023
          %v4025 = vpop.f32.mrf.mxu0
          %v4026 = vadd.f32 0.0, %v4025
          %4027 = vmatmul.bf16.gmra.mxu0 %v3904
          %v4028 = vpop.f32.mrf.mxu0
          %v4029 = vadd.f32 0.0, %v4028
          %v4030 = vpop.f32.mrf.mxu0
          %v4031 = vadd.f32 0.0, %v4030
          %4032 = vmatmul.bf16.gmra.mxu0 %v3906
          %v4033 = vpop.f32.mrf.mxu0
          %v4034 = vadd.f32 0.0, %v4033
          %v4035 = vpop.f32.mrf.mxu0
          %v4036 = vadd.f32 0.0, %v4035
          %4037 = vmatmul.bf16.gmra.mxu0 %v3908
          %v4038 = vpop.f32.mrf.mxu0
          %v4039 = vadd.f32 0.0, %v4038
          %v4040 = vpop.f32.mrf.mxu0
          %v4041 = vadd.f32 0.0, %v4040
          %4042 = vmatmul.bf16.gmra.mxu0 %v3910
          %v4043 = vpop.f32.mrf.mxu0
          %v4044 = vadd.f32 0.0, %v4043
          %v4045 = vpop.f32.mrf.mxu0
          %v4046 = vadd.f32 0.0, %v4045
          %4047 = vdwg.mxu0
          %s4048 = smul.u32 %s29, 256
          %s4049 = scalar_lea.vmem [#allocation6], %s4048
          %v4050 = vld [vmem:[%s4049] sm:$0xff]
          %v4051 = vld [vmem:[%s4049 + $0x8] sm:$0xff]
          %v4052 = vld [vmem:[%s4049 + $0x10] sm:$0xff]
          %v4053 = vld [vmem:[%s4049 + $0x18] sm:$0xff]
          %v4054 = vld [vmem:[%s4049 + $0x20] sm:$0xff]
          %v4055 = vld [vmem:[%s4049 + $0x28] sm:$0xff]
          %v4056 = vld [vmem:[%s4049 + $0x30] sm:$0xff]
          %v4057 = vld [vmem:[%s4049 + $0x38] sm:$0xff]
          %v4058 = vld [vmem:[%s4049 + $0x40] sm:$0xff]
          %v4059 = vld [vmem:[%s4049 + $0x48] sm:$0xff]
          %v4060 = vld [vmem:[%s4049 + $0x50] sm:$0xff]
          %v4061 = vld [vmem:[%s4049 + $0x58] sm:$0xff]
          %v4062 = vld [vmem:[%s4049 + $0x60] sm:$0xff]
          %v4063 = vld [vmem:[%s4049 + $0x68] sm:$0xff]
          %v4064 = vld [vmem:[%s4049 + $0x70] sm:$0xff]
          %v4065 = vld [vmem:[%s4049 + $0x78] sm:$0xff]
          %v4066 = vld [vmem:[%s4049 + $0x80] sm:$0xff]
          %v4067 = vld [vmem:[%s4049 + $0x88] sm:$0xff]
          %v4068 = vld [vmem:[%s4049 + $0x90] sm:$0xff]
          %v4069 = vld [vmem:[%s4049 + $0x98] sm:$0xff]
          %v4070 = vld [vmem:[%s4049 + $0xa0] sm:$0xff]
          %v4071 = vld [vmem:[%s4049 + $0xa8] sm:$0xff]
          %v4072 = vld [vmem:[%s4049 + $0xb0] sm:$0xff]
          %v4073 = vld [vmem:[%s4049 + $0xb8] sm:$0xff]
          %v4074 = vld [vmem:[%s4049 + $0xc0] sm:$0xff]
          %v4075 = vld [vmem:[%s4049 + $0xc8] sm:$0xff]
          %v4076 = vld [vmem:[%s4049 + $0xd0] sm:$0xff]
          %v4077 = vld [vmem:[%s4049 + $0xd8] sm:$0xff]
          %v4078 = vld [vmem:[%s4049 + $0xe0] sm:$0xff]
          %v4079 = vld [vmem:[%s4049 + $0xe8] sm:$0xff]
          %v4080 = vld [vmem:[%s4049 + $0xf0] sm:$0xff]
          %v4081 = vld [vmem:[%s4049 + $0xf8] sm:$0xff]
          %v4082 = vadd.f32 %v4050, %v3969
          %v4083 = vadd.f32 %v4051, %v3971
          %v4084 = vadd.f32 %v4052, %v3974
          %v4085 = vadd.f32 %v4053, %v3976
          %v4086 = vadd.f32 %v4054, %v3979
          %v4087 = vadd.f32 %v4055, %v3981
          %v4088 = vadd.f32 %v4056, %v3984
          %v4089 = vadd.f32 %v4057, %v3986
          %v4090 = vadd.f32 %v4058, %v3989
          %v4091 = vadd.f32 %v4059, %v3991
          %v4092 = vadd.f32 %v4060, %v3994
          %v4093 = vadd.f32 %v4061, %v3996
          %v4094 = vadd.f32 %v4062, %v3999
          %v4095 = vadd.f32 %v4063, %v4001
          %v4096 = vadd.f32 %v4064, %v4004
          %v4097 = vadd.f32 %v4065, %v4006
          %v4098 = vadd.f32 %v4066, %v4009
          %v4099 = vadd.f32 %v4067, %v4011
          %v4100 = vadd.f32 %v4068, %v4014
          %v4101 = vadd.f32 %v4069, %v4016
          %v4102 = vadd.f32 %v4070, %v4019
          %v4103 = vadd.f32 %v4071, %v4021
          %v4104 = vadd.f32 %v4072, %v4024
          %v4105 = vadd.f32 %v4073, %v4026
          %v4106 = vadd.f32 %v4074, %v4029
          %v4107 = vadd.f32 %v4075, %v4031
          %v4108 = vadd.f32 %v4076, %v4034
          %v4109 = vadd.f32 %v4077, %v4036
          %v4110 = vadd.f32 %v4078, %v4039
          %v4111 = vadd.f32 %v4079, %v4041
          %v4112 = vadd.f32 %v4080, %v4044
          %v4113 = vadd.f32 %v4081, %v4046
          %v4114 = vld [vmem:[%s7] sm:$0x1]
          %v4116 = vperm.slane %v4114, 0
          %v4118 = vadd.f32 %v4082, %v4116
          %v4119 = vadd.f32 %v4083, %v4116
          %v4120 = vadd.f32 %v4084, %v4116
          %v4121 = vadd.f32 %v4085, %v4116
          %v4122 = vadd.f32 %v4086, %v4116
          %v4123 = vadd.f32 %v4087, %v4116
          %v4124 = vadd.f32 %v4088, %v4116
          %v4125 = vadd.f32 %v4089, %v4116
          %v4126 = vadd.f32 %v4090, %v4116
          %v4127 = vadd.f32 %v4091, %v4116
          %v4128 = vadd.f32 %v4092, %v4116
          %v4129 = vadd.f32 %v4093, %v4116
          %v4130 = vadd.f32 %v4094, %v4116
          %v4131 = vadd.f32 %v4095, %v4116
          %v4132 = vadd.f32 %v4096, %v4116
          %v4133 = vadd.f32 %v4097, %v4116
          %v4134 = vadd.f32 %v4098, %v4116
          %v4135 = vadd.f32 %v4099, %v4116
          %v4136 = vadd.f32 %v4100, %v4116
          %v4137 = vadd.f32 %v4101, %v4116
          %v4138 = vadd.f32 %v4102, %v4116
          %v4139 = vadd.f32 %v4103, %v4116
          %v4140 = vadd.f32 %v4104, %v4116
          %v4141 = vadd.f32 %v4105, %v4116
          %v4142 = vadd.f32 %v4106, %v4116
          %v4143 = vadd.f32 %v4107, %v4116
          %v4144 = vadd.f32 %v4108, %v4116
          %v4145 = vadd.f32 %v4109, %v4116
          %v4146 = vadd.f32 %v4110, %v4116
          %v4147 = vadd.f32 %v4111, %v4116
          %v4148 = vadd.f32 %v4112, %v4116
          %v4149 = vadd.f32 %v4113, %v4116
          %4150 = vst [vmem:[%s347] sm:$0xff] %v4118
          %4151 = vst [vmem:[%s347 + $0x8] sm:$0xff] %v4119
          %4152 = vst [vmem:[%s347 + $0x10] sm:$0xff] %v4120
          %4153 = vst [vmem:[%s347 + $0x18] sm:$0xff] %v4121
          %4154 = vst [vmem:[%s347 + $0x20] sm:$0xff] %v4122
          %4155 = vst [vmem:[%s347 + $0x28] sm:$0xff] %v4123
          %4156 = vst [vmem:[%s347 + $0x30] sm:$0xff] %v4124
          %4157 = vst [vmem:[%s347 + $0x38] sm:$0xff] %v4125
          %4158 = vst [vmem:[%s347 + $0x40] sm:$0xff] %v4126
          %4159 = vst [vmem:[%s347 + $0x48] sm:$0xff] %v4127
          %4160 = vst [vmem:[%s347 + $0x50] sm:$0xff] %v4128
          %4161 = vst [vmem:[%s347 + $0x58] sm:$0xff] %v4129
          %4162 = vst [vmem:[%s347 + $0x60] sm:$0xff] %v4130
          %4163 = vst [vmem:[%s347 + $0x68] sm:$0xff] %v4131
          %4164 = vst [vmem:[%s347 + $0x70] sm:$0xff] %v4132
          %4165 = vst [vmem:[%s347 + $0x78] sm:$0xff] %v4133
          %4166 = vst [vmem:[%s347 + $0x80] sm:$0xff] %v4134
          %4167 = vst [vmem:[%s347 + $0x88] sm:$0xff] %v4135
          %4168 = vst [vmem:[%s347 + $0x90] sm:$0xff] %v4136
          %4169 = vst [vmem:[%s347 + $0x98] sm:$0xff] %v4137
          %4170 = vst [vmem:[%s347 + $0xa0] sm:$0xff] %v4138
          %4171 = vst [vmem:[%s347 + $0xa8] sm:$0xff] %v4139
          %4172 = vst [vmem:[%s347 + $0xb0] sm:$0xff] %v4140
          %4173 = vst [vmem:[%s347 + $0xb8] sm:$0xff] %v4141
          %4174 = vst [vmem:[%s347 + $0xc0] sm:$0xff] %v4142
          %4175 = vst [vmem:[%s347 + $0xc8] sm:$0xff] %v4143
          %4176 = vst [vmem:[%s347 + $0xd0] sm:$0xff] %v4144
          %4177 = vst [vmem:[%s347 + $0xd8] sm:$0xff] %v4145
          %4178 = vst [vmem:[%s347 + $0xe0] sm:$0xff] %v4146
          %4179 = vst [vmem:[%s347 + $0xe8] sm:$0xff] %v4147
          %4180 = vst [vmem:[%s347 + $0xf0] sm:$0xff] %v4148
          %4181 = vst [vmem:[%s347 + $0xf8] sm:$0xff] %v4149
        $region68: #{amd_layer_forward.1} parent=51 // pred_fallthru
          _
        %s4182 = sand.u32 %s234, 1
        %s4183 = scalar_lea.sflag [#allocation9], %s4182
        %s4184 = sand.u32 %s234, 1
        %s4185 = smul.addr %s4184, 256
        %s4186 = scalar_lea.vmem [#allocation8], %s4185
        // Predicated region
        $region69: #{amd_layer_forward.1} parent=51 // pred_check
          %p4187 = pneg %p244
        $region70: #{amd_layer_forward.1} parent=51 // pred_check_branch
          %4189 = sbr.rel (%p4187) target = $region72
        $region71: #{amd_layer_forward.1} parent=51 // pred_region
          %s4190 = smul.u32 %s29, %s28
          %s4191 = smul.u32 32, %s4190
          %4193 = vsyncadd %s4183, 0
          %s4194 = smul.addr %s27, 64
          %s4195 = sadd.s32 %s4191, %s4194
          %s4196 = smul.addr %s4195, 8
          %s4197 = scalar_lea.hbm %s8, %s4196
          %s4198 = sshll.u32 %s4186, 4
          %s4199 = int_to_ptr.vmem [resolvable:$true] %s4198
          %s4200 = sshll.u32 %s4197, 4
          %s4201 = int_to_ptr.hbm [resolvable:$true] %s4200
          %4206 = dma.vmem_to_hbm [thread:$0]  %s4199, 4096, %s4201, %s4183, 128, 128, 8
        $region72: #{amd_layer_forward.1} parent=51 // pred_fallthru
          _
      $region52: #{amd_layer_forward.1} parent=5 // pred_fallthru
        _
      %p4207 = scmp.le.s32.totalorder 2, %s17
      // Predicated region
      $region73: #{amd_layer_forward.1} parent=5 // pred_check
        %p4208 = pneg %p4207
      $region74: #{amd_layer_forward.1} parent=5 // pred_check_branch
        %4210 = sbr.rel (%p4208) target = $region76
      $region75: #{amd_layer_forward.1} parent=5 // pred_region
        %s4211 = ssub.s32 %s17, 2
        // Predicated region
        $region77: #{amd_layer_forward.1} parent=75 // pred_check
          %p4212 = pneg %p250
        $region78: #{amd_layer_forward.1} parent=75 // pred_check_branch
          %4214 = sbr.rel (%p4212) target = $region80
        $region79: #{amd_layer_forward.1} parent=75 // pred_region
          %s4215 = sand.u32 %s235, 1
          %s4216 = scalar_lea.sflag [#allocation9], %s4215
          %s4217 = sand.u32 %s235, 1
          %s4218 = smul.addr %s4217, 256
          %s4219 = scalar_lea.vmem [#allocation8], %s4218
          %4221 = dma.done %s4216, 4096
        $region80: #{amd_layer_forward.1} parent=75 // pred_fallthru
          _
      $region76: #{amd_layer_forward.1} parent=5 // pred_fallthru
        _
    $region6: #{amd_layer_forward.1} parent=1 // loop_footer
      %s21 = sadd.s32 1, %s17
    $region7: #{amd_layer_forward.1} parent=1 // loop_footer_branch
      %16 = sbr.rel target = $region3
    $region8: #{amd_layer_forward.1} parent=1 // loop_exit
      _
    %4222 = vsyncpa [#allocation9], 1
    %s4223 = scalar_lea.sflag [#allocation9], 1
    %4224 = vsyncpa %s4223, 1

</llo_original>
